<compile_context>
chip_gen: v7x
topology: tpu7x:2x2x1
jax: 0.10.0
libtpu: 0.0.40
codegen_flags: <defaults>
</compile_context>

<pallas_src>
import jax
import jax.numpy as jnp
from jax.experimental import pallas as pl
from jax.experimental.pallas import tpu as pltpu


def _round_up(x, m):
    return (x + m - 1) // m * m


# ----------------------------- Pallas kernel bodies -----------------------------

def _conv_relu_pool_kernel(w_ref, b_ref, p0_ref, p1_ref, p2_ref, p3_ref, o_ref):
    """out = relu(max_q(W @ P_q) + b)  ==  maxpool2x2(relu(conv(x) + b)), transposed."""
    w = w_ref[...]                                                    # (Cout, K) bf16
    y0 = jnp.dot(w, p0_ref[...], preferred_element_type=jnp.float32)
    y1 = jnp.dot(w, p1_ref[...], preferred_element_type=jnp.float32)
    y2 = jnp.dot(w, p2_ref[...], preferred_element_type=jnp.float32)
    y3 = jnp.dot(w, p3_ref[...], preferred_element_type=jnp.float32)
    y = jnp.maximum(jnp.maximum(y0, y1), jnp.maximum(y2, y3))         # 2x2 max-pool
    y = y + b_ref[...]                                                # (Cout, 1) bcast
    o_ref[...] = jnp.maximum(y, 0.0).astype(o_ref.dtype)              # ReLU


def _mlp_head_kernel(x_ref, w1_ref, b1_ref, w2_ref, b2_ref, w3_ref, b3_ref, o_ref):
    """log_softmax(relu(relu(x@w1+b1)@w2+b2)@w3+b3), all intermediates in VMEM."""
    x = x_ref[...]                                                    # (TB, 400) bf16
    h = jnp.dot(x, w1_ref[...], preferred_element_type=jnp.float32) + b1_ref[...]
    h = jnp.maximum(h, 0.0)
    h = jnp.dot(h.astype(jnp.bfloat16), w2_ref[...],
                preferred_element_type=jnp.float32) + b2_ref[...]
    h = jnp.maximum(h, 0.0)
    logits = jnp.dot(h.astype(jnp.bfloat16), w3_ref[...],
                     preferred_element_type=jnp.float32) + b3_ref[...]
    m = jnp.max(logits, axis=-1, keepdims=True)
    s = logits - m
    lse = jnp.log(jnp.sum(jnp.exp(s), axis=-1, keepdims=True))
    o_ref[...] = (s - lse).astype(o_ref.dtype)


# --------------------------------- XLA glue -------------------------------------

def _quad_patches(x_cm, k):
    """Four 'quadrant' im2col matrices from a channel-major (C, B, H, W) input.

    For quadrant q = (qh, qw) in {0,1}^2:
        P_q[(ci,di,dj), (b,ohp,owp)] = x[ci, b, 2*ohp + qh + di, 2*owp + qw + dj]
    so  max_q (W @ P_q)  is exactly the 2x2/stride-2 max-pool of the valid conv output.
    Pure layout plumbing (strided slices + stack), left to XLA.
    """
    C, B, H, W = x_cm.shape
    OH, OW = H - k + 1, W - k + 1
    OHp, OWp = OH // 2, OW // 2
    quads = []
    for qh in range(2):
        for qw in range(2):
            cols = []
            for di in range(k):
                for dj in range(k):
                    s = x_cm[:, :, qh + di::2, qw + dj::2][:, :, :OHp, :OWp]
                    cols.append(s)                                    # (C, B, OHp, OWp)
            p = jnp.stack(cols, axis=1)                               # (C, k*k, B, OHp, OWp)
            quads.append(p.reshape(C * k * k, B * OHp * OWp))         # K axis = (ci, di, dj)
    return quads, (B, OHp, OWp)


# ------------------------------ kernel wrappers ----------------------------------

def conv_relu_pool(x_cm, w, b, *, tm=1024):
    """Fused valid conv(stride 1) + bias + ReLU + 2x2/2 max-pool.

    x_cm: (Cin, B, H, W) channel-major;  w: (Cout, Cin, k, k) (PyTorch layout);  b: (Cout,)
    Returns (Cout, B*OHp*OWp) bf16 (channel-major, lane-dense) and (B, OHp, OWp).
    """
    Cout, Cin, k, _ = w.shape
    x_cm = x_cm.astype(jnp.bfloat16)               # cast once, before the im2col blow-up
    quads, (B, OHp, OWp) = _quad_patches(x_cm, k)
    K = Cin * k * k
    Mp = B * OHp * OWp
    tm_eff = min(tm, _round_up(Mp, 128))           # lane-aligned tile over batch*spatial
    Mp_pad = _round_up(Mp, tm_eff)
    quads = [jnp.pad(q, ((0, 0), (0, Mp_pad - Mp))) for q in quads]
    w2d = w.reshape(Cout, K).astype(jnp.bfloat16)
    b2d = b.reshape(Cout, 1).astype(jnp.float32)

    patch_spec = pl.BlockSpec((K, tm_eff), lambda i: (0, i))
    cost = pl.CostEstimate(
        flops=int(2 * Cout * K * 4 * Mp_pad),
        transcendentals=0,
        bytes_accessed=int(4 * K * Mp_pad * 2 + Cout * K * 2 + Cout * Mp_pad * 2),
    )
    out = pl.pallas_call(
        _conv_relu_pool_kernel,
        out_shape=jax.ShapeDtypeStruct((Cout, Mp_pad), jnp.bfloat16),
        grid=(Mp_pad // tm_eff,),
        in_specs=[
            pl.BlockSpec((Cout, K), lambda i: (0, 0)),   # weights: VMEM-resident
            pl.BlockSpec((Cout, 1), lambda i: (0, 0)),   # bias:    VMEM-resident
            patch_spec, patch_spec, patch_spec, patch_spec,
        ],
        out_specs=pl.BlockSpec((Cout, tm_eff), lambda i: (0, i)),
        compiler_params=pltpu.CompilerParams(
            dimension_semantics=("parallel",),
            vmem_limit_bytes=32 * 1024 * 1024,
        ),
        cost_estimate=cost,
    )(w2d, b2d, *quads)
    return out[:, :Mp], (B, OHp, OWp)


def mlp_head(x, w1, b1, w2, b2, w3, b3, *, tb=256):
    """Fused fc1+ReLU+fc2+ReLU+fc3+log_softmax, grid tiled over batch rows."""
    B, F = x.shape
    H1, H2, C = w1.shape[1], w2.shape[1], w3.shape[1]
    TB = min(tb, _round_up(B, 8))
    Bpad = _round_up(B, TB)
    xp = jnp.pad(x, ((0, Bpad - B), (0, 0))).astype(jnp.bfloat16)
    w1b = w1.astype(jnp.bfloat16)
    w2b = w2.astype(jnp.bfloat16)
    w3b = w3.astype(jnp.bfloat16)
    b1r = b1.reshape(1, H1).astype(jnp.float32)
    b2r = b2.reshape(1, H2).astype(jnp.float32)
    b3r = b3.reshape(1, C).astype(jnp.float32)

    cost = pl.CostEstimate(
        flops=int(2 * Bpad * (F * H1 + H1 * H2 + H2 * C)),
        transcendentals=int(Bpad * (C + 1)),
        bytes_accessed=int(Bpad * F * 2 + (F * H1 + H1 * H2 + H2 * C) * 2 + Bpad * C * 4),
    )
    out = pl.pallas_call(
        _mlp_head_kernel,
        out_shape=jax.ShapeDtypeStruct((Bpad, C), jnp.float32),
        grid=(Bpad // TB,),
        in_specs=[
            pl.BlockSpec((TB, F), lambda i: (i, 0)),
            pl.BlockSpec((F, H1), lambda i: (0, 0)),     # fc weights/biases stay resident
            pl.BlockSpec((1, H1), lambda i: (0, 0)),
            pl.BlockSpec((H1, H2), lambda i: (0, 0)),
            pl.BlockSpec((1, H2), lambda i: (0, 0)),
            pl.BlockSpec((H2, C), lambda i: (0, 0)),
            pl.BlockSpec((1, C), lambda i: (0, 0)),
        ],
        out_specs=pl.BlockSpec((TB, C), lambda i: (i, 0)),
        compiler_params=pltpu.CompilerParams(
            dimension_semantics=("parallel",),
            vmem_limit_bytes=32 * 1024 * 1024,
        ),
        cost_estimate=cost,
    )(xp, w1b, b1r, w2b, b2r, w3b, b3r)
    return out[:B]


# --------------------------------- model -----------------------------------------

def init_params(key):
    ks = jax.random.split(key, 10)

    def u(k, shape, fan_in):
        bound = 1.0 / jnp.sqrt(jnp.float32(fan_in))
        return jax.random.uniform(k, shape, jnp.float32, -bound, bound)

    p = {}
    p["w1"] = u(ks[0], (6, 1, 5, 5), 1 * 5 * 5)      # conv1 (module uses 1 input channel)
    p["b1"] = u(ks[1], (6,), 1 * 5 * 5)
    p["w2"] = u(ks[2], (16, 6, 5, 5), 6 * 5 * 5)
    p["b2"] = u(ks[3], (16,), 6 * 5 * 5)
    p["wf1"] = u(ks[4], (400, 120), 400)             # stored (in, out)
    p["bf1"] = u(ks[5], (120,), 400)
    p["wf2"] = u(ks[6], (120, 84), 120)
    p["bf2"] = u(ks[7], (84,), 120)
    p["wf3"] = u(ks[8], (84, 10), 84)
    p["bf3"] = u(ks[9], (10,), 84)
    return p


@jax.jit
def cnn_cifar10_forward(params, x):
    # x: (B, 1, 32, 32) NCHW float32 (same interface as the PyTorch module)
    B = x.shape[0]
    C1 = params["w1"].shape[0]
    C2 = params["w2"].shape[0]

    x_cm = jnp.swapaxes(x, 0, 1)                                         # (1, B, 32, 32)
    y1, (_, H1, W1) = conv_relu_pool(x_cm, params["w1"], params["b1"])   # (6, B*14*14)
    x2_cm = y1.reshape(C1, B, H1, W1)                                    # (6, B, 14, 14), no transpose
    y2, (_, H2, W2) = conv_relu_pool(x2_cm, params["w2"], params["b2"])  # (16, B*5*5)
    feats = (y2.reshape(C2, B, H2 * W2).transpose(1, 0, 2)               # (B, 16, 25)
             .reshape(B, C2 * H2 * W2))                                  # torch .view (c,h,w) order
    return mlp_head(feats, params["wf1"], params["bf1"],
                    params["wf2"], params["bf2"],
                    params["wf3"], params["bf3"])                        # (B, 10)


# ------------------------- pure-JAX f32 reference (for checking) -----------------

def reference_forward(params, x):
    dn = ("NCHW", "OIHW", "NCHW")
    y = jax.lax.conv_general_dilated(x, params["w1"], (1, 1), "VALID",
                                     dimension_numbers=dn)
    y = jax.nn.relu(y + params["b1"][None, :, None, None])
    y = jax.lax.reduce_window(y, -jnp.inf, jax.lax.max,
                              (1, 1, 2, 2), (1, 1, 2, 2), "VALID")
    y = jax.lax.conv_general_dilated(y, params["w2"], (1, 1), "VALID",
                                     dimension_numbers=dn)
    y = jax.nn.relu(y + params["b2"][None, :, None, None])
    y = jax.lax.reduce_window(y, -jnp.inf, jax.lax.max,
                              (1, 1, 2, 2), (1, 1, 2, 2), "VALID")
    y = y.reshape(y.shape[0], -1)
    y = jax.nn.relu(y @ params["wf1"] + params["bf1"])
    y = jax.nn.relu(y @ params["wf2"] + params["bf2"])
    y = y @ params["wf3"] + params["bf3"]
    return jax.nn.log_softmax(y, axis=-1)


if __name__ == "__main__":
    key = jax.random.PRNGKey(0)
    pkey, xkey = jax.random.split(key)
    params = init_params(pkey)
    # fc1 expects 16*5*5 features -> 1-channel 32x32 input, exactly as the PyTorch module.
    x = jax.random.normal(xkey, (8, 1, 32, 32), dtype=jnp.float32)

    out = jax.block_until_ready(cnn_cifar10_forward(params, x))
    assert out.shape == (8, 10)
    # log-softmax rows must exp-sum to 1 (the reduction runs in f32 inside the kernel)
    assert jnp.allclose(jnp.sum(jnp.exp(out), axis=1), 1.0, atol=1e-3)
    # compare against a pure-JAX f32 reference (loose tolerance: bf16 matmul operands)
    ref = jax.block_until_ready(jax.jit(reference_forward)(params, x))
    max_err = float(jnp.max(jnp.abs(out - ref)))
    assert max_err < 0.15, f"mismatch vs reference: max abs err {max_err}"
    print("KERNEL_OK")
</pallas_src>

<mosaic_0001>
module attributes {stable_mosaic.version = 11 : i64} {
  func.func @_conv_relu_pool_kernel(%arg0: i32, %arg1: memref<6x25xbf16, #tpu.memory_space<vmem>>, %arg2: memref<6x1xf32, #tpu.memory_space<vmem>>, %arg3: memref<25x1024xbf16, #tpu.memory_space<vmem>>, %arg4: memref<25x1024xbf16, #tpu.memory_space<vmem>>, %arg5: memref<25x1024xbf16, #tpu.memory_space<vmem>>, %arg6: memref<25x1024xbf16, #tpu.memory_space<vmem>>, %arg7: memref<6x1024xbf16, #tpu.memory_space<vmem>>) attributes {dimension_semantics = [#tpu.dimension_semantics<parallel>], iteration_bounds = array<i64: 2>, scalar_prefetch = 0 : i64, scratch_operands = 0 : i64, tpu.core_type = #tpu.core_type<tc>, window_params = [{pipeline_mode = #tpu.pipeline_mode<synchronous>, transform_indices = @transform_0, window_bounds = array<i64: 6, 25>}, {pipeline_mode = #tpu.pipeline_mode<synchronous>, transform_indices = @transform_1, window_bounds = array<i64: 6, 1>}, {transform_indices = @transform_2, window_bounds = array<i64: 25, 1024>}, {transform_indices = @transform_3, window_bounds = array<i64: 25, 1024>}, {transform_indices = @transform_4, window_bounds = array<i64: 25, 1024>}, {transform_indices = @transform_5, window_bounds = array<i64: 25, 1024>}, {transform_indices = @transform_6, window_bounds = array<i64: 6, 1024>}]} {
    %c0 = arith.constant 0 : index
    %c0_0 = arith.constant 0 : index
    %0 = vector.load %arg1[%c0, %c0_0] : memref<6x25xbf16, #tpu.memory_space<vmem>>, vector<6x25xbf16>
    %c0_1 = arith.constant 0 : index
    %c0_2 = arith.constant 0 : index
    %1 = vector.load %arg3[%c0_1, %c0_2] : memref<25x1024xbf16, #tpu.memory_space<vmem>>, vector<25x1024xbf16>
    %cst = arith.constant dense<0.000000e+00> : vector<6x1024xf32>
    %2 = tpu.matmul %0, %1, %cst {dimension_numbers = #tpu.dot_dimension_numbers<[1], [0], [0], [1], [0, 0, 1, 1], [], []>} : vector<6x25xbf16>, vector<25x1024xbf16>, vector<6x1024xf32> -> vector<6x1024xf32>
    %c0_3 = arith.constant 0 : index
    %c0_4 = arith.constant 0 : index
    %3 = vector.load %arg4[%c0_3, %c0_4] : memref<25x1024xbf16, #tpu.memory_space<vmem>>, vector<25x1024xbf16>
    %cst_5 = arith.constant dense<0.000000e+00> : vector<6x1024xf32>
    %4 = tpu.matmul %0, %3, %cst_5 {dimension_numbers = #tpu.dot_dimension_numbers<[1], [0], [0], [1], [0, 0, 1, 1], [], []>} : vector<6x25xbf16>, vector<25x1024xbf16>, vector<6x1024xf32> -> vector<6x1024xf32>
    %c0_6 = arith.constant 0 : index
    %c0_7 = arith.constant 0 : index
    %5 = vector.load %arg5[%c0_6, %c0_7] : memref<25x1024xbf16, #tpu.memory_space<vmem>>, vector<25x1024xbf16>
    %cst_8 = arith.constant dense<0.000000e+00> : vector<6x1024xf32>
    %6 = tpu.matmul %0, %5, %cst_8 {dimension_numbers = #tpu.dot_dimension_numbers<[1], [0], [0], [1], [0, 0, 1, 1], [], []>} : vector<6x25xbf16>, vector<25x1024xbf16>, vector<6x1024xf32> -> vector<6x1024xf32>
    %c0_9 = arith.constant 0 : index
    %c0_10 = arith.constant 0 : index
    %7 = vector.load %arg6[%c0_9, %c0_10] : memref<25x1024xbf16, #tpu.memory_space<vmem>>, vector<25x1024xbf16>
    %cst_11 = arith.constant dense<0.000000e+00> : vector<6x1024xf32>
    %8 = tpu.matmul %0, %7, %cst_11 {dimension_numbers = #tpu.dot_dimension_numbers<[1], [0], [0], [1], [0, 0, 1, 1], [], []>} : vector<6x25xbf16>, vector<25x1024xbf16>, vector<6x1024xf32> -> vector<6x1024xf32>
    %9 = arith.maximumf %2, %4 : vector<6x1024xf32>
    %10 = arith.maximumf %6, %8 : vector<6x1024xf32>
    %11 = arith.maximumf %9, %10 : vector<6x1024xf32>
    %c0_12 = arith.constant 0 : index
    %c0_13 = arith.constant 0 : index
    %12 = vector.load %arg2[%c0_12, %c0_13] : memref<6x1xf32, #tpu.memory_space<vmem>>, vector<6x1xf32>
    %13 = vector.broadcast %12 : vector<6x1xf32> to vector<6x1024xf32>
    %14 = arith.addf %11, %13 : vector<6x1024xf32>
    %cst_14 = arith.constant 0.000000e+00 : f32
    %15 = vector.broadcast %cst_14 : f32 to vector<6x1024xf32>
    %16 = arith.maximumf %14, %15 : vector<6x1024xf32>
    %17 = arith.truncf %16 : vector<6x1024xf32> to vector<6x1024xbf16>
    %c0_15 = arith.constant 0 : index
    %c0_16 = arith.constant 0 : index
    %18 = vector.load %arg7[%c0_15, %c0_16] : memref<6x1024xbf16, #tpu.memory_space<vmem>>, vector<6x1024xbf16>
    tpu.vector_store %arg7[%c0_15, %c0_16], %17 {strides = array<i32>} : memref<6x1024xbf16, #tpu.memory_space<vmem>>, vector<6x1024xbf16>,
    return
  }
  func.func @transform_0(%arg0: i32) -> (i32, i32) {
    %c0_i32 = arith.constant 0 : i32
    %c0_i32_0 = arith.constant 0 : i32
    %c0_i32_1 = arith.constant 0 : i32
    return %c0_i32, %c0_i32_0 : i32, i32
  }
  func.func @transform_1(%arg0: i32) -> (i32, i32) {
    %c0_i32 = arith.constant 0 : i32
    %c0_i32_0 = arith.constant 0 : i32
    %c0_i32_1 = arith.constant 0 : i32
    return %c0_i32, %c0_i32_0 : i32, i32
  }
  func.func @transform_2(%arg0: i32) -> (i32, i32) {
    %c0_i32 = arith.constant 0 : i32
    %c0_i32_0 = arith.constant 0 : i32
    return %c0_i32, %arg0 : i32, i32
  }
  func.func @transform_3(%arg0: i32) -> (i32, i32) {
    %c0_i32 = arith.constant 0 : i32
    %c0_i32_0 = arith.constant 0 : i32
    return %c0_i32, %arg0 : i32, i32
  }
  func.func @transform_4(%arg0: i32) -> (i32, i32) {
    %c0_i32 = arith.constant 0 : i32
    %c0_i32_0 = arith.constant 0 : i32
    return %c0_i32, %arg0 : i32, i32
  }
  func.func @transform_5(%arg0: i32) -> (i32, i32) {
    %c0_i32 = arith.constant 0 : i32
    %c0_i32_0 = arith.constant 0 : i32
    return %c0_i32, %arg0 : i32, i32
  }
  func.func @transform_6(%arg0: i32) -> (i32, i32) {
    %c0_i32 = arith.constant 0 : i32
    %c0_i32_0 = arith.constant 0 : i32
    return %c0_i32, %arg0 : i32, i32
  }
}

module attributes {stable_mosaic.version = 11 : i64} {
  func.func @_conv_relu_pool_kernel(%arg0: i32, %arg1: memref<16x150xbf16, #tpu.memory_space<vmem>>, %arg2: memref<16x1xf32, #tpu.memory_space<vmem>>, %arg3: memref<150x256xbf16, #tpu.memory_space<vmem>>, %arg4: memref<150x256xbf16, #tpu.memory_space<vmem>>, %arg5: memref<150x256xbf16, #tpu.memory_space<vmem>>, %arg6: memref<150x256xbf16, #tpu.memory_space<vmem>>, %arg7: memref<16x256xbf16, #tpu.memory_space<vmem>>) attributes {dimension_semantics = [#tpu.dimension_semantics<parallel>], iteration_bounds = array<i64: 1>, scalar_prefetch = 0 : i64, scratch_operands = 0 : i64, tpu.core_type = #tpu.core_type<tc>, window_params = [{pipeline_mode = #tpu.pipeline_mode<synchronous>, transform_indices = @transform_0, window_bounds = array<i64: 16, 150>}, {pipeline_mode = #tpu.pipeline_mode<synchronous>, transform_indices = @transform_1, window_bounds = array<i64: 16, 1>}, {transform_indices = @transform_2, window_bounds = array<i64: 150, 256>}, {transform_indices = @transform_3, window_bounds = array<i64: 150, 256>}, {transform_indices = @transform_4, window_bounds = array<i64: 150, 256>}, {transform_indices = @transform_5, window_bounds = array<i64: 150, 256>}, {transform_indices = @transform_6, window_bounds = array<i64: 16, 256>}]} {
    %c0 = arith.constant 0 : index
    %c0_0 = arith.constant 0 : index
    %0 = vector.load %arg1[%c0, %c0_0] : memref<16x150xbf16, #tpu.memory_space<vmem>>, vector<16x150xbf16>
    %c0_1 = arith.constant 0 : index
    %c0_2 = arith.constant 0 : index
    %1 = vector.load %arg3[%c0_1, %c0_2] : memref<150x256xbf16, #tpu.memory_space<vmem>>, vector<150x256xbf16>
    %cst = arith.constant dense<0.000000e+00> : vector<16x256xf32>
    %2 = tpu.matmul %0, %1, %cst {dimension_numbers = #tpu.dot_dimension_numbers<[1], [0], [0], [1], [0, 0, 1, 1], [], []>} : vector<16x150xbf16>, vector<150x256xbf16>, vector<16x256xf32> -> vector<16x256xf32>
    %c0_3 = arith.constant 0 : index
    %c0_4 = arith.constant 0 : index
    %3 = vector.load %arg4[%c0_3, %c0_4] : memref<150x256xbf16, #tpu.memory_space<vmem>>, vector<150x256xbf16>
    %cst_5 = arith.constant dense<0.000000e+00> : vector<16x256xf32>
    %4 = tpu.matmul %0, %3, %cst_5 {dimension_numbers = #tpu.dot_dimension_numbers<[1], [0], [0], [1], [0, 0, 1, 1], [], []>} : vector<16x150xbf16>, vector<150x256xbf16>, vector<16x256xf32> -> vector<16x256xf32>
    %c0_6 = arith.constant 0 : index
    %c0_7 = arith.constant 0 : index
    %5 = vector.load %arg5[%c0_6, %c0_7] : memref<150x256xbf16, #tpu.memory_space<vmem>>, vector<150x256xbf16>
    %cst_8 = arith.constant dense<0.000000e+00> : vector<16x256xf32>
    %6 = tpu.matmul %0, %5, %cst_8 {dimension_numbers = #tpu.dot_dimension_numbers<[1], [0], [0], [1], [0, 0, 1, 1], [], []>} : vector<16x150xbf16>, vector<150x256xbf16>, vector<16x256xf32> -> vector<16x256xf32>
    %c0_9 = arith.constant 0 : index
    %c0_10 = arith.constant 0 : index
    %7 = vector.load %arg6[%c0_9, %c0_10] : memref<150x256xbf16, #tpu.memory_space<vmem>>, vector<150x256xbf16>
    %cst_11 = arith.constant dense<0.000000e+00> : vector<16x256xf32>
    %8 = tpu.matmul %0, %7, %cst_11 {dimension_numbers = #tpu.dot_dimension_numbers<[1], [0], [0], [1], [0, 0, 1, 1], [], []>} : vector<16x150xbf16>, vector<150x256xbf16>, vector<16x256xf32> -> vector<16x256xf32>
    %9 = arith.maximumf %2, %4 : vector<16x256xf32>
    %10 = arith.maximumf %6, %8 : vector<16x256xf32>
    %11 = arith.maximumf %9, %10 : vector<16x256xf32>
    %c0_12 = arith.constant 0 : index
    %c0_13 = arith.constant 0 : index
    %12 = vector.load %arg2[%c0_12, %c0_13] : memref<16x1xf32, #tpu.memory_space<vmem>>, vector<16x1xf32>
    %13 = vector.broadcast %12 : vector<16x1xf32> to vector<16x256xf32>
    %14 = arith.addf %11, %13 : vector<16x256xf32>
    %cst_14 = arith.constant 0.000000e+00 : f32
    %15 = vector.broadcast %cst_14 : f32 to vector<16x256xf32>
    %16 = arith.maximumf %14, %15 : vector<16x256xf32>
    %17 = arith.truncf %16 : vector<16x256xf32> to vector<16x256xbf16>
    %c0_15 = arith.constant 0 : index
    %c0_16 = arith.constant 0 : index
    %18 = vector.load %arg7[%c0_15, %c0_16] : memref<16x256xbf16, #tpu.memory_space<vmem>>, vector<16x256xbf16>
    tpu.vector_store %arg7[%c0_15, %c0_16], %17 {strides = array<i32>} : memref<16x256xbf16, #tpu.memory_space<vmem>>, vector<16x256xbf16>,
    return
  }
  func.func @transform_0(%arg0: i32) -> (i32, i32) {
    %c0_i32 = arith.constant 0 : i32
    %c0_i32_0 = arith.constant 0 : i32
    %c0_i32_1 = arith.constant 0 : i32
    return %c0_i32, %c0_i32_0 : i32, i32
  }
  func.func @transform_1(%arg0: i32) -> (i32, i32) {
    %c0_i32 = arith.constant 0 : i32
    %c0_i32_0 = arith.constant 0 : i32
    %c0_i32_1 = arith.constant 0 : i32
    return %c0_i32, %c0_i32_0 : i32, i32
  }
  func.func @transform_2(%arg0: i32) -> (i32, i32) {
    %c0_i32 = arith.constant 0 : i32
    %c0_i32_0 = arith.constant 0 : i32
    return %c0_i32, %arg0 : i32, i32
  }
  func.func @transform_3(%arg0: i32) -> (i32, i32) {
    %c0_i32 = arith.constant 0 : i32
    %c0_i32_0 = arith.constant 0 : i32
    return %c0_i32, %arg0 : i32, i32
  }
  func.func @transform_4(%arg0: i32) -> (i32, i32) {
    %c0_i32 = arith.constant 0 : i32
    %c0_i32_0 = arith.constant 0 : i32
    return %c0_i32, %arg0 : i32, i32
  }
  func.func @transform_5(%arg0: i32) -> (i32, i32) {
    %c0_i32 = arith.constant 0 : i32
    %c0_i32_0 = arith.constant 0 : i32
    return %c0_i32, %arg0 : i32, i32
  }
  func.func @transform_6(%arg0: i32) -> (i32, i32) {
    %c0_i32 = arith.constant 0 : i32
    %c0_i32_0 = arith.constant 0 : i32
    return %c0_i32, %arg0 : i32, i32
  }
}

module attributes {stable_mosaic.version = 11 : i64} {
  func.func @_mlp_head_kernel(%arg0: i32, %arg1: memref<8x400xbf16, #tpu.memory_space<vmem>>, %arg2: memref<400x120xbf16, #tpu.memory_space<vmem>>, %arg3: memref<1x120xf32, #tpu.memory_space<vmem>>, %arg4: memref<120x84xbf16, #tpu.memory_space<vmem>>, %arg5: memref<1x84xf32, #tpu.memory_space<vmem>>, %arg6: memref<84x10xbf16, #tpu.memory_space<vmem>>, %arg7: memref<1x10xf32, #tpu.memory_space<vmem>>, %arg8: memref<8x10xf32, #tpu.memory_space<vmem>>) attributes {dimension_semantics = [#tpu.dimension_semantics<parallel>], iteration_bounds = array<i64: 1>, scalar_prefetch = 0 : i64, scratch_operands = 0 : i64, tpu.core_type = #tpu.core_type<tc>, window_params = [{transform_indices = @transform_0, window_bounds = array<i64: 8, 400>}, {pipeline_mode = #tpu.pipeline_mode<synchronous>, transform_indices = @transform_1, window_bounds = array<i64: 400, 120>}, {pipeline_mode = #tpu.pipeline_mode<synchronous>, transform_indices = @transform_2, window_bounds = array<i64: 1, 120>}, {pipeline_mode = #tpu.pipeline_mode<synchronous>, transform_indices = @transform_3, window_bounds = array<i64: 120, 84>}, {pipeline_mode = #tpu.pipeline_mode<synchronous>, transform_indices = @transform_4, window_bounds = array<i64: 1, 84>}, {pipeline_mode = #tpu.pipeline_mode<synchronous>, transform_indices = @transform_5, window_bounds = array<i64: 84, 10>}, {pipeline_mode = #tpu.pipeline_mode<synchronous>, transform_indices = @transform_6, window_bounds = array<i64: 1, 10>}, {transform_indices = @transform_7, window_bounds = array<i64: 8, 10>}]} {
    %c0 = arith.constant 0 : index
    %c0_0 = arith.constant 0 : index
    %0 = vector.load %arg1[%c0, %c0_0] : memref<8x400xbf16, #tpu.memory_space<vmem>>, vector<8x400xbf16>
    %c0_1 = arith.constant 0 : index
    %c0_2 = arith.constant 0 : index
    %1 = vector.load %arg2[%c0_1, %c0_2] : memref<400x120xbf16, #tpu.memory_space<vmem>>, vector<400x120xbf16>
    %cst = arith.constant dense<0.000000e+00> : vector<8x120xf32>
    %2 = tpu.matmul %0, %1, %cst {dimension_numbers = #tpu.dot_dimension_numbers<[1], [0], [0], [1], [0, 0, 1, 1], [], []>} : vector<8x400xbf16>, vector<400x120xbf16>, vector<8x120xf32> -> vector<8x120xf32>
    %c0_3 = arith.constant 0 : index
    %c0_4 = arith.constant 0 : index
    %3 = vector.load %arg3[%c0_3, %c0_4] : memref<1x120xf32, #tpu.memory_space<vmem>>, vector<1x120xf32>
    %4 = vector.broadcast %3 : vector<1x120xf32> to vector<8x120xf32>
    %5 = arith.addf %2, %4 : vector<8x120xf32>
    %cst_5 = arith.constant 0.000000e+00 : f32
    %6 = vector.broadcast %cst_5 : f32 to vector<8x120xf32>
    %7 = arith.maximumf %5, %6 : vector<8x120xf32>
    %8 = arith.truncf %7 : vector<8x120xf32> to vector<8x120xbf16>
    %c0_6 = arith.constant 0 : index
    %c0_7 = arith.constant 0 : index
    %9 = vector.load %arg4[%c0_6, %c0_7] : memref<120x84xbf16, #tpu.memory_space<vmem>>, vector<120x84xbf16>
    %cst_8 = arith.constant dense<0.000000e+00> : vector<8x84xf32>
    %10 = tpu.matmul %8, %9, %cst_8 {dimension_numbers = #tpu.dot_dimension_numbers<[1], [0], [0], [1], [0, 0, 1, 1], [], []>} : vector<8x120xbf16>, vector<120x84xbf16>, vector<8x84xf32> -> vector<8x84xf32>
    %c0_9 = arith.constant 0 : index
    %c0_10 = arith.constant 0 : index
    %11 = vector.load %arg5[%c0_9, %c0_10] : memref<1x84xf32, #tpu.memory_space<vmem>>, vector<1x84xf32>
    %12 = vector.broadcast %11 : vector<1x84xf32> to vector<8x84xf32>
    %13 = arith.addf %10, %12 : vector<8x84xf32>
    %cst_11 = arith.constant 0.000000e+00 : f32
    %14 = vector.broadcast %cst_11 : f32 to vector<8x84xf32>
    %15 = arith.maximumf %13, %14 : vector<8x84xf32>
    %16 = arith.truncf %15 : vector<8x84xf32> to vector<8x84xbf16>
    %c0_12 = arith.constant 0 : index
    %c0_13 = arith.constant 0 : index
    %17 = vector.load %arg6[%c0_12, %c0_13] : memref<84x10xbf16, #tpu.memory_space<vmem>>, vector<84x10xbf16>
    %cst_14 = arith.constant dense<0.000000e+00> : vector<8x10xf32>
    %18 = tpu.matmul %16, %17, %cst_14 {dimension_numbers = #tpu.dot_dimension_numbers<[1], [0], [0], [1], [0, 0, 1, 1], [], []>} : vector<8x84xbf16>, vector<84x10xbf16>, vector<8x10xf32> -> vector<8x10xf32>
    %c0_15 = arith.constant 0 : index
    %c0_16 = arith.constant 0 : index
    %19 = vector.load %arg7[%c0_15, %c0_16] : memref<1x10xf32, #tpu.memory_space<vmem>>, vector<1x10xf32>
    %20 = vector.broadcast %19 : vector<1x10xf32> to vector<8x10xf32>
    %21 = arith.addf %18, %20 : vector<8x10xf32>
    %cst_17 = arith.constant dense<0xFF800000> : vector<8xf32>
    %22 = vector.multi_reduction <maximumf>, %21, %cst_17 [1] : vector<8x10xf32> to vector<8xf32>
    %23 = vector.shape_cast %22 : vector<8xf32> to vector<8x1xf32>
    %24 = vector.broadcast %23 : vector<8x1xf32> to vector<8x10xf32>
    %25 = arith.subf %21, %24 : vector<8x10xf32>
    %26 = math.exp %25 : vector<8x10xf32>
    %cst_18 = arith.constant dense<0.000000e+00> : vector<8xf32>
    %27 = vector.multi_reduction <add>, %26, %cst_18 [1] : vector<8x10xf32> to vector<8xf32>
    %28 = vector.shape_cast %27 : vector<8xf32> to vector<8x1xf32>
    %29 = math.log %28 : vector<8x1xf32>
    %30 = vector.broadcast %29 : vector<8x1xf32> to vector<8x10xf32>
    %31 = arith.subf %25, %30 : vector<8x10xf32>
    %c0_19 = arith.constant 0 : index
    %c0_20 = arith.constant 0 : index
    %32 = vector.load %arg8[%c0_19, %c0_20] : memref<8x10xf32, #tpu.memory_space<vmem>>, vector<8x10xf32>
    tpu.vector_store %arg8[%c0_19, %c0_20], %31 {strides = array<i32>} : memref<8x10xf32, #tpu.memory_space<vmem>>, vector<8x10xf32>,
    return
  }
  func.func @transform_0(%arg0: i32) -> (i32, i32) {
    %c0_i32 = arith.constant 0 : i32
    %c0_i32_0 = arith.constant 0 : i32
    return %arg0, %c0_i32 : i32, i32
  }
  func.func @transform_1(%arg0: i32) -> (i32, i32) {
    %c0_i32 = arith.constant 0 : i32
    %c0_i32_0 = arith.constant 0 : i32
    %c0_i32_1 = arith.constant 0 : i32
    return %c0_i32, %c0_i32_0 : i32, i32
  }
  func.func @transform_2(%arg0: i32) -> (i32, i32) {
    %c0_i32 = arith.constant 0 : i32
    %c0_i32_0 = arith.constant 0 : i32
    %c0_i32_1 = arith.constant 0 : i32
    return %c0_i32, %c0_i32_0 : i32, i32
  }
  func.func @transform_3(%arg0: i32) -> (i32, i32) {
    %c0_i32 = arith.constant 0 : i32
    %c0_i32_0 = arith.constant 0 : i32
    %c0_i32_1 = arith.constant 0 : i32
    return %c0_i32, %c0_i32_0 : i32, i32
  }
  func.func @transform_4(%arg0: i32) -> (i32, i32) {
    %c0_i32 = arith.constant 0 : i32
    %c0_i32_0 = arith.constant 0 : i32
    %c0_i32_1 = arith.constant 0 : i32
    return %c0_i32, %c0_i32_0 : i32, i32
  }
  func.func @transform_5(%arg0: i32) -> (i32, i32) {
    %c0_i32 = arith.constant 0 : i32
    %c0_i32_0 = arith.constant 0 : i32
    %c0_i32_1 = arith.constant 0 : i32
    return %c0_i32, %c0_i32_0 : i32, i32
  }
  func.func @transform_6(%arg0: i32) -> (i32, i32) {
    %c0_i32 = arith.constant 0 : i32
    %c0_i32_0 = arith.constant 0 : i32
    %c0_i32_1 = arith.constant 0 : i32
    return %c0_i32, %c0_i32_0 : i32, i32
  }
  func.func @transform_7(%arg0: i32) -> (i32, i32) {
    %c0_i32 = arith.constant 0 : i32
    %c0_i32_0 = arith.constant 0 : i32
    return %arg0, %c0_i32 : i32, i32
  }
}

</mosaic_0001>

<llo_original>
// kernel: cnn_cifar10_forward.3
$region0: #{cnn_cifar10_forward.3}
  #allocation0 [shape = 'u32[]', space=smem, size = 0x4, offset = 0x4, fixed_abs, tag = 'smem constant byte address 0x4 - core index']
  #allocation1 [shape = 'u32[144,128]{1,0:T(1,128)}', space=vmem, size = 0x12000, scoped, tag = 'internal scratch']
  %s0 = inlined_call_operand.vmem [shape: bf16[6,25], index: 0, kind: input, shape index: {}]
  %s1 = inlined_call_operand.vmem [shape: f32[6,1], index: 1, kind: input, shape index: {}]
  %s2 = inlined_call_operand.vmem [shape: bf16[25,2048], index: 2, kind: input, shape index: {}]
  %s3 = inlined_call_operand.vmem [shape: bf16[25,2048], index: 3, kind: input, shape index: {}]
  %s4 = inlined_call_operand.vmem [shape: bf16[25,2048], index: 4, kind: input, shape index: {}]
  %s5 = inlined_call_operand.vmem [shape: bf16[25,2048], index: 5, kind: input, shape index: {}]
  %s6 = inlined_call_operand.vmem [shape: bf16[6,2048], index: 6, kind: output, shape index: {}]
  %s7 = sld [smem:[#allocation0]]
  $region149: #{cnn_cifar10_forward.3} parent=0
    _
  %s9 = ssub.s32 1, %s7
  %s10 = scalar_select 0, %s9, %s7
  $region1: #{cnn_cifar10_forward.3} parent=0
    #allocation2 [shape = 'u8[131072]{0}', space=vmem, size = 0x20000, scoped, tag = 'input window, operand 2']
    #allocation3 [shape = 'u8[131072]{0}', space=vmem, size = 0x20000, scoped, tag = 'input window, operand 3']
    #allocation4 [shape = 'u8[131072]{0}', space=vmem, size = 0x20000, scoped, tag = 'input window, operand 4']
    #allocation5 [shape = 'u8[131072]{0}', space=vmem, size = 0x20000, scoped, tag = 'input window, operand 5']
    loop: start=0, step=1, limit=4
    $region2: #{cnn_cifar10_forward.3} parent=1 // loop_pre_header
      _
    $region3: #{cnn_cifar10_forward.3} parent=1 // loop_header
      %s12 = sphi 0, %s16
      %p13 = scmp.ge.s32.totalorder %s12, 4
      %s20 = sphi 0, %s20
      %s22 = sphi 0, %s20
      %s23 = sphi 0, %s22
      %s37 = sphi 0, %s23
      %s41 = sphi 0, %s41
      %s43 = sphi 0, %s41
      %s44 = sphi 0, %s43
      %s58 = sphi 0, %s44
      %s64 = sphi 0, %s66
      %s67 = sphi 0, %s64
      %s68 = sphi 0, %s67
      %s84 = sphi 0, %s68
      %s90 = sphi 0, %s92
      %s93 = sphi 0, %s90
      %s94 = sphi 0, %s93
      %s110 = sphi 0, %s94
      %s116 = sphi 0, %s118
      %s119 = sphi 0, %s116
      %s120 = sphi 0, %s119
      %s136 = sphi 0, %s120
      %s142 = sphi 0, %s144
      %s145 = sphi 0, %s142
      %s146 = sphi 0, %s145
      %s162 = sphi 0, %s146
      %s168 = sphi 0, %s170
      %s171 = sphi 0, %s168
      %s172 = sphi 0, %s171
      %s188 = sphi 0, %s172
    $region4: #{cnn_cifar10_forward.3} parent=1 // loop_header_branch
      %15 = sbr.rel (%p13) target = $region8
    $region5: #{cnn_cifar10_forward.3} parent=1 // loop_body
      %s17 = ssub.s32 %s12, 1
      %s18 = ssub.s32 %s12, 2
      %s19 = sadd.s32 %s12, 1
      %s21 = sadd.s32 %s20, 1
      %p24 = scmp.eq.s32.totalorder %s12, 1
      %p25 = scmp.ne.s32.totalorder %s20, %s22
      %p26 = scmp.eq.s32.totalorder %s12, 0
      %p27 = por %p25, %p26
      %p28 = scmp.ne.s32.totalorder %s20, %s22
      %p29 = scmp.eq.s32.totalorder %s17, 1
      %p30 = por %p28, %p29
      %p31 = scmp.ne.s32.totalorder %s22, %s23
      %p32 = scmp.eq.s32.totalorder %s17, 0
      %p33 = por %p31, %p32
      %p34 = scmp.ne.s32.totalorder %s22, %s23
      %p35 = scmp.eq.s32.totalorder %s18, 1
      %p36 = por %p34, %p35
      %p38 = scmp.ne.s32.totalorder %s23, %s37
      %p39 = scmp.eq.s32.totalorder %s18, 0
      %p40 = por %p38, %p39
      %s42 = sadd.s32 %s41, 1
      %p45 = scmp.eq.s32.totalorder %s12, 1
      %p46 = scmp.ne.s32.totalorder %s41, %s43
      %p47 = scmp.eq.s32.totalorder %s12, 0
      %p48 = por %p46, %p47
      %p49 = scmp.ne.s32.totalorder %s41, %s43
      %p50 = scmp.eq.s32.totalorder %s17, 1
      %p51 = por %p49, %p50
      %p52 = scmp.ne.s32.totalorder %s43, %s44
      %p53 = scmp.eq.s32.totalorder %s17, 0
      %p54 = por %p52, %p53
      %p55 = scmp.ne.s32.totalorder %s43, %s44
      %p56 = scmp.eq.s32.totalorder %s18, 1
      %p57 = por %p55, %p56
      %p59 = scmp.ne.s32.totalorder %s44, %s58
      %p60 = scmp.eq.s32.totalorder %s18, 0
      %p61 = por %p59, %p60
      %s62 = ssub.s32 %s12, %s19
      %p63 = scmp.eq.s32.totalorder %s62, 0
      %s65 = sadd.s32 %s64, 1
      %s66 = scalar_select %p63, %s64, %s65
      %p69 = pneg %p63
      %p70 = scmp.eq.s32.totalorder %s12, 1
      %p71 = por %p69, %p70
      %p72 = scmp.ne.s32.totalorder %s64, %s67
      %p73 = scmp.eq.s32.totalorder %s12, 0
      %p74 = por %p72, %p73
      %p75 = scmp.ne.s32.totalorder %s64, %s67
      %p76 = scmp.eq.s32.totalorder %s17, 1
      %p77 = por %p75, %p76
      %p78 = scmp.ne.s32.totalorder %s67, %s68
      %p79 = scmp.eq.s32.totalorder %s17, 0
      %p80 = por %p78, %p79
      %p81 = scmp.ne.s32.totalorder %s67, %s68
      %p82 = scmp.eq.s32.totalorder %s18, 1
      %p83 = por %p81, %p82
      %p85 = scmp.ne.s32.totalorder %s68, %s84
      %p86 = scmp.eq.s32.totalorder %s18, 0
      %p87 = por %p85, %p86
      %s88 = ssub.s32 %s12, %s19
      %p89 = scmp.eq.s32.totalorder %s88, 0
      %s91 = sadd.s32 %s90, 1
      %s92 = scalar_select %p89, %s90, %s91
      %p95 = pneg %p89
      %p96 = scmp.eq.s32.totalorder %s12, 1
      %p97 = por %p95, %p96
      %p98 = scmp.ne.s32.totalorder %s90, %s93
      %p99 = scmp.eq.s32.totalorder %s12, 0
      %p100 = por %p98, %p99
      %p101 = scmp.ne.s32.totalorder %s90, %s93
      %p102 = scmp.eq.s32.totalorder %s17, 1
      %p103 = por %p101, %p102
      %p104 = scmp.ne.s32.totalorder %s93, %s94
      %p105 = scmp.eq.s32.totalorder %s17, 0
      %p106 = por %p104, %p105
      %p107 = scmp.ne.s32.totalorder %s93, %s94
      %p108 = scmp.eq.s32.totalorder %s18, 1
      %p109 = por %p107, %p108
      %p111 = scmp.ne.s32.totalorder %s94, %s110
      %p112 = scmp.eq.s32.totalorder %s18, 0
      %p113 = por %p111, %p112
      %s114 = ssub.s32 %s12, %s19
      %p115 = scmp.eq.s32.totalorder %s114, 0
      %s117 = sadd.s32 %s116, 1
      %s118 = scalar_select %p115, %s116, %s117
      %p121 = pneg %p115
      %p122 = scmp.eq.s32.totalorder %s12, 1
      %p123 = por %p121, %p122
      %p124 = scmp.ne.s32.totalorder %s116, %s119
      %p125 = scmp.eq.s32.totalorder %s12, 0
      %p126 = por %p124, %p125
      %p127 = scmp.ne.s32.totalorder %s116, %s119
      %p128 = scmp.eq.s32.totalorder %s17, 1
      %p129 = por %p127, %p128
      %p130 = scmp.ne.s32.totalorder %s119, %s120
      %p131 = scmp.eq.s32.totalorder %s17, 0
      %p132 = por %p130, %p131
      %p133 = scmp.ne.s32.totalorder %s119, %s120
      %p134 = scmp.eq.s32.totalorder %s18, 1
      %p135 = por %p133, %p134
      %p137 = scmp.ne.s32.totalorder %s120, %s136
      %p138 = scmp.eq.s32.totalorder %s18, 0
      %p139 = por %p137, %p138
      %s140 = ssub.s32 %s12, %s19
      %p141 = scmp.eq.s32.totalorder %s140, 0
      %s143 = sadd.s32 %s142, 1
      %s144 = scalar_select %p141, %s142, %s143
      %p147 = pneg %p141
      %p148 = scmp.eq.s32.totalorder %s12, 1
      %p149 = por %p147, %p148
      %p150 = scmp.ne.s32.totalorder %s142, %s145
      %p151 = scmp.eq.s32.totalorder %s12, 0
      %p152 = por %p150, %p151
      %p153 = scmp.ne.s32.totalorder %s142, %s145
      %p154 = scmp.eq.s32.totalorder %s17, 1
      %p155 = por %p153, %p154
      %p156 = scmp.ne.s32.totalorder %s145, %s146
      %p157 = scmp.eq.s32.totalorder %s17, 0
      %p158 = por %p156, %p157
      %p159 = scmp.ne.s32.totalorder %s145, %s146
      %p160 = scmp.eq.s32.totalorder %s18, 1
      %p161 = por %p159, %p160
      %p163 = scmp.ne.s32.totalorder %s146, %s162
      %p164 = scmp.eq.s32.totalorder %s18, 0
      %p165 = por %p163, %p164
      %s166 = ssub.s32 %s12, %s19
      %p167 = scmp.eq.s32.totalorder %s166, 0
      %s169 = sadd.s32 %s168, 1
      %s170 = scalar_select %p167, %s168, %s169
      %p173 = pneg %p167
      %p174 = scmp.eq.s32.totalorder %s12, 1
      %p175 = por %p173, %p174
      %p176 = scmp.ne.s32.totalorder %s168, %s171
      %p177 = scmp.eq.s32.totalorder %s12, 0
      %p178 = por %p176, %p177
      %p179 = scmp.ne.s32.totalorder %s168, %s171
      %p180 = scmp.eq.s32.totalorder %s17, 1
      %p181 = por %p179, %p180
      %p182 = scmp.ne.s32.totalorder %s171, %s172
      %p183 = scmp.eq.s32.totalorder %s17, 0
      %p184 = por %p182, %p183
      %p185 = scmp.ne.s32.totalorder %s171, %s172
      %p186 = scmp.eq.s32.totalorder %s18, 1
      %p187 = por %p185, %p186
      %p189 = scmp.ne.s32.totalorder %s172, %s188
      %p190 = scmp.eq.s32.totalorder %s18, 0
      %p191 = por %p189, %p190
      %p192 = scmp.le.s32.totalorder 1, %s12
      %p193 = scmp.lt.s32.totalorder %s12, 3
      %p194 = pnand %p192, %p193
      %p195 = pneg %p194
      // Predicated region
      $region9: #{cnn_cifar10_forward.3} parent=5 // pred_check
        _
      $region10: #{cnn_cifar10_forward.3} parent=5 // pred_check_branch
        %197 = sbr.rel (%p194) target = $region12
      $region11: #{cnn_cifar10_forward.3} parent=5 // pred_region
        %s198 = ssub.s32 %s12, 1
        // Predicated region
        $region13: #{cnn_cifar10_forward.3} parent=11 // pred_check
          %p199 = pneg %p33
        $region14: #{cnn_cifar10_forward.3} parent=11 // pred_check_branch
          %201 = sbr.rel (%p199) target = $region16
        $region15: #{cnn_cifar10_forward.3} parent=11 // pred_region
          _
        $region16: #{cnn_cifar10_forward.3} parent=11 // pred_fallthru
          _
        // Predicated region
        $region17: #{cnn_cifar10_forward.3} parent=11 // pred_check
          %p202 = pneg %p54
        $region18: #{cnn_cifar10_forward.3} parent=11 // pred_check_branch
          %204 = sbr.rel (%p202) target = $region20
        $region19: #{cnn_cifar10_forward.3} parent=11 // pred_region
          _
        $region20: #{cnn_cifar10_forward.3} parent=11 // pred_fallthru
          _
      $region12: #{cnn_cifar10_forward.3} parent=5 // pred_fallthru
        _
      %p205 = scmp.lt.s32.totalorder %s12, 2
      // Predicated region
      $region21: #{cnn_cifar10_forward.3} parent=5 // pred_check
        %p206 = pneg %p205
      $region22: #{cnn_cifar10_forward.3} parent=5 // pred_check_branch
        %208 = sbr.rel (%p206) target = $region24
      $region23: #{cnn_cifar10_forward.3} parent=5 // pred_region
        // Predicated region
        $region25: #{cnn_cifar10_forward.3} parent=23 // pred_check
          %p209 = pneg %p74
        $region26: #{cnn_cifar10_forward.3} parent=23 // pred_check_branch
          %211 = sbr.rel (%p209) target = $region28
        $region27: #{cnn_cifar10_forward.3} parent=23 // pred_region
          %s212 = sand.u32 %s64, 1
          %s213 = sand.u32 %s64, 1
          %s214 = smul.addr %s213, 128
          %s215 = scalar_lea.vmem [#allocation2], %s214
          %s216 = smul.u32 8, %s12
          %s217 = smul.addr %s216, 4
          %s218 = scalar_lea.vmem %s2, %s217
          // Predicated region
          $region29: #{cnn_cifar10_forward.3} parent=27 // pred_check
            _
          $region30: #{cnn_cifar10_forward.3} parent=27 // pred_check_branch
            %220 = sbr.rel (0) target = $region32
          $region31: #{cnn_cifar10_forward.3} parent=27 // pred_region
            // Predicated region
            $region33: #{cnn_cifar10_forward.3} parent=31 // pred_check
              _
            $region34: #{cnn_cifar10_forward.3} parent=31 // pred_check_branch
              %222 = sbr.rel (0) target = $region36
            $region35: #{cnn_cifar10_forward.3} parent=31 // pred_region
              loop: start=0, step=1, limit=1
              $region37: #{cnn_cifar10_forward.3} parent=35 // loop_pre_header
                _
              $region38: #{cnn_cifar10_forward.3} parent=35 // loop_header
                %s224 = sphi 0, %s228
                %p225 = scmp.ge.s32.totalorder %s224, 1
                %s229 = sphi %s218, %s218
                %s230 = sphi %s215, %s215
              $region39: #{cnn_cifar10_forward.3} parent=35 // loop_header_branch
                %227 = sbr.rel (%p225) target = $region43
              $region40: #{cnn_cifar10_forward.3} parent=35 // loop_body
                %v231 = vld [vmem:[%s229] sm:$0xff]
                %232 = vst [vmem:[%s230] sm:$0xff] %v231
                %v233 = vld [vmem:[%s229 + $0x8] sm:$0xff]
                %234 = vst [vmem:[%s230 + $0x8] sm:$0xff] %v233
                %v235 = vld [vmem:[%s229 + $0x10] sm:$0xff]
                %236 = vst [vmem:[%s230 + $0x10] sm:$0xff] %v235
                %v237 = vld [vmem:[%s229 + $0x18] sm:$0xff]
                %238 = vst [vmem:[%s230 + $0x18] sm:$0xff] %v237
                %v239 = vld [vmem:[%s229 + $0x40] sm:$0xff]
                %240 = vst [vmem:[%s230 + $0x20] sm:$0xff] %v239
                %v241 = vld [vmem:[%s229 + $0x48] sm:$0xff]
                %242 = vst [vmem:[%s230 + $0x28] sm:$0xff] %v241
                %v243 = vld [vmem:[%s229 + $0x50] sm:$0xff]
                %244 = vst [vmem:[%s230 + $0x30] sm:$0xff] %v243
                %v245 = vld [vmem:[%s229 + $0x58] sm:$0xff]
                %246 = vst [vmem:[%s230 + $0x38] sm:$0xff] %v245
                %v247 = vld [vmem:[%s229 + $0x80] sm:$0xff]
                %248 = vst [vmem:[%s230 + $0x40] sm:$0xff] %v247
                %v249 = vld [vmem:[%s229 + $0x88] sm:$0xff]
                %250 = vst [vmem:[%s230 + $0x48] sm:$0xff] %v249
                %v251 = vld [vmem:[%s229 + $0x90] sm:$0xff]
                %252 = vst [vmem:[%s230 + $0x50] sm:$0xff] %v251
                %v253 = vld [vmem:[%s229 + $0x98] sm:$0xff]
                %254 = vst [vmem:[%s230 + $0x58] sm:$0xff] %v253
                %v255 = vld [vmem:[%s229 + $0xc0] sm:$0xff]
                %256 = vst [vmem:[%s230 + $0x60] sm:$0xff] %v255
                %v257 = vld [vmem:[%s229 + $0xc8] sm:$0xff]
                %258 = vst [vmem:[%s230 + $0x68] sm:$0xff] %v257
                %v259 = vld [vmem:[%s229 + $0xd0] sm:$0xff]
                %260 = vst [vmem:[%s230 + $0x70] sm:$0xff] %v259
                %v261 = vld [vmem:[%s229 + $0xd8] sm:$0xff]
                %262 = vst [vmem:[%s230 + $0x78] sm:$0xff] %v261
              $region41: #{cnn_cifar10_forward.3} parent=35 // loop_footer
                %s228 = sadd.s32 1, %s224
              $region42: #{cnn_cifar10_forward.3} parent=35 // loop_footer_branch
                %223 = sbr.rel target = $region38
              $region43: #{cnn_cifar10_forward.3} parent=35 // loop_exit
                _
            $region36: #{cnn_cifar10_forward.3} parent=31 // pred_fallthru
              _
            // Predicated region
            $region44: #{cnn_cifar10_forward.3} parent=31 // pred_check
              _
            $region45: #{cnn_cifar10_forward.3} parent=31 // pred_check_branch
              %264 = sbr.rel target = $region47
            $region46: #{cnn_cifar10_forward.3} parent=31 // pred_region
              _
            $region47: #{cnn_cifar10_forward.3} parent=31 // pred_fallthru
              _
          $region32: #{cnn_cifar10_forward.3} parent=27 // pred_fallthru
            _
          %265 = vnop
        $region28: #{cnn_cifar10_forward.3} parent=23 // pred_fallthru
          _
        // Predicated region
        $region48: #{cnn_cifar10_forward.3} parent=23 // pred_check
          %p266 = pneg %p100
        $region49: #{cnn_cifar10_forward.3} parent=23 // pred_check_branch
          %268 = sbr.rel (%p266) target = $region51
        $region50: #{cnn_cifar10_forward.3} parent=23 // pred_region
          %s269 = sand.u32 %s90, 1
          %s270 = sand.u32 %s90, 1
          %s271 = smul.addr %s270, 128
          %s272 = scalar_lea.vmem [#allocation3], %s271
          %s273 = smul.u32 8, %s12
          %s274 = smul.addr %s273, 4
          %s275 = scalar_lea.vmem %s3, %s274
          // Predicated region
          $region52: #{cnn_cifar10_forward.3} parent=50 // pred_check
            _
          $region53: #{cnn_cifar10_forward.3} parent=50 // pred_check_branch
            %277 = sbr.rel (0) target = $region55
          $region54: #{cnn_cifar10_forward.3} parent=50 // pred_region
            // Predicated region
            $region56: #{cnn_cifar10_forward.3} parent=54 // pred_check
              _
            $region57: #{cnn_cifar10_forward.3} parent=54 // pred_check_branch
              %279 = sbr.rel (0) target = $region59
            $region58: #{cnn_cifar10_forward.3} parent=54 // pred_region
              loop: start=0, step=1, limit=1
              $region60: #{cnn_cifar10_forward.3} parent=58 // loop_pre_header
                _
              $region61: #{cnn_cifar10_forward.3} parent=58 // loop_header
                %s281 = sphi 0, %s285
                %p282 = scmp.ge.s32.totalorder %s281, 1
                %s286 = sphi %s275, %s275
                %s287 = sphi %s272, %s272
              $region62: #{cnn_cifar10_forward.3} parent=58 // loop_header_branch
                %284 = sbr.rel (%p282) target = $region66
              $region63: #{cnn_cifar10_forward.3} parent=58 // loop_body
                %v288 = vld [vmem:[%s286] sm:$0xff]
                %289 = vst [vmem:[%s287] sm:$0xff] %v288
                %v290 = vld [vmem:[%s286 + $0x8] sm:$0xff]
                %291 = vst [vmem:[%s287 + $0x8] sm:$0xff] %v290
                %v292 = vld [vmem:[%s286 + $0x10] sm:$0xff]
                %293 = vst [vmem:[%s287 + $0x10] sm:$0xff] %v292
                %v294 = vld [vmem:[%s286 + $0x18] sm:$0xff]
                %295 = vst [vmem:[%s287 + $0x18] sm:$0xff] %v294
                %v296 = vld [vmem:[%s286 + $0x40] sm:$0xff]
                %297 = vst [vmem:[%s287 + $0x20] sm:$0xff] %v296
                %v298 = vld [vmem:[%s286 + $0x48] sm:$0xff]
                %299 = vst [vmem:[%s287 + $0x28] sm:$0xff] %v298
                %v300 = vld [vmem:[%s286 + $0x50] sm:$0xff]
                %301 = vst [vmem:[%s287 + $0x30] sm:$0xff] %v300
                %v302 = vld [vmem:[%s286 + $0x58] sm:$0xff]
                %303 = vst [vmem:[%s287 + $0x38] sm:$0xff] %v302
                %v304 = vld [vmem:[%s286 + $0x80] sm:$0xff]
                %305 = vst [vmem:[%s287 + $0x40] sm:$0xff] %v304
                %v306 = vld [vmem:[%s286 + $0x88] sm:$0xff]
                %307 = vst [vmem:[%s287 + $0x48] sm:$0xff] %v306
                %v308 = vld [vmem:[%s286 + $0x90] sm:$0xff]
                %309 = vst [vmem:[%s287 + $0x50] sm:$0xff] %v308
                %v310 = vld [vmem:[%s286 + $0x98] sm:$0xff]
                %311 = vst [vmem:[%s287 + $0x58] sm:$0xff] %v310
                %v312 = vld [vmem:[%s286 + $0xc0] sm:$0xff]
                %313 = vst [vmem:[%s287 + $0x60] sm:$0xff] %v312
                %v314 = vld [vmem:[%s286 + $0xc8] sm:$0xff]
                %315 = vst [vmem:[%s287 + $0x68] sm:$0xff] %v314
                %v316 = vld [vmem:[%s286 + $0xd0] sm:$0xff]
                %317 = vst [vmem:[%s287 + $0x70] sm:$0xff] %v316
                %v318 = vld [vmem:[%s286 + $0xd8] sm:$0xff]
                %319 = vst [vmem:[%s287 + $0x78] sm:$0xff] %v318
              $region64: #{cnn_cifar10_forward.3} parent=58 // loop_footer
                %s285 = sadd.s32 1, %s281
              $region65: #{cnn_cifar10_forward.3} parent=58 // loop_footer_branch
                %280 = sbr.rel target = $region61
              $region66: #{cnn_cifar10_forward.3} parent=58 // loop_exit
                _
            $region59: #{cnn_cifar10_forward.3} parent=54 // pred_fallthru
              _
            // Predicated region
            $region67: #{cnn_cifar10_forward.3} parent=54 // pred_check
              _
            $region68: #{cnn_cifar10_forward.3} parent=54 // pred_check_branch
              %321 = sbr.rel target = $region70
            $region69: #{cnn_cifar10_forward.3} parent=54 // pred_region
              _
            $region70: #{cnn_cifar10_forward.3} parent=54 // pred_fallthru
              _
          $region55: #{cnn_cifar10_forward.3} parent=50 // pred_fallthru
            _
          %322 = vnop
        $region51: #{cnn_cifar10_forward.3} parent=23 // pred_fallthru
          _
        // Predicated region
        $region71: #{cnn_cifar10_forward.3} parent=23 // pred_check
          %p323 = pneg %p126
        $region72: #{cnn_cifar10_forward.3} parent=23 // pred_check_branch
          %325 = sbr.rel (%p323) target = $region74
        $region73: #{cnn_cifar10_forward.3} parent=23 // pred_region
          %s326 = sand.u32 %s116, 1
          %s327 = sand.u32 %s116, 1
          %s328 = smul.addr %s327, 128
          %s329 = scalar_lea.vmem [#allocation4], %s328
          %s330 = smul.u32 8, %s12
          %s331 = smul.addr %s330, 4
          %s332 = scalar_lea.vmem %s4, %s331
          // Predicated region
          $region75: #{cnn_cifar10_forward.3} parent=73 // pred_check
            _
          $region76: #{cnn_cifar10_forward.3} parent=73 // pred_check_branch
            %334 = sbr.rel (0) target = $region78
          $region77: #{cnn_cifar10_forward.3} parent=73 // pred_region
            // Predicated region
            $region79: #{cnn_cifar10_forward.3} parent=77 // pred_check
              _
            $region80: #{cnn_cifar10_forward.3} parent=77 // pred_check_branch
              %336 = sbr.rel (0) target = $region82
            $region81: #{cnn_cifar10_forward.3} parent=77 // pred_region
              loop: start=0, step=1, limit=1
              $region83: #{cnn_cifar10_forward.3} parent=81 // loop_pre_header
                _
              $region84: #{cnn_cifar10_forward.3} parent=81 // loop_header
                %s338 = sphi 0, %s342
                %p339 = scmp.ge.s32.totalorder %s338, 1
                %s343 = sphi %s332, %s332
                %s344 = sphi %s329, %s329
              $region85: #{cnn_cifar10_forward.3} parent=81 // loop_header_branch
                %341 = sbr.rel (%p339) target = $region89
              $region86: #{cnn_cifar10_forward.3} parent=81 // loop_body
                %v345 = vld [vmem:[%s343] sm:$0xff]
                %346 = vst [vmem:[%s344] sm:$0xff] %v345
                %v347 = vld [vmem:[%s343 + $0x8] sm:$0xff]
                %348 = vst [vmem:[%s344 + $0x8] sm:$0xff] %v347
                %v349 = vld [vmem:[%s343 + $0x10] sm:$0xff]
                %350 = vst [vmem:[%s344 + $0x10] sm:$0xff] %v349
                %v351 = vld [vmem:[%s343 + $0x18] sm:$0xff]
                %352 = vst [vmem:[%s344 + $0x18] sm:$0xff] %v351
                %v353 = vld [vmem:[%s343 + $0x40] sm:$0xff]
                %354 = vst [vmem:[%s344 + $0x20] sm:$0xff] %v353
                %v355 = vld [vmem:[%s343 + $0x48] sm:$0xff]
                %356 = vst [vmem:[%s344 + $0x28] sm:$0xff] %v355
                %v357 = vld [vmem:[%s343 + $0x50] sm:$0xff]
                %358 = vst [vmem:[%s344 + $0x30] sm:$0xff] %v357
                %v359 = vld [vmem:[%s343 + $0x58] sm:$0xff]
                %360 = vst [vmem:[%s344 + $0x38] sm:$0xff] %v359
                %v361 = vld [vmem:[%s343 + $0x80] sm:$0xff]
                %362 = vst [vmem:[%s344 + $0x40] sm:$0xff] %v361
                %v363 = vld [vmem:[%s343 + $0x88] sm:$0xff]
                %364 = vst [vmem:[%s344 + $0x48] sm:$0xff] %v363
                %v365 = vld [vmem:[%s343 + $0x90] sm:$0xff]
                %366 = vst [vmem:[%s344 + $0x50] sm:$0xff] %v365
                %v367 = vld [vmem:[%s343 + $0x98] sm:$0xff]
                %368 = vst [vmem:[%s344 + $0x58] sm:$0xff] %v367
                %v369 = vld [vmem:[%s343 + $0xc0] sm:$0xff]
                %370 = vst [vmem:[%s344 + $0x60] sm:$0xff] %v369
                %v371 = vld [vmem:[%s343 + $0xc8] sm:$0xff]
                %372 = vst [vmem:[%s344 + $0x68] sm:$0xff] %v371
                %v373 = vld [vmem:[%s343 + $0xd0] sm:$0xff]
                %374 = vst [vmem:[%s344 + $0x70] sm:$0xff] %v373
                %v375 = vld [vmem:[%s343 + $0xd8] sm:$0xff]
                %376 = vst [vmem:[%s344 + $0x78] sm:$0xff] %v375
              $region87: #{cnn_cifar10_forward.3} parent=81 // loop_footer
                %s342 = sadd.s32 1, %s338
              $region88: #{cnn_cifar10_forward.3} parent=81 // loop_footer_branch
                %337 = sbr.rel target = $region84
              $region89: #{cnn_cifar10_forward.3} parent=81 // loop_exit
                _
            $region82: #{cnn_cifar10_forward.3} parent=77 // pred_fallthru
              _
            // Predicated region
            $region90: #{cnn_cifar10_forward.3} parent=77 // pred_check
              _
            $region91: #{cnn_cifar10_forward.3} parent=77 // pred_check_branch
              %378 = sbr.rel target = $region93
            $region92: #{cnn_cifar10_forward.3} parent=77 // pred_region
              _
            $region93: #{cnn_cifar10_forward.3} parent=77 // pred_fallthru
              _
          $region78: #{cnn_cifar10_forward.3} parent=73 // pred_fallthru
            _
          %379 = vnop
        $region74: #{cnn_cifar10_forward.3} parent=23 // pred_fallthru
          _
        // Predicated region
        $region94: #{cnn_cifar10_forward.3} parent=23 // pred_check
          %p380 = pneg %p152
        $region95: #{cnn_cifar10_forward.3} parent=23 // pred_check_branch
          %382 = sbr.rel (%p380) target = $region97
        $region96: #{cnn_cifar10_forward.3} parent=23 // pred_region
          %s383 = sand.u32 %s142, 1
          %s384 = sand.u32 %s142, 1
          %s385 = smul.addr %s384, 128
          %s386 = scalar_lea.vmem [#allocation5], %s385
          %s387 = smul.u32 8, %s12
          %s388 = smul.addr %s387, 4
          %s389 = scalar_lea.vmem %s5, %s388
          // Predicated region
          $region98: #{cnn_cifar10_forward.3} parent=96 // pred_check
            _
          $region99: #{cnn_cifar10_forward.3} parent=96 // pred_check_branch
            %391 = sbr.rel (0) target = $region101
          $region100: #{cnn_cifar10_forward.3} parent=96 // pred_region
            // Predicated region
            $region102: #{cnn_cifar10_forward.3} parent=100 // pred_check
              _
            $region103: #{cnn_cifar10_forward.3} parent=100 // pred_check_branch
              %393 = sbr.rel (0) target = $region105
            $region104: #{cnn_cifar10_forward.3} parent=100 // pred_region
              loop: start=0, step=1, limit=1
              $region106: #{cnn_cifar10_forward.3} parent=104 // loop_pre_header
                _
              $region107: #{cnn_cifar10_forward.3} parent=104 // loop_header
                %s395 = sphi 0, %s399
                %p396 = scmp.ge.s32.totalorder %s395, 1
                %s400 = sphi %s389, %s389
                %s401 = sphi %s386, %s386
              $region108: #{cnn_cifar10_forward.3} parent=104 // loop_header_branch
                %398 = sbr.rel (%p396) target = $region112
              $region109: #{cnn_cifar10_forward.3} parent=104 // loop_body
                %v402 = vld [vmem:[%s400] sm:$0xff]
                %403 = vst [vmem:[%s401] sm:$0xff] %v402
                %v404 = vld [vmem:[%s400 + $0x8] sm:$0xff]
                %405 = vst [vmem:[%s401 + $0x8] sm:$0xff] %v404
                %v406 = vld [vmem:[%s400 + $0x10] sm:$0xff]
                %407 = vst [vmem:[%s401 + $0x10] sm:$0xff] %v406
                %v408 = vld [vmem:[%s400 + $0x18] sm:$0xff]
                %409 = vst [vmem:[%s401 + $0x18] sm:$0xff] %v408
                %v410 = vld [vmem:[%s400 + $0x40] sm:$0xff]
                %411 = vst [vmem:[%s401 + $0x20] sm:$0xff] %v410
                %v412 = vld [vmem:[%s400 + $0x48] sm:$0xff]
                %413 = vst [vmem:[%s401 + $0x28] sm:$0xff] %v412
                %v414 = vld [vmem:[%s400 + $0x50] sm:$0xff]
                %415 = vst [vmem:[%s401 + $0x30] sm:$0xff] %v414
                %v416 = vld [vmem:[%s400 + $0x58] sm:$0xff]
                %417 = vst [vmem:[%s401 + $0x38] sm:$0xff] %v416
                %v418 = vld [vmem:[%s400 + $0x80] sm:$0xff]
                %419 = vst [vmem:[%s401 + $0x40] sm:$0xff] %v418
                %v420 = vld [vmem:[%s400 + $0x88] sm:$0xff]
                %421 = vst [vmem:[%s401 + $0x48] sm:$0xff] %v420
                %v422 = vld [vmem:[%s400 + $0x90] sm:$0xff]
                %423 = vst [vmem:[%s401 + $0x50] sm:$0xff] %v422
                %v424 = vld [vmem:[%s400 + $0x98] sm:$0xff]
                %425 = vst [vmem:[%s401 + $0x58] sm:$0xff] %v424
                %v426 = vld [vmem:[%s400 + $0xc0] sm:$0xff]
                %427 = vst [vmem:[%s401 + $0x60] sm:$0xff] %v426
                %v428 = vld [vmem:[%s400 + $0xc8] sm:$0xff]
                %429 = vst [vmem:[%s401 + $0x68] sm:$0xff] %v428
                %v430 = vld [vmem:[%s400 + $0xd0] sm:$0xff]
                %431 = vst [vmem:[%s401 + $0x70] sm:$0xff] %v430
                %v432 = vld [vmem:[%s400 + $0xd8] sm:$0xff]
                %433 = vst [vmem:[%s401 + $0x78] sm:$0xff] %v432
              $region110: #{cnn_cifar10_forward.3} parent=104 // loop_footer
                %s399 = sadd.s32 1, %s395
              $region111: #{cnn_cifar10_forward.3} parent=104 // loop_footer_branch
                %394 = sbr.rel target = $region107
              $region112: #{cnn_cifar10_forward.3} parent=104 // loop_exit
                _
            $region105: #{cnn_cifar10_forward.3} parent=100 // pred_fallthru
              _
            // Predicated region
            $region113: #{cnn_cifar10_forward.3} parent=100 // pred_check
              _
            $region114: #{cnn_cifar10_forward.3} parent=100 // pred_check_branch
              %435 = sbr.rel target = $region116
            $region115: #{cnn_cifar10_forward.3} parent=100 // pred_region
              _
            $region116: #{cnn_cifar10_forward.3} parent=100 // pred_fallthru
              _
          $region101: #{cnn_cifar10_forward.3} parent=96 // pred_fallthru
            _
          %436 = vnop
        $region97: #{cnn_cifar10_forward.3} parent=23 // pred_fallthru
          _
      $region24: #{cnn_cifar10_forward.3} parent=5 // pred_fallthru
        _
      %p437 = scmp.le.s32.totalorder 1, %s12
      %p438 = scmp.lt.s32.totalorder %s12, 3
      %p439 = pnand %p437, %p438
      %p440 = pneg %p439
      // Predicated region
      $region117: #{cnn_cifar10_forward.3} parent=5 // pred_check
        _
      $region118: #{cnn_cifar10_forward.3} parent=5 // pred_check_branch
        %442 = sbr.rel (%p439) target = $region120
      $region119: #{cnn_cifar10_forward.3} parent=5 // pred_region
        %s443 = ssub.s32 %s12, 1
        %s444 = sand.u32 %s67, 1
        %s445 = sand.u32 %s67, 1
        %s446 = smul.addr %s445, 128
        %s447 = scalar_lea.vmem [#allocation2], %s446
        // Predicated region
        $region121: #{cnn_cifar10_forward.3} parent=119 // pred_check
          %p448 = pneg %p80
        $region122: #{cnn_cifar10_forward.3} parent=119 // pred_check_branch
          %450 = sbr.rel (%p448) target = $region124
        $region123: #{cnn_cifar10_forward.3} parent=119 // pred_region
          _
        $region124: #{cnn_cifar10_forward.3} parent=119 // pred_fallthru
          _
        %s451 = sand.u32 %s93, 1
        %s452 = sand.u32 %s93, 1
        %s453 = smul.addr %s452, 128
        %s454 = scalar_lea.vmem [#allocation3], %s453
        // Predicated region
        $region125: #{cnn_cifar10_forward.3} parent=119 // pred_check
          %p455 = pneg %p106
        $region126: #{cnn_cifar10_forward.3} parent=119 // pred_check_branch
          %457 = sbr.rel (%p455) target = $region128
        $region127: #{cnn_cifar10_forward.3} parent=119 // pred_region
          _
        $region128: #{cnn_cifar10_forward.3} parent=119 // pred_fallthru
          _
        %s458 = sand.u32 %s119, 1
        %s459 = sand.u32 %s119, 1
        %s460 = smul.addr %s459, 128
        %s461 = scalar_lea.vmem [#allocation4], %s460
        // Predicated region
        $region129: #{cnn_cifar10_forward.3} parent=119 // pred_check
          %p462 = pneg %p132
        $region130: #{cnn_cifar10_forward.3} parent=119 // pred_check_branch
          %464 = sbr.rel (%p462) target = $region132
        $region131: #{cnn_cifar10_forward.3} parent=119 // pred_region
          _
        $region132: #{cnn_cifar10_forward.3} parent=119 // pred_fallthru
          _
        %s465 = sand.u32 %s145, 1
        %s466 = sand.u32 %s145, 1
        %s467 = smul.addr %s466, 128
        %s468 = scalar_lea.vmem [#allocation5], %s467
        // Predicated region
        $region133: #{cnn_cifar10_forward.3} parent=119 // pred_check
          %p469 = pneg %p158
        $region134: #{cnn_cifar10_forward.3} parent=119 // pred_check_branch
          %471 = sbr.rel (%p469) target = $region136
        $region135: #{cnn_cifar10_forward.3} parent=119 // pred_region
          _
        $region136: #{cnn_cifar10_forward.3} parent=119 // pred_fallthru
          _
        %p472 = pneg %p33
        %p473 = pneg %p30
        %p474 = pneg %p54
        %p475 = pneg %p51
        %s476 = sand.u32 %s67, 1
        %s477 = sand.u32 %s67, 1
        %s478 = smul.addr %s477, 128
        %s479 = scalar_lea.vmem [#allocation2], %s478
        %p480 = pneg %p80
        %p481 = pneg %p77
        %s482 = sand.u32 %s93, 1
        %s483 = sand.u32 %s93, 1
        %s484 = smul.addr %s483, 128
        %s485 = scalar_lea.vmem [#allocation3], %s484
        %p486 = pneg %p106
        %p487 = pneg %p103
        %s488 = sand.u32 %s119, 1
        %s489 = sand.u32 %s119, 1
        %s490 = smul.addr %s489, 128
        %s491 = scalar_lea.vmem [#allocation4], %s490
        %p492 = pneg %p132
        %p493 = pneg %p129
        %s494 = sand.u32 %s145, 1
        %s495 = sand.u32 %s145, 1
        %s496 = smul.addr %s495, 128
        %s497 = scalar_lea.vmem [#allocation5], %s496
        %p498 = pneg %p158
        %p499 = pneg %p155
        %p500 = pneg %p184
        %p501 = pneg %p181
        %s502 = smul.u32 8, %s17
        %p503 = scmp.lt.s32.totalorder %s502, 15
        %s504 = scalar_select %p503, %s502, 15
        %s505 = smul.addr %s504, 4
        %s506 = scalar_lea.vmem %s6, %s505
        %s507 = smul.u32 8, %s17
        %s508 = smul.u32 8, %s17
        %s509 = smul.u32 8, %s17
        %s510 = smul.u32 8, %s17
        %s511 = smul.u32 8, %s17
        %p512 = scmp.lt.s32.totalorder %s511, 15
        %s513 = scalar_select %p512, %s511, 15
        %s514 = smul.addr %s513, 4
        %s515 = scalar_lea.vmem %s6, %s514
        %s516 = smul.u32 8, %s17
        %v518 = vld [vmem:[%s0] sm:$0x7]
        %v519 = vld [vmem:[%s447] sm:$0xff]
        %v520 = vld [vmem:[%s447 + $0x8] sm:$0xff]
        %v521 = vld [vmem:[%s447 + $0x10] sm:$0xff]
        %v522 = vld [vmem:[%s447 + $0x18] sm:$0xff]
        %v523 = vld [vmem:[%s447 + $0x20] sm:$0xff]
        %v524 = vld [vmem:[%s447 + $0x28] sm:$0xff]
        %v525 = vld [vmem:[%s447 + $0x30] sm:$0xff]
        %v526 = vld [vmem:[%s447 + $0x38] sm:$0xff]
        %v527 = vld [vmem:[%s447 + $0x40] sm:$0xff]
        %v528 = vld [vmem:[%s447 + $0x48] sm:$0xff]
        %v529 = vld [vmem:[%s447 + $0x50] sm:$0xff]
        %v530 = vld [vmem:[%s447 + $0x58] sm:$0xff]
        %v531 = vld [vmem:[%s447 + $0x60] sm:$0x11]
        %v532 = vld [vmem:[%s447 + $0x68] sm:$0x11]
        %v533 = vld [vmem:[%s447 + $0x70] sm:$0x11]
        %v534 = vld [vmem:[%s447 + $0x78] sm:$0x11]
        %v551 = vunpack.c.l.b16 %v519
        %v552 = vunpack.c.h.b16 %v519
        %v553 = vunpack.c.l.b16 %v520
        %v554 = vunpack.c.h.b16 %v520
        %v555 = vunpack.c.l.b16 %v521
        %v556 = vunpack.c.h.b16 %v521
        %v557 = vunpack.c.l.b16 %v522
        %v558 = vunpack.c.h.b16 %v522
        %v559 = vunpack.c.l.b16 %v523
        %v560 = vunpack.c.h.b16 %v523
        %v561 = vunpack.c.l.b16 %v524
        %v562 = vunpack.c.h.b16 %v524
        %v563 = vunpack.c.l.b16 %v525
        %v564 = vunpack.c.h.b16 %v525
        %v565 = vunpack.c.l.b16 %v526
        %v566 = vunpack.c.h.b16 %v526
        %v567 = vunpack.c.l.b16 %v527
        %v568 = vunpack.c.h.b16 %v527
        %v569 = vunpack.c.l.b16 %v528
        %v570 = vunpack.c.h.b16 %v528
        %v571 = vunpack.c.l.b16 %v529
        %v572 = vunpack.c.h.b16 %v529
        %v573 = vunpack.c.l.b16 %v530
        %v574 = vunpack.c.h.b16 %v530
        %v575 = vunpack.c.l.b16 %v531
        %v576 = vunpack.c.h.b16 %v531
        %v577 = vunpack.c.l.b16 %v532
        %v578 = vunpack.c.h.b16 %v532
        %v579 = vunpack.c.l.b16 %v533
        %v580 = vunpack.c.h.b16 %v533
        %v581 = vunpack.c.l.b16 %v534
        %v582 = vunpack.c.h.b16 %v534
        %v583 = vpack.c.b16 %v559, %v551
        %v584 = vpack.c.b16 %v560, %v552
        %v585 = vpack.c.b16 %v561, %v553
        %v586 = vpack.c.b16 %v562, %v554
        %v587 = vpack.c.b16 %v563, %v555
        %v588 = vpack.c.b16 %v564, %v556
        %v589 = vpack.c.b16 %v565, %v557
        %v590 = vpack.c.b16 %v566, %v558
        %v591 = vpack.c.b16 %v575, %v567
        %v592 = vpack.c.b16 %v576, %v568
        %v593 = vpack.c.b16 %v577, %v569
        %v594 = vpack.c.b16 %v578, %v570
        %v595 = vpack.c.b16 %v579, %v571
        %v596 = vpack.c.b16 %v580, %v572
        %v597 = vpack.c.b16 %v581, %v573
        %v598 = vpack.c.b16 %v582, %v574
        %vm607 = vcmask 203776
        %v609 = vsel %vm607, %v518, 0
        %vm611 = vcmask 1043456
        %vm612 = vcmask 1044480
        %v613 = vsel %vm611, 4294967295, 65535
        %v614 = vsel %vm612, %v613, 0
        %v616 = vand.u32 %v591, %v614
        %v619 = vand.u32 %v592, %v614
        %v622 = vand.u32 %v593, %v614
        %v625 = vand.u32 %v594, %v614
        %v628 = vand.u32 %v595, %v614
        %v631 = vand.u32 %v596, %v614
        %v634 = vand.u32 %v597, %v614
        %v637 = vand.u32 %v598, %v614
        %639 = vmatprep.subr.bf16.mxu0 %v584
        %640 = vmatpush1.bf16.msra.mxu0 %v583
        %641 = vmatprep.subr.bf16.mxu0 %v619
        %642 = vmatpush1.bf16.msra.mxu0 %v616
        %643 = vmatprep.subr.bf16.mxu0 0
        %644 = vmatpush1.bf16.msra.mxu0 0
        %645 = vmatprep.subr.bf16.mxu0 0
        %646 = vmatpush1.bf16.msra.mxu0 0
        %647 = vmatprep.subr.bf16.mxu0 0
        %648 = vmatpush1.bf16.msra.mxu0 0
        %649 = vmatprep.subr.bf16.mxu0 0
        %650 = vmatpush1.bf16.msra.mxu0 0
        %651 = vmatprep.subr.bf16.mxu0 0
        %652 = vmatpush1.bf16.msra.mxu0 0
        %653 = vmatprep.subr.bf16.mxu0 0
        %654 = vmatpush1.bf16.msra.mxu0 0
        %655 = vmatprep.subr.bf16.mxu0 0
        %656 = vmatpush1.bf16.msra.mxu0 0
        %657 = vmatprep.subr.bf16.mxu0 0
        %658 = vmatpush1.bf16.msra.mxu0 0
        %659 = vmatprep.subr.bf16.mxu0 0
        %660 = vmatpush1.bf16.msra.mxu0 0
        %661 = vmatprep.subr.bf16.mxu0 0
        %662 = vmatpush1.bf16.msra.mxu0 0
        %663 = vmatprep.subr.bf16.mxu0 0
        %664 = vmatpush1.bf16.msra.mxu0 0
        %665 = vmatprep.subr.bf16.mxu0 0
        %666 = vmatpush1.bf16.msra.mxu0 0
        %667 = vmatprep.subr.bf16.mxu0 0
        %668 = vmatpush1.bf16.msra.mxu0 0
        %669 = vmatprep.subr.bf16.mxu0 0
        %670 = vmatpush1.bf16.msra.mxu0 0
        %671 = vmatprep.mubr.bf16.mxu0 0
        %672 = vmatmul.mubr.bf16.gmra.mrb[0].mxu0 %v609
        %v673 = vpop.f32.mrb[0].mxu0
        %v674 = vadd.f32 0.0, %v673
        %v675 = vpop.f32.mrb[0].mxu0
        %v676 = vadd.f32 0.0, %v675
        %v677 = vpop.f32.mrb[0].mxu0
        %v678 = vpop.f32.mrb[0].mxu0
        %679 = vdwg.mxu0
        %680 = vmatprep.subr.bf16.mxu0 %v586
        %681 = vmatpush1.bf16.msra.mxu0 %v585
        %682 = vmatprep.subr.bf16.mxu0 %v625
        %683 = vmatpush1.bf16.msra.mxu0 %v622
        %684 = vmatprep.subr.bf16.mxu0 0
        %685 = vmatpush1.bf16.msra.mxu0 0
        %686 = vmatprep.subr.bf16.mxu0 0
        %687 = vmatpush1.bf16.msra.mxu0 0
        %688 = vmatprep.subr.bf16.mxu0 0
        %689 = vmatpush1.bf16.msra.mxu0 0
        %690 = vmatprep.subr.bf16.mxu0 0
        %691 = vmatpush1.bf16.msra.mxu0 0
        %692 = vmatprep.subr.bf16.mxu0 0
        %693 = vmatpush1.bf16.msra.mxu0 0
        %694 = vmatprep.subr.bf16.mxu0 0
        %695 = vmatpush1.bf16.msra.mxu0 0
        %696 = vmatprep.subr.bf16.mxu0 0
        %697 = vmatpush1.bf16.msra.mxu0 0
        %698 = vmatprep.subr.bf16.mxu0 0
        %699 = vmatpush1.bf16.msra.mxu0 0
        %700 = vmatprep.subr.bf16.mxu0 0
        %701 = vmatpush1.bf16.msra.mxu0 0
        %702 = vmatprep.subr.bf16.mxu0 0
        %703 = vmatpush1.bf16.msra.mxu0 0
        %704 = vmatprep.subr.bf16.mxu0 0
        %705 = vmatpush1.bf16.msra.mxu0 0
        %706 = vmatprep.subr.bf16.mxu0 0
        %707 = vmatpush1.bf16.msra.mxu0 0
        %708 = vmatprep.subr.bf16.mxu0 0
        %709 = vmatpush1.bf16.msra.mxu0 0
        %710 = vmatprep.subr.bf16.mxu0 0
        %711 = vmatpush1.bf16.msra.mxu0 0
        %712 = vmatprep.mubr.bf16.mxu0 0
        %713 = vmatmul.mubr.bf16.gmra.mrb[0].mxu0 %v609
        %v714 = vpop.f32.mrb[0].mxu0
        %v715 = vadd.f32 0.0, %v714
        %v716 = vpop.f32.mrb[0].mxu0
        %v717 = vadd.f32 0.0, %v716
        %v718 = vpop.f32.mrb[0].mxu0
        %v719 = vpop.f32.mrb[0].mxu0
        %720 = vdwg.mxu0
        %721 = vmatprep.subr.bf16.mxu0 %v588
        %722 = vmatpush1.bf16.msra.mxu0 %v587
        %723 = vmatprep.subr.bf16.mxu0 %v631
        %724 = vmatpush1.bf16.msra.mxu0 %v628
        %725 = vmatprep.subr.bf16.mxu0 0
        %726 = vmatpush1.bf16.msra.mxu0 0
        %727 = vmatprep.subr.bf16.mxu0 0
        %728 = vmatpush1.bf16.msra.mxu0 0
        %729 = vmatprep.subr.bf16.mxu0 0
        %730 = vmatpush1.bf16.msra.mxu0 0
        %731 = vmatprep.subr.bf16.mxu0 0
        %732 = vmatpush1.bf16.msra.mxu0 0
        %733 = vmatprep.subr.bf16.mxu0 0
        %734 = vmatpush1.bf16.msra.mxu0 0
        %735 = vmatprep.subr.bf16.mxu0 0
        %736 = vmatpush1.bf16.msra.mxu0 0
        %737 = vmatprep.subr.bf16.mxu0 0
        %738 = vmatpush1.bf16.msra.mxu0 0
        %739 = vmatprep.subr.bf16.mxu0 0
        %740 = vmatpush1.bf16.msra.mxu0 0
        %741 = vmatprep.subr.bf16.mxu0 0
        %742 = vmatpush1.bf16.msra.mxu0 0
        %743 = vmatprep.subr.bf16.mxu0 0
        %744 = vmatpush1.bf16.msra.mxu0 0
        %745 = vmatprep.subr.bf16.mxu0 0
        %746 = vmatpush1.bf16.msra.mxu0 0
        %747 = vmatprep.subr.bf16.mxu0 0
        %748 = vmatpush1.bf16.msra.mxu0 0
        %749 = vmatprep.subr.bf16.mxu0 0
        %750 = vmatpush1.bf16.msra.mxu0 0
        %751 = vmatprep.subr.bf16.mxu0 0
        %752 = vmatpush1.bf16.msra.mxu0 0
        %753 = vmatprep.mubr.bf16.mxu0 0
        %754 = vmatmul.mubr.bf16.gmra.mrb[0].mxu0 %v609
        %v755 = vpop.f32.mrb[0].mxu0
        %v756 = vadd.f32 0.0, %v755
        %v757 = vpop.f32.mrb[0].mxu0
        %v758 = vadd.f32 0.0, %v757
        %v759 = vpop.f32.mrb[0].mxu0
        %v760 = vpop.f32.mrb[0].mxu0
        %761 = vdwg.mxu0
        %762 = vmatprep.subr.bf16.mxu0 %v590
        %763 = vmatpush1.bf16.msra.mxu0 %v589
        %764 = vmatprep.subr.bf16.mxu0 %v637
        %765 = vmatpush1.bf16.msra.mxu0 %v634
        %766 = vmatprep.subr.bf16.mxu0 0
        %767 = vmatpush1.bf16.msra.mxu0 0
        %768 = vmatprep.subr.bf16.mxu0 0
        %769 = vmatpush1.bf16.msra.mxu0 0
        %770 = vmatprep.subr.bf16.mxu0 0
        %771 = vmatpush1.bf16.msra.mxu0 0
        %772 = vmatprep.subr.bf16.mxu0 0
        %773 = vmatpush1.bf16.msra.mxu0 0
        %774 = vmatprep.subr.bf16.mxu0 0
        %775 = vmatpush1.bf16.msra.mxu0 0
        %776 = vmatprep.subr.bf16.mxu0 0
        %777 = vmatpush1.bf16.msra.mxu0 0
        %778 = vmatprep.subr.bf16.mxu0 0
        %779 = vmatpush1.bf16.msra.mxu0 0
        %780 = vmatprep.subr.bf16.mxu0 0
        %781 = vmatpush1.bf16.msra.mxu0 0
        %782 = vmatprep.subr.bf16.mxu0 0
        %783 = vmatpush1.bf16.msra.mxu0 0
        %784 = vmatprep.subr.bf16.mxu0 0
        %785 = vmatpush1.bf16.msra.mxu0 0
        %786 = vmatprep.subr.bf16.mxu0 0
        %787 = vmatpush1.bf16.msra.mxu0 0
        %788 = vmatprep.subr.bf16.mxu0 0
        %789 = vmatpush1.bf16.msra.mxu0 0
        %790 = vmatprep.subr.bf16.mxu0 0
        %791 = vmatpush1.bf16.msra.mxu0 0
        %792 = vmatprep.subr.bf16.mxu0 0
        %793 = vmatpush1.bf16.msra.mxu0 0
        %794 = vmatprep.mubr.bf16.mxu0 0
        %795 = vmatmul.mubr.bf16.gmra.mrb[0].mxu0 %v609
        %v796 = vpop.f32.mrb[0].mxu0
        %v797 = vadd.f32 0.0, %v796
        %v798 = vpop.f32.mrb[0].mxu0
        %v799 = vadd.f32 0.0, %v798
        %v800 = vpop.f32.mrb[0].mxu0
        %v801 = vpop.f32.mrb[0].mxu0
        %802 = vdwg.mxu0
        %v803 = vld [vmem:[%s454] sm:$0xff]
        %v804 = vld [vmem:[%s454 + $0x8] sm:$0xff]
        %v805 = vld [vmem:[%s454 + $0x10] sm:$0xff]
        %v806 = vld [vmem:[%s454 + $0x18] sm:$0xff]
        %v807 = vld [vmem:[%s454 + $0x20] sm:$0xff]
        %v808 = vld [vmem:[%s454 + $0x28] sm:$0xff]
        %v809 = vld [vmem:[%s454 + $0x30] sm:$0xff]
        %v810 = vld [vmem:[%s454 + $0x38] sm:$0xff]
        %v811 = vld [vmem:[%s454 + $0x40] sm:$0xff]
        %v812 = vld [vmem:[%s454 + $0x48] sm:$0xff]
        %v813 = vld [vmem:[%s454 + $0x50] sm:$0xff]
        %v814 = vld [vmem:[%s454 + $0x58] sm:$0xff]
        %v815 = vld [vmem:[%s454 + $0x60] sm:$0x11]
        %v816 = vld [vmem:[%s454 + $0x68] sm:$0x11]
        %v817 = vld [vmem:[%s454 + $0x70] sm:$0x11]
        %v818 = vld [vmem:[%s454 + $0x78] sm:$0x11]
        %v835 = vunpack.c.l.b16 %v803
        %v836 = vunpack.c.h.b16 %v803
        %v837 = vunpack.c.l.b16 %v804
        %v838 = vunpack.c.h.b16 %v804
        %v839 = vunpack.c.l.b16 %v805
        %v840 = vunpack.c.h.b16 %v805
        %v841 = vunpack.c.l.b16 %v806
        %v842 = vunpack.c.h.b16 %v806
        %v843 = vunpack.c.l.b16 %v807
        %v844 = vunpack.c.h.b16 %v807
        %v845 = vunpack.c.l.b16 %v808
        %v846 = vunpack.c.h.b16 %v808
        %v847 = vunpack.c.l.b16 %v809
        %v848 = vunpack.c.h.b16 %v809
        %v849 = vunpack.c.l.b16 %v810
        %v850 = vunpack.c.h.b16 %v810
        %v851 = vunpack.c.l.b16 %v811
        %v852 = vunpack.c.h.b16 %v811
        %v853 = vunpack.c.l.b16 %v812
        %v854 = vunpack.c.h.b16 %v812
        %v855 = vunpack.c.l.b16 %v813
        %v856 = vunpack.c.h.b16 %v813
        %v857 = vunpack.c.l.b16 %v814
        %v858 = vunpack.c.h.b16 %v814
        %v859 = vunpack.c.l.b16 %v815
        %v860 = vunpack.c.h.b16 %v815
        %v861 = vunpack.c.l.b16 %v816
        %v862 = vunpack.c.h.b16 %v816
        %v863 = vunpack.c.l.b16 %v817
        %v864 = vunpack.c.h.b16 %v817
        %v865 = vunpack.c.l.b16 %v818
        %v866 = vunpack.c.h.b16 %v818
        %v867 = vpack.c.b16 %v843, %v835
        %v868 = vpack.c.b16 %v844, %v836
        %v869 = vpack.c.b16 %v845, %v837
        %v870 = vpack.c.b16 %v846, %v838
        %v871 = vpack.c.b16 %v847, %v839
        %v872 = vpack.c.b16 %v848, %v840
        %v873 = vpack.c.b16 %v849, %v841
        %v874 = vpack.c.b16 %v850, %v842
        %v875 = vpack.c.b16 %v859, %v851
        %v876 = vpack.c.b16 %v860, %v852
        %v877 = vpack.c.b16 %v861, %v853
        %v878 = vpack.c.b16 %v862, %v854
        %v879 = vpack.c.b16 %v863, %v855
        %v880 = vpack.c.b16 %v864, %v856
        %v881 = vpack.c.b16 %v865, %v857
        %v882 = vpack.c.b16 %v866, %v858
        %v892 = vand.u32 %v875, %v614
        %v895 = vand.u32 %v876, %v614
        %v898 = vand.u32 %v877, %v614
        %v901 = vand.u32 %v878, %v614
        %v904 = vand.u32 %v879, %v614
        %v907 = vand.u32 %v880, %v614
        %v910 = vand.u32 %v881, %v614
        %v913 = vand.u32 %v882, %v614
        %915 = vmatprep.subr.bf16.mxu0 %v868
        %916 = vmatpush1.bf16.msra.mxu0 %v867
        %917 = vmatprep.subr.bf16.mxu0 %v895
        %918 = vmatpush1.bf16.msra.mxu0 %v892
        %919 = vmatprep.subr.bf16.mxu0 0
        %920 = vmatpush1.bf16.msra.mxu0 0
        %921 = vmatprep.subr.bf16.mxu0 0
        %922 = vmatpush1.bf16.msra.mxu0 0
        %923 = vmatprep.subr.bf16.mxu0 0
        %924 = vmatpush1.bf16.msra.mxu0 0
        %925 = vmatprep.subr.bf16.mxu0 0
        %926 = vmatpush1.bf16.msra.mxu0 0
        %927 = vmatprep.subr.bf16.mxu0 0
        %928 = vmatpush1.bf16.msra.mxu0 0
        %929 = vmatprep.subr.bf16.mxu0 0
        %930 = vmatpush1.bf16.msra.mxu0 0
        %931 = vmatprep.subr.bf16.mxu0 0
        %932 = vmatpush1.bf16.msra.mxu0 0
        %933 = vmatprep.subr.bf16.mxu0 0
        %934 = vmatpush1.bf16.msra.mxu0 0
        %935 = vmatprep.subr.bf16.mxu0 0
        %936 = vmatpush1.bf16.msra.mxu0 0
        %937 = vmatprep.subr.bf16.mxu0 0
        %938 = vmatpush1.bf16.msra.mxu0 0
        %939 = vmatprep.subr.bf16.mxu0 0
        %940 = vmatpush1.bf16.msra.mxu0 0
        %941 = vmatprep.subr.bf16.mxu0 0
        %942 = vmatpush1.bf16.msra.mxu0 0
        %943 = vmatprep.subr.bf16.mxu0 0
        %944 = vmatpush1.bf16.msra.mxu0 0
        %945 = vmatprep.subr.bf16.mxu0 0
        %946 = vmatpush1.bf16.msra.mxu0 0
        %947 = vmatprep.mubr.bf16.mxu0 0
        %948 = vmatmul.mubr.bf16.gmra.mrb[0].mxu0 %v609
        %v949 = vpop.f32.mrb[0].mxu0
        %v950 = vadd.f32 0.0, %v949
        %v951 = vpop.f32.mrb[0].mxu0
        %v952 = vadd.f32 0.0, %v951
        %v953 = vpop.f32.mrb[0].mxu0
        %v954 = vpop.f32.mrb[0].mxu0
        %955 = vdwg.mxu0
        %956 = vmatprep.subr.bf16.mxu0 %v870
        %957 = vmatpush1.bf16.msra.mxu0 %v869
        %958 = vmatprep.subr.bf16.mxu0 %v901
        %959 = vmatpush1.bf16.msra.mxu0 %v898
        %960 = vmatprep.subr.bf16.mxu0 0
        %961 = vmatpush1.bf16.msra.mxu0 0
        %962 = vmatprep.subr.bf16.mxu0 0
        %963 = vmatpush1.bf16.msra.mxu0 0
        %964 = vmatprep.subr.bf16.mxu0 0
        %965 = vmatpush1.bf16.msra.mxu0 0
        %966 = vmatprep.subr.bf16.mxu0 0
        %967 = vmatpush1.bf16.msra.mxu0 0
        %968 = vmatprep.subr.bf16.mxu0 0
        %969 = vmatpush1.bf16.msra.mxu0 0
        %970 = vmatprep.subr.bf16.mxu0 0
        %971 = vmatpush1.bf16.msra.mxu0 0
        %972 = vmatprep.subr.bf16.mxu0 0
        %973 = vmatpush1.bf16.msra.mxu0 0
        %974 = vmatprep.subr.bf16.mxu0 0
        %975 = vmatpush1.bf16.msra.mxu0 0
        %976 = vmatprep.subr.bf16.mxu0 0
        %977 = vmatpush1.bf16.msra.mxu0 0
        %978 = vmatprep.subr.bf16.mxu0 0
        %979 = vmatpush1.bf16.msra.mxu0 0
        %980 = vmatprep.subr.bf16.mxu0 0
        %981 = vmatpush1.bf16.msra.mxu0 0
        %982 = vmatprep.subr.bf16.mxu0 0
        %983 = vmatpush1.bf16.msra.mxu0 0
        %984 = vmatprep.subr.bf16.mxu0 0
        %985 = vmatpush1.bf16.msra.mxu0 0
        %986 = vmatprep.subr.bf16.mxu0 0
        %987 = vmatpush1.bf16.msra.mxu0 0
        %988 = vmatprep.mubr.bf16.mxu0 0
        %989 = vmatmul.mubr.bf16.gmra.mrb[0].mxu0 %v609
        %v990 = vpop.f32.mrb[0].mxu0
        %v991 = vadd.f32 0.0, %v990
        %v992 = vpop.f32.mrb[0].mxu0
        %v993 = vadd.f32 0.0, %v992
        %v994 = vpop.f32.mrb[0].mxu0
        %v995 = vpop.f32.mrb[0].mxu0
        %996 = vdwg.mxu0
        %997 = vmatprep.subr.bf16.mxu0 %v872
        %998 = vmatpush1.bf16.msra.mxu0 %v871
        %999 = vmatprep.subr.bf16.mxu0 %v907
        %1000 = vmatpush1.bf16.msra.mxu0 %v904
        %1001 = vmatprep.subr.bf16.mxu0 0
        %1002 = vmatpush1.bf16.msra.mxu0 0
        %1003 = vmatprep.subr.bf16.mxu0 0
        %1004 = vmatpush1.bf16.msra.mxu0 0
        %1005 = vmatprep.subr.bf16.mxu0 0
        %1006 = vmatpush1.bf16.msra.mxu0 0
        %1007 = vmatprep.subr.bf16.mxu0 0
        %1008 = vmatpush1.bf16.msra.mxu0 0
        %1009 = vmatprep.subr.bf16.mxu0 0
        %1010 = vmatpush1.bf16.msra.mxu0 0
        %1011 = vmatprep.subr.bf16.mxu0 0
        %1012 = vmatpush1.bf16.msra.mxu0 0
        %1013 = vmatprep.subr.bf16.mxu0 0
        %1014 = vmatpush1.bf16.msra.mxu0 0
        %1015 = vmatprep.subr.bf16.mxu0 0
        %1016 = vmatpush1.bf16.msra.mxu0 0
        %1017 = vmatprep.subr.bf16.mxu0 0
        %1018 = vmatpush1.bf16.msra.mxu0 0
        %1019 = vmatprep.subr.bf16.mxu0 0
        %1020 = vmatpush1.bf16.msra.mxu0 0
        %1021 = vmatprep.subr.bf16.mxu0 0
        %1022 = vmatpush1.bf16.msra.mxu0 0
        %1023 = vmatprep.subr.bf16.mxu0 0
        %1024 = vmatpush1.bf16.msra.mxu0 0
        %1025 = vmatprep.subr.bf16.mxu0 0
        %1026 = vmatpush1.bf16.msra.mxu0 0
        %1027 = vmatprep.subr.bf16.mxu0 0
        %1028 = vmatpush1.bf16.msra.mxu0 0
        %1029 = vmatprep.mubr.bf16.mxu0 0
        %1030 = vmatmul.mubr.bf16.gmra.mrb[0].mxu0 %v609
        %v1031 = vpop.f32.mrb[0].mxu0
        %v1032 = vadd.f32 0.0, %v1031
        %v1033 = vpop.f32.mrb[0].mxu0
        %v1034 = vadd.f32 0.0, %v1033
        %v1035 = vpop.f32.mrb[0].mxu0
        %v1036 = vpop.f32.mrb[0].mxu0
        %1037 = vdwg.mxu0
        %1038 = vmatprep.subr.bf16.mxu0 %v874
        %1039 = vmatpush1.bf16.msra.mxu0 %v873
        %1040 = vmatprep.subr.bf16.mxu0 %v913
        %1041 = vmatpush1.bf16.msra.mxu0 %v910
        %1042 = vmatprep.subr.bf16.mxu0 0
        %1043 = vmatpush1.bf16.msra.mxu0 0
        %1044 = vmatprep.subr.bf16.mxu0 0
        %1045 = vmatpush1.bf16.msra.mxu0 0
        %1046 = vmatprep.subr.bf16.mxu0 0
        %1047 = vmatpush1.bf16.msra.mxu0 0
        %1048 = vmatprep.subr.bf16.mxu0 0
        %1049 = vmatpush1.bf16.msra.mxu0 0
        %1050 = vmatprep.subr.bf16.mxu0 0
        %1051 = vmatpush1.bf16.msra.mxu0 0
        %1052 = vmatprep.subr.bf16.mxu0 0
        %1053 = vmatpush1.bf16.msra.mxu0 0
        %1054 = vmatprep.subr.bf16.mxu0 0
        %1055 = vmatpush1.bf16.msra.mxu0 0
        %1056 = vmatprep.subr.bf16.mxu0 0
        %1057 = vmatpush1.bf16.msra.mxu0 0
        %1058 = vmatprep.subr.bf16.mxu0 0
        %1059 = vmatpush1.bf16.msra.mxu0 0
        %1060 = vmatprep.subr.bf16.mxu0 0
        %1061 = vmatpush1.bf16.msra.mxu0 0
        %1062 = vmatprep.subr.bf16.mxu0 0
        %1063 = vmatpush1.bf16.msra.mxu0 0
        %1064 = vmatprep.subr.bf16.mxu0 0
        %1065 = vmatpush1.bf16.msra.mxu0 0
        %1066 = vmatprep.subr.bf16.mxu0 0
        %1067 = vmatpush1.bf16.msra.mxu0 0
        %1068 = vmatprep.subr.bf16.mxu0 0
        %1069 = vmatpush1.bf16.msra.mxu0 0
        %1070 = vmatprep.mubr.bf16.mxu0 0
        %1071 = vmatmul.mubr.bf16.gmra.mrb[0].mxu0 %v609
        %v1072 = vpop.f32.mrb[0].mxu0
        %v1073 = vadd.f32 0.0, %v1072
        %v1074 = vpop.f32.mrb[0].mxu0
        %v1075 = vadd.f32 0.0, %v1074
        %v1076 = vpop.f32.mrb[0].mxu0
        %v1077 = vpop.f32.mrb[0].mxu0
        %1078 = vdwg.mxu0
        %v1079 = vld [vmem:[%s461] sm:$0xff]
        %v1080 = vld [vmem:[%s461 + $0x8] sm:$0xff]
        %v1081 = vld [vmem:[%s461 + $0x10] sm:$0xff]
        %v1082 = vld [vmem:[%s461 + $0x18] sm:$0xff]
        %v1083 = vld [vmem:[%s461 + $0x20] sm:$0xff]
        %v1084 = vld [vmem:[%s461 + $0x28] sm:$0xff]
        %v1085 = vld [vmem:[%s461 + $0x30] sm:$0xff]
        %v1086 = vld [vmem:[%s461 + $0x38] sm:$0xff]
        %v1087 = vld [vmem:[%s461 + $0x40] sm:$0xff]
        %v1088 = vld [vmem:[%s461 + $0x48] sm:$0xff]
        %v1089 = vld [vmem:[%s461 + $0x50] sm:$0xff]
        %v1090 = vld [vmem:[%s461 + $0x58] sm:$0xff]
        %v1091 = vld [vmem:[%s461 + $0x60] sm:$0x11]
        %v1092 = vld [vmem:[%s461 + $0x68] sm:$0x11]
        %v1093 = vld [vmem:[%s461 + $0x70] sm:$0x11]
        %v1094 = vld [vmem:[%s461 + $0x78] sm:$0x11]
        %v1111 = vunpack.c.l.b16 %v1079
        %v1112 = vunpack.c.h.b16 %v1079
        %v1113 = vunpack.c.l.b16 %v1080
        %v1114 = vunpack.c.h.b16 %v1080
        %v1115 = vunpack.c.l.b16 %v1081
        %v1116 = vunpack.c.h.b16 %v1081
        %v1117 = vunpack.c.l.b16 %v1082
        %v1118 = vunpack.c.h.b16 %v1082
        %v1119 = vunpack.c.l.b16 %v1083
        %v1120 = vunpack.c.h.b16 %v1083
        %v1121 = vunpack.c.l.b16 %v1084
        %v1122 = vunpack.c.h.b16 %v1084
        %v1123 = vunpack.c.l.b16 %v1085
        %v1124 = vunpack.c.h.b16 %v1085
        %v1125 = vunpack.c.l.b16 %v1086
        %v1126 = vunpack.c.h.b16 %v1086
        %v1127 = vunpack.c.l.b16 %v1087
        %v1128 = vunpack.c.h.b16 %v1087
        %v1129 = vunpack.c.l.b16 %v1088
        %v1130 = vunpack.c.h.b16 %v1088
        %v1131 = vunpack.c.l.b16 %v1089
        %v1132 = vunpack.c.h.b16 %v1089
        %v1133 = vunpack.c.l.b16 %v1090
        %v1134 = vunpack.c.h.b16 %v1090
        %v1135 = vunpack.c.l.b16 %v1091
        %v1136 = vunpack.c.h.b16 %v1091
        %v1137 = vunpack.c.l.b16 %v1092
        %v1138 = vunpack.c.h.b16 %v1092
        %v1139 = vunpack.c.l.b16 %v1093
        %v1140 = vunpack.c.h.b16 %v1093
        %v1141 = vunpack.c.l.b16 %v1094
        %v1142 = vunpack.c.h.b16 %v1094
        %v1143 = vpack.c.b16 %v1119, %v1111
        %v1144 = vpack.c.b16 %v1120, %v1112
        %v1145 = vpack.c.b16 %v1121, %v1113
        %v1146 = vpack.c.b16 %v1122, %v1114
        %v1147 = vpack.c.b16 %v1123, %v1115
        %v1148 = vpack.c.b16 %v1124, %v1116
        %v1149 = vpack.c.b16 %v1125, %v1117
        %v1150 = vpack.c.b16 %v1126, %v1118
        %v1151 = vpack.c.b16 %v1135, %v1127
        %v1152 = vpack.c.b16 %v1136, %v1128
        %v1153 = vpack.c.b16 %v1137, %v1129
        %v1154 = vpack.c.b16 %v1138, %v1130
        %v1155 = vpack.c.b16 %v1139, %v1131
        %v1156 = vpack.c.b16 %v1140, %v1132
        %v1157 = vpack.c.b16 %v1141, %v1133
        %v1158 = vpack.c.b16 %v1142, %v1134
        %v1168 = vand.u32 %v1151, %v614
        %v1171 = vand.u32 %v1152, %v614
        %v1174 = vand.u32 %v1153, %v614
        %v1177 = vand.u32 %v1154, %v614
        %v1180 = vand.u32 %v1155, %v614
        %v1183 = vand.u32 %v1156, %v614
        %v1186 = vand.u32 %v1157, %v614
        %v1189 = vand.u32 %v1158, %v614
        %1191 = vmatprep.subr.bf16.mxu0 %v1144
        %1192 = vmatpush1.bf16.msra.mxu0 %v1143
        %1193 = vmatprep.subr.bf16.mxu0 %v1171
        %1194 = vmatpush1.bf16.msra.mxu0 %v1168
        %1195 = vmatprep.subr.bf16.mxu0 0
        %1196 = vmatpush1.bf16.msra.mxu0 0
        %1197 = vmatprep.subr.bf16.mxu0 0
        %1198 = vmatpush1.bf16.msra.mxu0 0
        %1199 = vmatprep.subr.bf16.mxu0 0
        %1200 = vmatpush1.bf16.msra.mxu0 0
        %1201 = vmatprep.subr.bf16.mxu0 0
        %1202 = vmatpush1.bf16.msra.mxu0 0
        %1203 = vmatprep.subr.bf16.mxu0 0
        %1204 = vmatpush1.bf16.msra.mxu0 0
        %1205 = vmatprep.subr.bf16.mxu0 0
        %1206 = vmatpush1.bf16.msra.mxu0 0
        %1207 = vmatprep.subr.bf16.mxu0 0
        %1208 = vmatpush1.bf16.msra.mxu0 0
        %1209 = vmatprep.subr.bf16.mxu0 0
        %1210 = vmatpush1.bf16.msra.mxu0 0
        %1211 = vmatprep.subr.bf16.mxu0 0
        %1212 = vmatpush1.bf16.msra.mxu0 0
        %1213 = vmatprep.subr.bf16.mxu0 0
        %1214 = vmatpush1.bf16.msra.mxu0 0
        %1215 = vmatprep.subr.bf16.mxu0 0
        %1216 = vmatpush1.bf16.msra.mxu0 0
        %1217 = vmatprep.subr.bf16.mxu0 0
        %1218 = vmatpush1.bf16.msra.mxu0 0
        %1219 = vmatprep.subr.bf16.mxu0 0
        %1220 = vmatpush1.bf16.msra.mxu0 0
        %1221 = vmatprep.subr.bf16.mxu0 0
        %1222 = vmatpush1.bf16.msra.mxu0 0
        %1223 = vmatprep.mubr.bf16.mxu0 0
        %1224 = vmatmul.mubr.bf16.gmra.mrb[0].mxu0 %v609
        %v1225 = vpop.f32.mrb[0].mxu0
        %v1226 = vadd.f32 0.0, %v1225
        %v1227 = vpop.f32.mrb[0].mxu0
        %v1228 = vadd.f32 0.0, %v1227
        %v1229 = vpop.f32.mrb[0].mxu0
        %v1230 = vpop.f32.mrb[0].mxu0
        %1231 = vdwg.mxu0
        %1232 = vmatprep.subr.bf16.mxu0 %v1146
        %1233 = vmatpush1.bf16.msra.mxu0 %v1145
        %1234 = vmatprep.subr.bf16.mxu0 %v1177
        %1235 = vmatpush1.bf16.msra.mxu0 %v1174
        %1236 = vmatprep.subr.bf16.mxu0 0
        %1237 = vmatpush1.bf16.msra.mxu0 0
        %1238 = vmatprep.subr.bf16.mxu0 0
        %1239 = vmatpush1.bf16.msra.mxu0 0
        %1240 = vmatprep.subr.bf16.mxu0 0
        %1241 = vmatpush1.bf16.msra.mxu0 0
        %1242 = vmatprep.subr.bf16.mxu0 0
        %1243 = vmatpush1.bf16.msra.mxu0 0
        %1244 = vmatprep.subr.bf16.mxu0 0
        %1245 = vmatpush1.bf16.msra.mxu0 0
        %1246 = vmatprep.subr.bf16.mxu0 0
        %1247 = vmatpush1.bf16.msra.mxu0 0
        %1248 = vmatprep.subr.bf16.mxu0 0
        %1249 = vmatpush1.bf16.msra.mxu0 0
        %1250 = vmatprep.subr.bf16.mxu0 0
        %1251 = vmatpush1.bf16.msra.mxu0 0
        %1252 = vmatprep.subr.bf16.mxu0 0
        %1253 = vmatpush1.bf16.msra.mxu0 0
        %1254 = vmatprep.subr.bf16.mxu0 0
        %1255 = vmatpush1.bf16.msra.mxu0 0
        %1256 = vmatprep.subr.bf16.mxu0 0
        %1257 = vmatpush1.bf16.msra.mxu0 0
        %1258 = vmatprep.subr.bf16.mxu0 0
        %1259 = vmatpush1.bf16.msra.mxu0 0
        %1260 = vmatprep.subr.bf16.mxu0 0
        %1261 = vmatpush1.bf16.msra.mxu0 0
        %1262 = vmatprep.subr.bf16.mxu0 0
        %1263 = vmatpush1.bf16.msra.mxu0 0
        %1264 = vmatprep.mubr.bf16.mxu0 0
        %1265 = vmatmul.mubr.bf16.gmra.mrb[0].mxu0 %v609
        %v1266 = vpop.f32.mrb[0].mxu0
        %v1267 = vadd.f32 0.0, %v1266
        %v1268 = vpop.f32.mrb[0].mxu0
        %v1269 = vadd.f32 0.0, %v1268
        %v1270 = vpop.f32.mrb[0].mxu0
        %v1271 = vpop.f32.mrb[0].mxu0
        %1272 = vdwg.mxu0
        %1273 = vmatprep.subr.bf16.mxu0 %v1148
        %1274 = vmatpush1.bf16.msra.mxu0 %v1147
        %1275 = vmatprep.subr.bf16.mxu0 %v1183
        %1276 = vmatpush1.bf16.msra.mxu0 %v1180
        %1277 = vmatprep.subr.bf16.mxu0 0
        %1278 = vmatpush1.bf16.msra.mxu0 0
        %1279 = vmatprep.subr.bf16.mxu0 0
        %1280 = vmatpush1.bf16.msra.mxu0 0
        %1281 = vmatprep.subr.bf16.mxu0 0
        %1282 = vmatpush1.bf16.msra.mxu0 0
        %1283 = vmatprep.subr.bf16.mxu0 0
        %1284 = vmatpush1.bf16.msra.mxu0 0
        %1285 = vmatprep.subr.bf16.mxu0 0
        %1286 = vmatpush1.bf16.msra.mxu0 0
        %1287 = vmatprep.subr.bf16.mxu0 0
        %1288 = vmatpush1.bf16.msra.mxu0 0
        %1289 = vmatprep.subr.bf16.mxu0 0
        %1290 = vmatpush1.bf16.msra.mxu0 0
        %1291 = vmatprep.subr.bf16.mxu0 0
        %1292 = vmatpush1.bf16.msra.mxu0 0
        %1293 = vmatprep.subr.bf16.mxu0 0
        %1294 = vmatpush1.bf16.msra.mxu0 0
        %1295 = vmatprep.subr.bf16.mxu0 0
        %1296 = vmatpush1.bf16.msra.mxu0 0
        %1297 = vmatprep.subr.bf16.mxu0 0
        %1298 = vmatpush1.bf16.msra.mxu0 0
        %1299 = vmatprep.subr.bf16.mxu0 0
        %1300 = vmatpush1.bf16.msra.mxu0 0
        %1301 = vmatprep.subr.bf16.mxu0 0
        %1302 = vmatpush1.bf16.msra.mxu0 0
        %1303 = vmatprep.subr.bf16.mxu0 0
        %1304 = vmatpush1.bf16.msra.mxu0 0
        %1305 = vmatprep.mubr.bf16.mxu0 0
        %1306 = vmatmul.mubr.bf16.gmra.mrb[0].mxu0 %v609
        %v1307 = vpop.f32.mrb[0].mxu0
        %v1308 = vadd.f32 0.0, %v1307
        %v1309 = vpop.f32.mrb[0].mxu0
        %v1310 = vadd.f32 0.0, %v1309
        %v1311 = vpop.f32.mrb[0].mxu0
        %v1312 = vpop.f32.mrb[0].mxu0
        %1313 = vdwg.mxu0
        %1314 = vmatprep.subr.bf16.mxu0 %v1150
        %1315 = vmatpush1.bf16.msra.mxu0 %v1149
        %1316 = vmatprep.subr.bf16.mxu0 %v1189
        %1317 = vmatpush1.bf16.msra.mxu0 %v1186
        %1318 = vmatprep.subr.bf16.mxu0 0
        %1319 = vmatpush1.bf16.msra.mxu0 0
        %1320 = vmatprep.subr.bf16.mxu0 0
        %1321 = vmatpush1.bf16.msra.mxu0 0
        %1322 = vmatprep.subr.bf16.mxu0 0
        %1323 = vmatpush1.bf16.msra.mxu0 0
        %1324 = vmatprep.subr.bf16.mxu0 0
        %1325 = vmatpush1.bf16.msra.mxu0 0
        %1326 = vmatprep.subr.bf16.mxu0 0
        %1327 = vmatpush1.bf16.msra.mxu0 0
        %1328 = vmatprep.subr.bf16.mxu0 0
        %1329 = vmatpush1.bf16.msra.mxu0 0
        %1330 = vmatprep.subr.bf16.mxu0 0
        %1331 = vmatpush1.bf16.msra.mxu0 0
        %1332 = vmatprep.subr.bf16.mxu0 0
        %1333 = vmatpush1.bf16.msra.mxu0 0
        %1334 = vmatprep.subr.bf16.mxu0 0
        %1335 = vmatpush1.bf16.msra.mxu0 0
        %1336 = vmatprep.subr.bf16.mxu0 0
        %1337 = vmatpush1.bf16.msra.mxu0 0
        %1338 = vmatprep.subr.bf16.mxu0 0
        %1339 = vmatpush1.bf16.msra.mxu0 0
        %1340 = vmatprep.subr.bf16.mxu0 0
        %1341 = vmatpush1.bf16.msra.mxu0 0
        %1342 = vmatprep.subr.bf16.mxu0 0
        %1343 = vmatpush1.bf16.msra.mxu0 0
        %1344 = vmatprep.subr.bf16.mxu0 0
        %1345 = vmatpush1.bf16.msra.mxu0 0
        %1346 = vmatprep.mubr.bf16.mxu0 0
        %1347 = vmatmul.mubr.bf16.gmra.mrb[0].mxu0 %v609
        %v1348 = vpop.f32.mrb[0].mxu0
        %v1349 = vadd.f32 0.0, %v1348
        %v1350 = vpop.f32.mrb[0].mxu0
        %v1351 = vadd.f32 0.0, %v1350
        %v1352 = vpop.f32.mrb[0].mxu0
        %v1353 = vpop.f32.mrb[0].mxu0
        %1354 = vdwg.mxu0
        %v1355 = vld [vmem:[%s468] sm:$0xff]
        %v1356 = vld [vmem:[%s468 + $0x8] sm:$0xff]
        %v1357 = vld [vmem:[%s468 + $0x10] sm:$0xff]
        %v1358 = vld [vmem:[%s468 + $0x18] sm:$0xff]
        %v1359 = vld [vmem:[%s468 + $0x20] sm:$0xff]
        %v1360 = vld [vmem:[%s468 + $0x28] sm:$0xff]
        %v1361 = vld [vmem:[%s468 + $0x30] sm:$0xff]
        %v1362 = vld [vmem:[%s468 + $0x38] sm:$0xff]
        %v1363 = vld [vmem:[%s468 + $0x40] sm:$0xff]
        %v1364 = vld [vmem:[%s468 + $0x48] sm:$0xff]
        %v1365 = vld [vmem:[%s468 + $0x50] sm:$0xff]
        %v1366 = vld [vmem:[%s468 + $0x58] sm:$0xff]
        %v1367 = vld [vmem:[%s468 + $0x60] sm:$0x11]
        %v1368 = vld [vmem:[%s468 + $0x68] sm:$0x11]
        %v1369 = vld [vmem:[%s468 + $0x70] sm:$0x11]
        %v1370 = vld [vmem:[%s468 + $0x78] sm:$0x11]
        %v1387 = vunpack.c.l.b16 %v1355
        %v1388 = vunpack.c.h.b16 %v1355
        %v1389 = vunpack.c.l.b16 %v1356
        %v1390 = vunpack.c.h.b16 %v1356
        %v1391 = vunpack.c.l.b16 %v1357
        %v1392 = vunpack.c.h.b16 %v1357
        %v1393 = vunpack.c.l.b16 %v1358
        %v1394 = vunpack.c.h.b16 %v1358
        %v1395 = vunpack.c.l.b16 %v1359
        %v1396 = vunpack.c.h.b16 %v1359
        %v1397 = vunpack.c.l.b16 %v1360
        %v1398 = vunpack.c.h.b16 %v1360
        %v1399 = vunpack.c.l.b16 %v1361
        %v1400 = vunpack.c.h.b16 %v1361
        %v1401 = vunpack.c.l.b16 %v1362
        %v1402 = vunpack.c.h.b16 %v1362
        %v1403 = vunpack.c.l.b16 %v1363
        %v1404 = vunpack.c.h.b16 %v1363
        %v1405 = vunpack.c.l.b16 %v1364
        %v1406 = vunpack.c.h.b16 %v1364
        %v1407 = vunpack.c.l.b16 %v1365
        %v1408 = vunpack.c.h.b16 %v1365
        %v1409 = vunpack.c.l.b16 %v1366
        %v1410 = vunpack.c.h.b16 %v1366
        %v1411 = vunpack.c.l.b16 %v1367
        %v1412 = vunpack.c.h.b16 %v1367
        %v1413 = vunpack.c.l.b16 %v1368
        %v1414 = vunpack.c.h.b16 %v1368
        %v1415 = vunpack.c.l.b16 %v1369
        %v1416 = vunpack.c.h.b16 %v1369
        %v1417 = vunpack.c.l.b16 %v1370
        %v1418 = vunpack.c.h.b16 %v1370
        %v1419 = vpack.c.b16 %v1395, %v1387
        %v1420 = vpack.c.b16 %v1396, %v1388
        %v1421 = vpack.c.b16 %v1397, %v1389
        %v1422 = vpack.c.b16 %v1398, %v1390
        %v1423 = vpack.c.b16 %v1399, %v1391
        %v1424 = vpack.c.b16 %v1400, %v1392
        %v1425 = vpack.c.b16 %v1401, %v1393
        %v1426 = vpack.c.b16 %v1402, %v1394
        %v1427 = vpack.c.b16 %v1411, %v1403
        %v1428 = vpack.c.b16 %v1412, %v1404
        %v1429 = vpack.c.b16 %v1413, %v1405
        %v1430 = vpack.c.b16 %v1414, %v1406
        %v1431 = vpack.c.b16 %v1415, %v1407
        %v1432 = vpack.c.b16 %v1416, %v1408
        %v1433 = vpack.c.b16 %v1417, %v1409
        %v1434 = vpack.c.b16 %v1418, %v1410
        %v1444 = vand.u32 %v1427, %v614
        %v1447 = vand.u32 %v1428, %v614
        %v1450 = vand.u32 %v1429, %v614
        %v1453 = vand.u32 %v1430, %v614
        %v1456 = vand.u32 %v1431, %v614
        %v1459 = vand.u32 %v1432, %v614
        %v1462 = vand.u32 %v1433, %v614
        %v1465 = vand.u32 %v1434, %v614
        %1467 = vmatprep.subr.bf16.mxu0 %v1420
        %1468 = vmatpush1.bf16.msra.mxu0 %v1419
        %1469 = vmatprep.subr.bf16.mxu0 %v1447
        %1470 = vmatpush1.bf16.msra.mxu0 %v1444
        %1471 = vmatprep.subr.bf16.mxu0 0
        %1472 = vmatpush1.bf16.msra.mxu0 0
        %1473 = vmatprep.subr.bf16.mxu0 0
        %1474 = vmatpush1.bf16.msra.mxu0 0
        %1475 = vmatprep.subr.bf16.mxu0 0
        %1476 = vmatpush1.bf16.msra.mxu0 0
        %1477 = vmatprep.subr.bf16.mxu0 0
        %1478 = vmatpush1.bf16.msra.mxu0 0
        %1479 = vmatprep.subr.bf16.mxu0 0
        %1480 = vmatpush1.bf16.msra.mxu0 0
        %1481 = vmatprep.subr.bf16.mxu0 0
        %1482 = vmatpush1.bf16.msra.mxu0 0
        %1483 = vmatprep.subr.bf16.mxu0 0
        %1484 = vmatpush1.bf16.msra.mxu0 0
        %1485 = vmatprep.subr.bf16.mxu0 0
        %1486 = vmatpush1.bf16.msra.mxu0 0
        %1487 = vmatprep.subr.bf16.mxu0 0
        %1488 = vmatpush1.bf16.msra.mxu0 0
        %1489 = vmatprep.subr.bf16.mxu0 0
        %1490 = vmatpush1.bf16.msra.mxu0 0
        %1491 = vmatprep.subr.bf16.mxu0 0
        %1492 = vmatpush1.bf16.msra.mxu0 0
        %1493 = vmatprep.subr.bf16.mxu0 0
        %1494 = vmatpush1.bf16.msra.mxu0 0
        %1495 = vmatprep.subr.bf16.mxu0 0
        %1496 = vmatpush1.bf16.msra.mxu0 0
        %1497 = vmatprep.subr.bf16.mxu0 0
        %1498 = vmatpush1.bf16.msra.mxu0 0
        %1499 = vmatprep.mubr.bf16.mxu0 0
        %1500 = vmatmul.mubr.bf16.gmra.mrb[0].mxu0 %v609
        %v1501 = vpop.f32.mrb[0].mxu0
        %v1502 = vadd.f32 0.0, %v1501
        %v1503 = vpop.f32.mrb[0].mxu0
        %v1504 = vadd.f32 0.0, %v1503
        %v1505 = vpop.f32.mrb[0].mxu0
        %v1506 = vpop.f32.mrb[0].mxu0
        %1507 = vdwg.mxu0
        %1508 = vmatprep.subr.bf16.mxu0 %v1422
        %1509 = vmatpush1.bf16.msra.mxu0 %v1421
        %1510 = vmatprep.subr.bf16.mxu0 %v1453
        %1511 = vmatpush1.bf16.msra.mxu0 %v1450
        %1512 = vmatprep.subr.bf16.mxu0 0
        %1513 = vmatpush1.bf16.msra.mxu0 0
        %1514 = vmatprep.subr.bf16.mxu0 0
        %1515 = vmatpush1.bf16.msra.mxu0 0
        %1516 = vmatprep.subr.bf16.mxu0 0
        %1517 = vmatpush1.bf16.msra.mxu0 0
        %1518 = vmatprep.subr.bf16.mxu0 0
        %1519 = vmatpush1.bf16.msra.mxu0 0
        %1520 = vmatprep.subr.bf16.mxu0 0
        %1521 = vmatpush1.bf16.msra.mxu0 0
        %1522 = vmatprep.subr.bf16.mxu0 0
        %1523 = vmatpush1.bf16.msra.mxu0 0
        %1524 = vmatprep.subr.bf16.mxu0 0
        %1525 = vmatpush1.bf16.msra.mxu0 0
        %1526 = vmatprep.subr.bf16.mxu0 0
        %1527 = vmatpush1.bf16.msra.mxu0 0
        %1528 = vmatprep.subr.bf16.mxu0 0
        %1529 = vmatpush1.bf16.msra.mxu0 0
        %1530 = vmatprep.subr.bf16.mxu0 0
        %1531 = vmatpush1.bf16.msra.mxu0 0
        %1532 = vmatprep.subr.bf16.mxu0 0
        %1533 = vmatpush1.bf16.msra.mxu0 0
        %1534 = vmatprep.subr.bf16.mxu0 0
        %1535 = vmatpush1.bf16.msra.mxu0 0
        %1536 = vmatprep.subr.bf16.mxu0 0
        %1537 = vmatpush1.bf16.msra.mxu0 0
        %1538 = vmatprep.subr.bf16.mxu0 0
        %1539 = vmatpush1.bf16.msra.mxu0 0
        %1540 = vmatprep.mubr.bf16.mxu0 0
        %1541 = vmatmul.mubr.bf16.gmra.mrb[0].mxu0 %v609
        %v1542 = vpop.f32.mrb[0].mxu0
        %v1543 = vadd.f32 0.0, %v1542
        %v1544 = vpop.f32.mrb[0].mxu0
        %v1545 = vadd.f32 0.0, %v1544
        %v1546 = vpop.f32.mrb[0].mxu0
        %v1547 = vpop.f32.mrb[0].mxu0
        %1548 = vdwg.mxu0
        %1549 = vmatprep.subr.bf16.mxu0 %v1424
        %1550 = vmatpush1.bf16.msra.mxu0 %v1423
        %1551 = vmatprep.subr.bf16.mxu0 %v1459
        %1552 = vmatpush1.bf16.msra.mxu0 %v1456
        %1553 = vmatprep.subr.bf16.mxu0 0
        %1554 = vmatpush1.bf16.msra.mxu0 0
        %1555 = vmatprep.subr.bf16.mxu0 0
        %1556 = vmatpush1.bf16.msra.mxu0 0
        %1557 = vmatprep.subr.bf16.mxu0 0
        %1558 = vmatpush1.bf16.msra.mxu0 0
        %1559 = vmatprep.subr.bf16.mxu0 0
        %1560 = vmatpush1.bf16.msra.mxu0 0
        %1561 = vmatprep.subr.bf16.mxu0 0
        %1562 = vmatpush1.bf16.msra.mxu0 0
        %1563 = vmatprep.subr.bf16.mxu0 0
        %1564 = vmatpush1.bf16.msra.mxu0 0
        %1565 = vmatprep.subr.bf16.mxu0 0
        %1566 = vmatpush1.bf16.msra.mxu0 0
        %1567 = vmatprep.subr.bf16.mxu0 0
        %1568 = vmatpush1.bf16.msra.mxu0 0
        %1569 = vmatprep.subr.bf16.mxu0 0
        %1570 = vmatpush1.bf16.msra.mxu0 0
        %1571 = vmatprep.subr.bf16.mxu0 0
        %1572 = vmatpush1.bf16.msra.mxu0 0
        %1573 = vmatprep.subr.bf16.mxu0 0
        %1574 = vmatpush1.bf16.msra.mxu0 0
        %1575 = vmatprep.subr.bf16.mxu0 0
        %1576 = vmatpush1.bf16.msra.mxu0 0
        %1577 = vmatprep.subr.bf16.mxu0 0
        %1578 = vmatpush1.bf16.msra.mxu0 0
        %1579 = vmatprep.subr.bf16.mxu0 0
        %1580 = vmatpush1.bf16.msra.mxu0 0
        %1581 = vmatprep.mubr.bf16.mxu0 0
        %1582 = vmatmul.mubr.bf16.gmra.mrb[0].mxu0 %v609
        %v1583 = vpop.f32.mrb[0].mxu0
        %v1584 = vadd.f32 0.0, %v1583
        %v1585 = vpop.f32.mrb[0].mxu0
        %v1586 = vadd.f32 0.0, %v1585
        %v1587 = vpop.f32.mrb[0].mxu0
        %v1588 = vpop.f32.mrb[0].mxu0
        %1589 = vdwg.mxu0
        %1590 = vmatprep.subr.bf16.mxu0 %v1426
        %1591 = vmatpush1.bf16.msra.mxu0 %v1425
        %1592 = vmatprep.subr.bf16.mxu0 %v1465
        %1593 = vmatpush1.bf16.msra.mxu0 %v1462
        %1594 = vmatprep.subr.bf16.mxu0 0
        %1595 = vmatpush1.bf16.msra.mxu0 0
        %1596 = vmatprep.subr.bf16.mxu0 0
        %1597 = vmatpush1.bf16.msra.mxu0 0
        %1598 = vmatprep.subr.bf16.mxu0 0
        %1599 = vmatpush1.bf16.msra.mxu0 0
        %1600 = vmatprep.subr.bf16.mxu0 0
        %1601 = vmatpush1.bf16.msra.mxu0 0
        %1602 = vmatprep.subr.bf16.mxu0 0
        %1603 = vmatpush1.bf16.msra.mxu0 0
        %1604 = vmatprep.subr.bf16.mxu0 0
        %1605 = vmatpush1.bf16.msra.mxu0 0
        %1606 = vmatprep.subr.bf16.mxu0 0
        %1607 = vmatpush1.bf16.msra.mxu0 0
        %1608 = vmatprep.subr.bf16.mxu0 0
        %1609 = vmatpush1.bf16.msra.mxu0 0
        %1610 = vmatprep.subr.bf16.mxu0 0
        %1611 = vmatpush1.bf16.msra.mxu0 0
        %1612 = vmatprep.subr.bf16.mxu0 0
        %1613 = vmatpush1.bf16.msra.mxu0 0
        %1614 = vmatprep.subr.bf16.mxu0 0
        %1615 = vmatpush1.bf16.msra.mxu0 0
        %1616 = vmatprep.subr.bf16.mxu0 0
        %1617 = vmatpush1.bf16.msra.mxu0 0
        %1618 = vmatprep.subr.bf16.mxu0 0
        %1619 = vmatpush1.bf16.msra.mxu0 0
        %1620 = vmatprep.subr.bf16.mxu0 0
        %1621 = vmatpush1.bf16.msra.mxu0 0
        %1622 = vmatprep.mubr.bf16.mxu0 0
        %1623 = vmatmul.mubr.bf16.gmra.mrb[0].mxu0 %v609
        %v1624 = vpop.f32.mrb[0].mxu0
        %v1625 = vadd.f32 0.0, %v1624
        %v1626 = vpop.f32.mrb[0].mxu0
        %v1627 = vadd.f32 0.0, %v1626
        %v1628 = vpop.f32.mrb[0].mxu0
        %v1629 = vpop.f32.mrb[0].mxu0
        %1630 = vdwg.mxu0
        %v1631 = vmax.f32 %v674, %v950
        %v1632 = vmax.f32 %v676, %v952
        %v1633 = vmax.f32 %v715, %v991
        %v1634 = vmax.f32 %v717, %v993
        %v1635 = vmax.f32 %v756, %v1032
        %v1636 = vmax.f32 %v758, %v1034
        %v1637 = vmax.f32 %v797, %v1073
        %v1638 = vmax.f32 %v799, %v1075
        %v1639 = vmax.f32 %v1226, %v1502
        %v1640 = vmax.f32 %v1228, %v1504
        %v1641 = vmax.f32 %v1267, %v1543
        %v1642 = vmax.f32 %v1269, %v1545
        %v1643 = vmax.f32 %v1308, %v1584
        %v1644 = vmax.f32 %v1310, %v1586
        %v1645 = vmax.f32 %v1349, %v1625
        %v1646 = vmax.f32 %v1351, %v1627
        %v1647 = vmax.f32 %v1631, %v1639
        %v1648 = vmax.f32 %v1632, %v1640
        %v1649 = vmax.f32 %v1633, %v1641
        %v1650 = vmax.f32 %v1634, %v1642
        %v1651 = vmax.f32 %v1635, %v1643
        %v1652 = vmax.f32 %v1636, %v1644
        %v1653 = vmax.f32 %v1637, %v1645
        %v1654 = vmax.f32 %v1638, %v1646
        %v1655 = vld [vmem:[%s1] sm:$0x3f]
        %1657 = vset.pattern.permute.xlu0 0
        %1658 = vperm.xlu0 %1657, %v1655
        %v1659 = vpop.permute.xlu0 %1658
        %v1661 = vadd.f32 %v1647, %v1659
        %v1662 = vadd.f32 %v1648, %v1659
        %v1663 = vadd.f32 %v1649, %v1659
        %v1664 = vadd.f32 %v1650, %v1659
        %v1665 = vadd.f32 %v1651, %v1659
        %v1666 = vadd.f32 %v1652, %v1659
        %v1667 = vadd.f32 %v1653, %v1659
        %v1668 = vadd.f32 %v1654, %v1659
        %v1669 = vmax.f32 %v1661, 0.0
        %v1670 = vmax.f32 %v1662, 0.0
        %v1671 = vmax.f32 %v1663, 0.0
        %v1672 = vmax.f32 %v1664, 0.0
        %v1673 = vmax.f32 %v1665, 0.0
        %v1674 = vmax.f32 %v1666, 0.0
        %v1675 = vmax.f32 %v1667, 0.0
        %v1676 = vmax.f32 %v1668, 0.0
        %v1677 = vpack.c.bf16 %v1669, %v1669
        %v1678 = vpack.c.bf16 %v1670, %v1670
        %v1679 = vpack.c.bf16 %v1671, %v1671
        %v1680 = vpack.c.bf16 %v1672, %v1672
        %v1681 = vpack.c.bf16 %v1673, %v1673
        %v1682 = vpack.c.bf16 %v1674, %v1674
        %v1683 = vpack.c.bf16 %v1675, %v1675
        %v1684 = vpack.c.bf16 %v1676, %v1676
        %v1693 = vunpack.c.l.b16 %v1677
        %v1694 = vunpack.c.l.b16 %v1678
        %v1695 = vunpack.c.l.b16 %v1679
        %v1696 = vunpack.c.l.b16 %v1680
        %v1697 = vunpack.c.l.b16 %v1681
        %v1698 = vunpack.c.l.b16 %v1682
        %v1699 = vunpack.c.l.b16 %v1683
        %v1700 = vunpack.c.l.b16 %v1684
        %v1701 = vpack.c.b16 %v1694, %v1693
        %v1702 = vpack.c.b16 %v1696, %v1695
        %v1703 = vpack.c.b16 %v1698, %v1697
        %v1704 = vpack.c.b16 %v1700, %v1699
        %1709 = vst [vmem:[%s515] sm:$0x77] %v1701
        %1710 = vst [vmem:[%s515 + $0x8] sm:$0x77] %v1702
        %1711 = vst [vmem:[%s515 + $0x10] sm:$0x77] %v1703
        %1712 = vst [vmem:[%s515 + $0x18] sm:$0x77] %v1704
        %s1713 = smul.u32 8, %s17
        %p1714 = scmp.lt.s32.totalorder %s1713, 15
        %s1715 = scalar_select %p1714, %s1713, 15
        %s1716 = smul.addr %s1715, 4
        %s1717 = scalar_lea.vmem %s6, %s1716
        // Predicated region
        $region137: #{cnn_cifar10_forward.3} parent=119 // pred_check
          %p1718 = pneg %p181
        $region138: #{cnn_cifar10_forward.3} parent=119 // pred_check_branch
          %1720 = sbr.rel (%p1718) target = $region140
        $region139: #{cnn_cifar10_forward.3} parent=119 // pred_region
          %s1721 = smul.u32 8, %s17
        $region140: #{cnn_cifar10_forward.3} parent=119 // pred_fallthru
          _
      $region120: #{cnn_cifar10_forward.3} parent=5 // pred_fallthru
        _
      %p1722 = scmp.le.s32.totalorder 2, %s12
      // Predicated region
      $region141: #{cnn_cifar10_forward.3} parent=5 // pred_check
        %p1723 = pneg %p1722
      $region142: #{cnn_cifar10_forward.3} parent=5 // pred_check_branch
        %1725 = sbr.rel (%p1723) target = $region144
      $region143: #{cnn_cifar10_forward.3} parent=5 // pred_region
        %s1726 = ssub.s32 %s12, 2
        // Predicated region
        $region145: #{cnn_cifar10_forward.3} parent=143 // pred_check
          %p1727 = pneg %p187
        $region146: #{cnn_cifar10_forward.3} parent=143 // pred_check_branch
          %1729 = sbr.rel (%p1727) target = $region148
        $region147: #{cnn_cifar10_forward.3} parent=143 // pred_region
          %s1730 = smul.u32 8, %s18
          %p1731 = scmp.lt.s32.totalorder %s1730, 15
          %s1732 = scalar_select %p1731, %s1730, 15
          %s1733 = smul.addr %s1732, 4
          %s1734 = scalar_lea.vmem %s6, %s1733
        $region148: #{cnn_cifar10_forward.3} parent=143 // pred_fallthru
          _
      $region144: #{cnn_cifar10_forward.3} parent=5 // pred_fallthru
        _
    $region6: #{cnn_cifar10_forward.3} parent=1 // loop_footer
      %s16 = sadd.s32 1, %s12
    $region7: #{cnn_cifar10_forward.3} parent=1 // loop_footer_branch
      %11 = sbr.rel target = $region3
    $region8: #{cnn_cifar10_forward.3} parent=1 // loop_exit
      _

// kernel: cnn_cifar10_forward.4
$region0: #{cnn_cifar10_forward.4}
  #allocation0 [shape = 'u32[]', space=smem, size = 0x4, offset = 0x4, fixed_abs, tag = 'smem constant byte address 0x4 - core index']
  #allocation1 [shape = 'u32[144,128]{1,0:T(1,128)}', space=vmem, size = 0x12000, scoped, tag = 'internal scratch']
  %s0 = inlined_call_operand.vmem [shape: bf16[16,150], index: 0, kind: input, shape index: {}]
  %s1 = inlined_call_operand.vmem [shape: f32[16,1], index: 1, kind: input, shape index: {}]
  %s2 = inlined_call_operand.vmem [shape: bf16[150,256], index: 2, kind: input, shape index: {}]
  %s3 = inlined_call_operand.vmem [shape: bf16[150,256], index: 3, kind: input, shape index: {}]
  %s4 = inlined_call_operand.vmem [shape: bf16[150,256], index: 4, kind: input, shape index: {}]
  %s5 = inlined_call_operand.vmem [shape: bf16[150,256], index: 5, kind: input, shape index: {}]
  %s6 = inlined_call_operand.vmem [shape: bf16[16,256], index: 6, kind: output, shape index: {}]
  %s7 = sld [smem:[#allocation0]]
  $region34: #{cnn_cifar10_forward.4} parent=0
    _
  %s9 = ssub.s32 1, %s7
  %s10 = scalar_select 0, %s9, %s7
  // Predicated region
  $region2: #{cnn_cifar10_forward.4} parent=0 // pred_check
    _
  $region3: #{cnn_cifar10_forward.4} parent=0 // pred_check_branch
    %12 = sbr.rel (0) target = $region5
  $region4: #{cnn_cifar10_forward.4} parent=0 // pred_region
    _
  $region5: #{cnn_cifar10_forward.4} parent=0 // pred_fallthru
    _
  // Predicated region
  $region6: #{cnn_cifar10_forward.4} parent=0 // pred_check
    _
  $region7: #{cnn_cifar10_forward.4} parent=0 // pred_check_branch
    %14 = sbr.rel (0) target = $region9
  $region8: #{cnn_cifar10_forward.4} parent=0 // pred_region
    _
  $region9: #{cnn_cifar10_forward.4} parent=0 // pred_fallthru
    _
  // Predicated region
  $region10: #{cnn_cifar10_forward.4} parent=0 // pred_check
    _
  $region11: #{cnn_cifar10_forward.4} parent=0 // pred_check_branch
    %16 = sbr.rel (0) target = $region13
  $region12: #{cnn_cifar10_forward.4} parent=0 // pred_region
    _
  $region13: #{cnn_cifar10_forward.4} parent=0 // pred_fallthru
    _
  // Predicated region
  $region14: #{cnn_cifar10_forward.4} parent=0 // pred_check
    _
  $region15: #{cnn_cifar10_forward.4} parent=0 // pred_check_branch
    %18 = sbr.rel (0) target = $region17
  $region16: #{cnn_cifar10_forward.4} parent=0 // pred_region
    _
  $region17: #{cnn_cifar10_forward.4} parent=0 // pred_fallthru
    _
  // Predicated region
  $region18: #{cnn_cifar10_forward.4} parent=0 // pred_check
    _
  $region19: #{cnn_cifar10_forward.4} parent=0 // pred_check_branch
    %20 = sbr.rel (0) target = $region21
  $region20: #{cnn_cifar10_forward.4} parent=0 // pred_region
    _
  $region21: #{cnn_cifar10_forward.4} parent=0 // pred_fallthru
    _
  // Predicated region
  $region22: #{cnn_cifar10_forward.4} parent=0 // pred_check
    _
  $region23: #{cnn_cifar10_forward.4} parent=0 // pred_check_branch
    %22 = sbr.rel (0) target = $region25
  $region24: #{cnn_cifar10_forward.4} parent=0 // pred_region
    _
  $region25: #{cnn_cifar10_forward.4} parent=0 // pred_fallthru
    _
  %v24 = vld [vmem:[%s0] sm:$0xff]
  %v25 = vld [vmem:[%s0 + $0x8] sm:$0xff]
  %v26 = vld [vmem:[%s2] sm:$0xff]
  %v27 = vld [vmem:[%s2 + $0x8] sm:$0xff]
  %v28 = vld [vmem:[%s2 + $0x10] sm:$0xff]
  %v29 = vld [vmem:[%s2 + $0x18] sm:$0xff]
  %v30 = vld [vmem:[%s2 + $0x20] sm:$0xff]
  %v31 = vld [vmem:[%s2 + $0x28] sm:$0xff]
  %v32 = vld [vmem:[%s2 + $0x30] sm:$0xff]
  %v33 = vld [vmem:[%s2 + $0x38] sm:$0xff]
  %v34 = vld [vmem:[%s2 + $0x40] sm:$0xff]
  %v35 = vld [vmem:[%s2 + $0x48] sm:$0xff]
  %v36 = vld [vmem:[%s2 + $0x50] sm:$0xff]
  %v37 = vld [vmem:[%s2 + $0x58] sm:$0xff]
  %v38 = vld [vmem:[%s2 + $0x60] sm:$0xff]
  %v39 = vld [vmem:[%s2 + $0x68] sm:$0xff]
  %v40 = vld [vmem:[%s2 + $0x70] sm:$0xff]
  %v41 = vld [vmem:[%s2 + $0x78] sm:$0xff]
  %v42 = vld [vmem:[%s2 + $0x80] sm:$0xff]
  %v43 = vld [vmem:[%s2 + $0x88] sm:$0xff]
  %v44 = vld [vmem:[%s2 + $0x90] sm:$0x77]
  %v47 = vunpack.c.l.b16 %v24
  %v48 = vunpack.c.h.b16 %v24
  %v49 = vunpack.c.l.b16 %v25
  %v50 = vunpack.c.h.b16 %v25
  %v51 = vpack.c.b16 %v49, %v47
  %v52 = vpack.c.b16 %v50, %v48
  %v73 = vunpack.c.l.b16 %v26
  %v74 = vunpack.c.h.b16 %v26
  %v75 = vunpack.c.l.b16 %v27
  %v76 = vunpack.c.h.b16 %v27
  %v77 = vunpack.c.l.b16 %v28
  %v78 = vunpack.c.h.b16 %v28
  %v79 = vunpack.c.l.b16 %v29
  %v80 = vunpack.c.h.b16 %v29
  %v81 = vunpack.c.l.b16 %v30
  %v82 = vunpack.c.h.b16 %v30
  %v83 = vunpack.c.l.b16 %v31
  %v84 = vunpack.c.h.b16 %v31
  %v85 = vunpack.c.l.b16 %v32
  %v86 = vunpack.c.h.b16 %v32
  %v87 = vunpack.c.l.b16 %v33
  %v88 = vunpack.c.h.b16 %v33
  %v89 = vunpack.c.l.b16 %v34
  %v90 = vunpack.c.h.b16 %v34
  %v91 = vunpack.c.l.b16 %v35
  %v92 = vunpack.c.h.b16 %v35
  %v93 = vunpack.c.l.b16 %v36
  %v94 = vunpack.c.h.b16 %v36
  %v95 = vunpack.c.l.b16 %v37
  %v96 = vunpack.c.h.b16 %v37
  %v97 = vunpack.c.l.b16 %v38
  %v98 = vunpack.c.h.b16 %v38
  %v99 = vunpack.c.l.b16 %v39
  %v100 = vunpack.c.h.b16 %v39
  %v101 = vunpack.c.l.b16 %v40
  %v102 = vunpack.c.h.b16 %v40
  %v103 = vunpack.c.l.b16 %v41
  %v104 = vunpack.c.h.b16 %v41
  %v105 = vunpack.c.l.b16 %v42
  %v106 = vunpack.c.h.b16 %v42
  %v107 = vunpack.c.l.b16 %v43
  %v108 = vunpack.c.h.b16 %v43
  %v109 = vunpack.c.l.b16 %v44
  %v110 = vunpack.c.h.b16 %v44
  %v111 = vpack.c.b16 %v75, %v73
  %v112 = vpack.c.b16 %v76, %v74
  %v113 = vpack.c.b16 %v79, %v77
  %v114 = vpack.c.b16 %v80, %v78
  %v115 = vpack.c.b16 %v83, %v81
  %v116 = vpack.c.b16 %v84, %v82
  %v117 = vpack.c.b16 %v87, %v85
  %v118 = vpack.c.b16 %v88, %v86
  %v119 = vpack.c.b16 %v91, %v89
  %v120 = vpack.c.b16 %v92, %v90
  %v121 = vpack.c.b16 %v95, %v93
  %v122 = vpack.c.b16 %v96, %v94
  %v123 = vpack.c.b16 %v99, %v97
  %v124 = vpack.c.b16 %v100, %v98
  %v125 = vpack.c.b16 %v103, %v101
  %v126 = vpack.c.b16 %v104, %v102
  %v127 = vpack.c.b16 %v107, %v105
  %v128 = vpack.c.b16 %v108, %v106
  %v129 = vpack.c.b16 %v109, %v109
  %v130 = vpack.c.b16 %v110, %v110
  %vm149 = vcmask 179200
  %v151 = vsel %vm149, %v52, 0
  %vm153 = vcmask 1042432
  %v155 = vsel %vm153, %v129, 0
  %v158 = vsel %vm153, %v130, 0
  %160 = vmatprep.subr.bf16.mxu0 %v112
  %161 = vmatpush1.bf16.msra.mxu0 %v111
  %162 = vmatprep.subr.bf16.mxu0 %v114
  %163 = vmatpush1.bf16.msra.mxu0 %v113
  %164 = vmatprep.subr.bf16.mxu0 %v116
  %165 = vmatpush1.bf16.msra.mxu0 %v115
  %166 = vmatprep.subr.bf16.mxu0 %v118
  %167 = vmatpush1.bf16.msra.mxu0 %v117
  %168 = vmatprep.subr.bf16.mxu0 %v120
  %169 = vmatpush1.bf16.msra.mxu0 %v119
  %170 = vmatprep.subr.bf16.mxu0 %v122
  %171 = vmatpush1.bf16.msra.mxu0 %v121
  %172 = vmatprep.subr.bf16.mxu0 %v124
  %173 = vmatpush1.bf16.msra.mxu0 %v123
  %174 = vmatprep.subr.bf16.mxu0 %v126
  %175 = vmatpush1.bf16.msra.mxu0 %v125
  %176 = vmatprep.subr.bf16.mxu0 %v128
  %177 = vmatpush1.bf16.msra.mxu0 %v127
  %178 = vmatprep.subr.bf16.mxu0 %v158
  %179 = vmatpush1.bf16.msra.mxu0 %v155
  %180 = vmatprep.subr.bf16.mxu0 0
  %181 = vmatpush1.bf16.msra.mxu0 0
  %182 = vmatprep.subr.bf16.mxu0 0
  %183 = vmatpush1.bf16.msra.mxu0 0
  %184 = vmatprep.subr.bf16.mxu0 0
  %185 = vmatpush1.bf16.msra.mxu0 0
  %186 = vmatprep.subr.bf16.mxu0 0
  %187 = vmatpush1.bf16.msra.mxu0 0
  %188 = vmatprep.subr.bf16.mxu0 0
  %189 = vmatpush1.bf16.msra.mxu0 0
  %190 = vmatprep.subr.bf16.mxu0 0
  %191 = vmatpush1.bf16.msra.mxu0 0
  %192 = vmatprep.mubr.bf16.mxu0 %v151
  %193 = vmatmul.mubr.bf16.gmra.mrb[0].mxu0 %v51
  %v194 = vpop.f32.mrb[0].mxu0
  %v195 = vadd.f32 0.0, %v194
  %v196 = vpop.f32.mrb[0].mxu0
  %v197 = vadd.f32 0.0, %v196
  %v198 = vpop.f32.mrb[0].mxu0
  %v199 = vadd.f32 0.0, %v198
  %v200 = vpop.f32.mrb[0].mxu0
  %v201 = vadd.f32 0.0, %v200
  %202 = vdwg.mxu0
  %v203 = vld [vmem:[%s3] sm:$0xff]
  %v204 = vld [vmem:[%s3 + $0x8] sm:$0xff]
  %v205 = vld [vmem:[%s3 + $0x10] sm:$0xff]
  %v206 = vld [vmem:[%s3 + $0x18] sm:$0xff]
  %v207 = vld [vmem:[%s3 + $0x20] sm:$0xff]
  %v208 = vld [vmem:[%s3 + $0x28] sm:$0xff]
  %v209 = vld [vmem:[%s3 + $0x30] sm:$0xff]
  %v210 = vld [vmem:[%s3 + $0x38] sm:$0xff]
  %v211 = vld [vmem:[%s3 + $0x40] sm:$0xff]
  %v212 = vld [vmem:[%s3 + $0x48] sm:$0xff]
  %v213 = vld [vmem:[%s3 + $0x50] sm:$0xff]
  %v214 = vld [vmem:[%s3 + $0x58] sm:$0xff]
  %v215 = vld [vmem:[%s3 + $0x60] sm:$0xff]
  %v216 = vld [vmem:[%s3 + $0x68] sm:$0xff]
  %v217 = vld [vmem:[%s3 + $0x70] sm:$0xff]
  %v218 = vld [vmem:[%s3 + $0x78] sm:$0xff]
  %v219 = vld [vmem:[%s3 + $0x80] sm:$0xff]
  %v220 = vld [vmem:[%s3 + $0x88] sm:$0xff]
  %v221 = vld [vmem:[%s3 + $0x90] sm:$0x77]
  %v241 = vunpack.c.l.b16 %v203
  %v242 = vunpack.c.h.b16 %v203
  %v243 = vunpack.c.l.b16 %v204
  %v244 = vunpack.c.h.b16 %v204
  %v245 = vunpack.c.l.b16 %v205
  %v246 = vunpack.c.h.b16 %v205
  %v247 = vunpack.c.l.b16 %v206
  %v248 = vunpack.c.h.b16 %v206
  %v249 = vunpack.c.l.b16 %v207
  %v250 = vunpack.c.h.b16 %v207
  %v251 = vunpack.c.l.b16 %v208
  %v252 = vunpack.c.h.b16 %v208
  %v253 = vunpack.c.l.b16 %v209
  %v254 = vunpack.c.h.b16 %v209
  %v255 = vunpack.c.l.b16 %v210
  %v256 = vunpack.c.h.b16 %v210
  %v257 = vunpack.c.l.b16 %v211
  %v258 = vunpack.c.h.b16 %v211
  %v259 = vunpack.c.l.b16 %v212
  %v260 = vunpack.c.h.b16 %v212
  %v261 = vunpack.c.l.b16 %v213
  %v262 = vunpack.c.h.b16 %v213
  %v263 = vunpack.c.l.b16 %v214
  %v264 = vunpack.c.h.b16 %v214
  %v265 = vunpack.c.l.b16 %v215
  %v266 = vunpack.c.h.b16 %v215
  %v267 = vunpack.c.l.b16 %v216
  %v268 = vunpack.c.h.b16 %v216
  %v269 = vunpack.c.l.b16 %v217
  %v270 = vunpack.c.h.b16 %v217
  %v271 = vunpack.c.l.b16 %v218
  %v272 = vunpack.c.h.b16 %v218
  %v273 = vunpack.c.l.b16 %v219
  %v274 = vunpack.c.h.b16 %v219
  %v275 = vunpack.c.l.b16 %v220
  %v276 = vunpack.c.h.b16 %v220
  %v277 = vunpack.c.l.b16 %v221
  %v278 = vunpack.c.h.b16 %v221
  %v279 = vpack.c.b16 %v243, %v241
  %v280 = vpack.c.b16 %v244, %v242
  %v281 = vpack.c.b16 %v247, %v245
  %v282 = vpack.c.b16 %v248, %v246
  %v283 = vpack.c.b16 %v251, %v249
  %v284 = vpack.c.b16 %v252, %v250
  %v285 = vpack.c.b16 %v255, %v253
  %v286 = vpack.c.b16 %v256, %v254
  %v287 = vpack.c.b16 %v259, %v257
  %v288 = vpack.c.b16 %v260, %v258
  %v289 = vpack.c.b16 %v263, %v261
  %v290 = vpack.c.b16 %v264, %v262
  %v291 = vpack.c.b16 %v267, %v265
  %v292 = vpack.c.b16 %v268, %v266
  %v293 = vpack.c.b16 %v271, %v269
  %v294 = vpack.c.b16 %v272, %v270
  %v295 = vpack.c.b16 %v275, %v273
  %v296 = vpack.c.b16 %v276, %v274
  %v297 = vpack.c.b16 %v277, %v277
  %v298 = vpack.c.b16 %v278, %v278
  %v318 = vsel %vm153, %v297, 0
  %v321 = vsel %vm153, %v298, 0
  %323 = vmatprep.subr.bf16.mxu0 %v280
  %324 = vmatpush1.bf16.msra.mxu0 %v279
  %325 = vmatprep.subr.bf16.mxu0 %v282
  %326 = vmatpush1.bf16.msra.mxu0 %v281
  %327 = vmatprep.subr.bf16.mxu0 %v284
  %328 = vmatpush1.bf16.msra.mxu0 %v283
  %329 = vmatprep.subr.bf16.mxu0 %v286
  %330 = vmatpush1.bf16.msra.mxu0 %v285
  %331 = vmatprep.subr.bf16.mxu0 %v288
  %332 = vmatpush1.bf16.msra.mxu0 %v287
  %333 = vmatprep.subr.bf16.mxu0 %v290
  %334 = vmatpush1.bf16.msra.mxu0 %v289
  %335 = vmatprep.subr.bf16.mxu0 %v292
  %336 = vmatpush1.bf16.msra.mxu0 %v291
  %337 = vmatprep.subr.bf16.mxu0 %v294
  %338 = vmatpush1.bf16.msra.mxu0 %v293
  %339 = vmatprep.subr.bf16.mxu0 %v296
  %340 = vmatpush1.bf16.msra.mxu0 %v295
  %341 = vmatprep.subr.bf16.mxu0 %v321
  %342 = vmatpush1.bf16.msra.mxu0 %v318
  %343 = vmatprep.subr.bf16.mxu0 0
  %344 = vmatpush1.bf16.msra.mxu0 0
  %345 = vmatprep.subr.bf16.mxu0 0
  %346 = vmatpush1.bf16.msra.mxu0 0
  %347 = vmatprep.subr.bf16.mxu0 0
  %348 = vmatpush1.bf16.msra.mxu0 0
  %349 = vmatprep.subr.bf16.mxu0 0
  %350 = vmatpush1.bf16.msra.mxu0 0
  %351 = vmatprep.subr.bf16.mxu0 0
  %352 = vmatpush1.bf16.msra.mxu0 0
  %353 = vmatprep.subr.bf16.mxu0 0
  %354 = vmatpush1.bf16.msra.mxu0 0
  %355 = vmatprep.mubr.bf16.mxu0 %v151
  %356 = vmatmul.mubr.bf16.gmra.mrb[0].mxu0 %v51
  %v357 = vpop.f32.mrb[0].mxu0
  %v358 = vadd.f32 0.0, %v357
  %v359 = vpop.f32.mrb[0].mxu0
  %v360 = vadd.f32 0.0, %v359
  %v361 = vpop.f32.mrb[0].mxu0
  %v362 = vadd.f32 0.0, %v361
  %v363 = vpop.f32.mrb[0].mxu0
  %v364 = vadd.f32 0.0, %v363
  %365 = vdwg.mxu0
  %v366 = vld [vmem:[%s4] sm:$0xff]
  %v367 = vld [vmem:[%s4 + $0x8] sm:$0xff]
  %v368 = vld [vmem:[%s4 + $0x10] sm:$0xff]
  %v369 = vld [vmem:[%s4 + $0x18] sm:$0xff]
  %v370 = vld [vmem:[%s4 + $0x20] sm:$0xff]
  %v371 = vld [vmem:[%s4 + $0x28] sm:$0xff]
  %v372 = vld [vmem:[%s4 + $0x30] sm:$0xff]
  %v373 = vld [vmem:[%s4 + $0x38] sm:$0xff]
  %v374 = vld [vmem:[%s4 + $0x40] sm:$0xff]
  %v375 = vld [vmem:[%s4 + $0x48] sm:$0xff]
  %v376 = vld [vmem:[%s4 + $0x50] sm:$0xff]
  %v377 = vld [vmem:[%s4 + $0x58] sm:$0xff]
  %v378 = vld [vmem:[%s4 + $0x60] sm:$0xff]
  %v379 = vld [vmem:[%s4 + $0x68] sm:$0xff]
  %v380 = vld [vmem:[%s4 + $0x70] sm:$0xff]
  %v381 = vld [vmem:[%s4 + $0x78] sm:$0xff]
  %v382 = vld [vmem:[%s4 + $0x80] sm:$0xff]
  %v383 = vld [vmem:[%s4 + $0x88] sm:$0xff]
  %v384 = vld [vmem:[%s4 + $0x90] sm:$0x77]
  %v404 = vunpack.c.l.b16 %v366
  %v405 = vunpack.c.h.b16 %v366
  %v406 = vunpack.c.l.b16 %v367
  %v407 = vunpack.c.h.b16 %v367
  %v408 = vunpack.c.l.b16 %v368
  %v409 = vunpack.c.h.b16 %v368
  %v410 = vunpack.c.l.b16 %v369
  %v411 = vunpack.c.h.b16 %v369
  %v412 = vunpack.c.l.b16 %v370
  %v413 = vunpack.c.h.b16 %v370
  %v414 = vunpack.c.l.b16 %v371
  %v415 = vunpack.c.h.b16 %v371
  %v416 = vunpack.c.l.b16 %v372
  %v417 = vunpack.c.h.b16 %v372
  %v418 = vunpack.c.l.b16 %v373
  %v419 = vunpack.c.h.b16 %v373
  %v420 = vunpack.c.l.b16 %v374
  %v421 = vunpack.c.h.b16 %v374
  %v422 = vunpack.c.l.b16 %v375
  %v423 = vunpack.c.h.b16 %v375
  %v424 = vunpack.c.l.b16 %v376
  %v425 = vunpack.c.h.b16 %v376
  %v426 = vunpack.c.l.b16 %v377
  %v427 = vunpack.c.h.b16 %v377
  %v428 = vunpack.c.l.b16 %v378
  %v429 = vunpack.c.h.b16 %v378
  %v430 = vunpack.c.l.b16 %v379
  %v431 = vunpack.c.h.b16 %v379
  %v432 = vunpack.c.l.b16 %v380
  %v433 = vunpack.c.h.b16 %v380
  %v434 = vunpack.c.l.b16 %v381
  %v435 = vunpack.c.h.b16 %v381
  %v436 = vunpack.c.l.b16 %v382
  %v437 = vunpack.c.h.b16 %v382
  %v438 = vunpack.c.l.b16 %v383
  %v439 = vunpack.c.h.b16 %v383
  %v440 = vunpack.c.l.b16 %v384
  %v441 = vunpack.c.h.b16 %v384
  %v442 = vpack.c.b16 %v406, %v404
  %v443 = vpack.c.b16 %v407, %v405
  %v444 = vpack.c.b16 %v410, %v408
  %v445 = vpack.c.b16 %v411, %v409
  %v446 = vpack.c.b16 %v414, %v412
  %v447 = vpack.c.b16 %v415, %v413
  %v448 = vpack.c.b16 %v418, %v416
  %v449 = vpack.c.b16 %v419, %v417
  %v450 = vpack.c.b16 %v422, %v420
  %v451 = vpack.c.b16 %v423, %v421
  %v452 = vpack.c.b16 %v426, %v424
  %v453 = vpack.c.b16 %v427, %v425
  %v454 = vpack.c.b16 %v430, %v428
  %v455 = vpack.c.b16 %v431, %v429
  %v456 = vpack.c.b16 %v434, %v432
  %v457 = vpack.c.b16 %v435, %v433
  %v458 = vpack.c.b16 %v438, %v436
  %v459 = vpack.c.b16 %v439, %v437
  %v460 = vpack.c.b16 %v440, %v440
  %v461 = vpack.c.b16 %v441, %v441
  %v481 = vsel %vm153, %v460, 0
  %v484 = vsel %vm153, %v461, 0
  %486 = vmatprep.subr.bf16.mxu0 %v443
  %487 = vmatpush1.bf16.msra.mxu0 %v442
  %488 = vmatprep.subr.bf16.mxu0 %v445
  %489 = vmatpush1.bf16.msra.mxu0 %v444
  %490 = vmatprep.subr.bf16.mxu0 %v447
  %491 = vmatpush1.bf16.msra.mxu0 %v446
  %492 = vmatprep.subr.bf16.mxu0 %v449
  %493 = vmatpush1.bf16.msra.mxu0 %v448
  %494 = vmatprep.subr.bf16.mxu0 %v451
  %495 = vmatpush1.bf16.msra.mxu0 %v450
  %496 = vmatprep.subr.bf16.mxu0 %v453
  %497 = vmatpush1.bf16.msra.mxu0 %v452
  %498 = vmatprep.subr.bf16.mxu0 %v455
  %499 = vmatpush1.bf16.msra.mxu0 %v454
  %500 = vmatprep.subr.bf16.mxu0 %v457
  %501 = vmatpush1.bf16.msra.mxu0 %v456
  %502 = vmatprep.subr.bf16.mxu0 %v459
  %503 = vmatpush1.bf16.msra.mxu0 %v458
  %504 = vmatprep.subr.bf16.mxu0 %v484
  %505 = vmatpush1.bf16.msra.mxu0 %v481
  %506 = vmatprep.subr.bf16.mxu0 0
  %507 = vmatpush1.bf16.msra.mxu0 0
  %508 = vmatprep.subr.bf16.mxu0 0
  %509 = vmatpush1.bf16.msra.mxu0 0
  %510 = vmatprep.subr.bf16.mxu0 0
  %511 = vmatpush1.bf16.msra.mxu0 0
  %512 = vmatprep.subr.bf16.mxu0 0
  %513 = vmatpush1.bf16.msra.mxu0 0
  %514 = vmatprep.subr.bf16.mxu0 0
  %515 = vmatpush1.bf16.msra.mxu0 0
  %516 = vmatprep.subr.bf16.mxu0 0
  %517 = vmatpush1.bf16.msra.mxu0 0
  %518 = vmatprep.mubr.bf16.mxu0 %v151
  %519 = vmatmul.mubr.bf16.gmra.mrb[0].mxu0 %v51
  %v520 = vpop.f32.mrb[0].mxu0
  %v521 = vadd.f32 0.0, %v520
  %v522 = vpop.f32.mrb[0].mxu0
  %v523 = vadd.f32 0.0, %v522
  %v524 = vpop.f32.mrb[0].mxu0
  %v525 = vadd.f32 0.0, %v524
  %v526 = vpop.f32.mrb[0].mxu0
  %v527 = vadd.f32 0.0, %v526
  %528 = vdwg.mxu0
  %v529 = vld [vmem:[%s5] sm:$0xff]
  %v530 = vld [vmem:[%s5 + $0x8] sm:$0xff]
  %v531 = vld [vmem:[%s5 + $0x10] sm:$0xff]
  %v532 = vld [vmem:[%s5 + $0x18] sm:$0xff]
  %v533 = vld [vmem:[%s5 + $0x20] sm:$0xff]
  %v534 = vld [vmem:[%s5 + $0x28] sm:$0xff]
  %v535 = vld [vmem:[%s5 + $0x30] sm:$0xff]
  %v536 = vld [vmem:[%s5 + $0x38] sm:$0xff]
  %v537 = vld [vmem:[%s5 + $0x40] sm:$0xff]
  %v538 = vld [vmem:[%s5 + $0x48] sm:$0xff]
  %v539 = vld [vmem:[%s5 + $0x50] sm:$0xff]
  %v540 = vld [vmem:[%s5 + $0x58] sm:$0xff]
  %v541 = vld [vmem:[%s5 + $0x60] sm:$0xff]
  %v542 = vld [vmem:[%s5 + $0x68] sm:$0xff]
  %v543 = vld [vmem:[%s5 + $0x70] sm:$0xff]
  %v544 = vld [vmem:[%s5 + $0x78] sm:$0xff]
  %v545 = vld [vmem:[%s5 + $0x80] sm:$0xff]
  %v546 = vld [vmem:[%s5 + $0x88] sm:$0xff]
  %v547 = vld [vmem:[%s5 + $0x90] sm:$0x77]
  %v567 = vunpack.c.l.b16 %v529
  %v568 = vunpack.c.h.b16 %v529
  %v569 = vunpack.c.l.b16 %v530
  %v570 = vunpack.c.h.b16 %v530
  %v571 = vunpack.c.l.b16 %v531
  %v572 = vunpack.c.h.b16 %v531
  %v573 = vunpack.c.l.b16 %v532
  %v574 = vunpack.c.h.b16 %v532
  %v575 = vunpack.c.l.b16 %v533
  %v576 = vunpack.c.h.b16 %v533
  %v577 = vunpack.c.l.b16 %v534
  %v578 = vunpack.c.h.b16 %v534
  %v579 = vunpack.c.l.b16 %v535
  %v580 = vunpack.c.h.b16 %v535
  %v581 = vunpack.c.l.b16 %v536
  %v582 = vunpack.c.h.b16 %v536
  %v583 = vunpack.c.l.b16 %v537
  %v584 = vunpack.c.h.b16 %v537
  %v585 = vunpack.c.l.b16 %v538
  %v586 = vunpack.c.h.b16 %v538
  %v587 = vunpack.c.l.b16 %v539
  %v588 = vunpack.c.h.b16 %v539
  %v589 = vunpack.c.l.b16 %v540
  %v590 = vunpack.c.h.b16 %v540
  %v591 = vunpack.c.l.b16 %v541
  %v592 = vunpack.c.h.b16 %v541
  %v593 = vunpack.c.l.b16 %v542
  %v594 = vunpack.c.h.b16 %v542
  %v595 = vunpack.c.l.b16 %v543
  %v596 = vunpack.c.h.b16 %v543
  %v597 = vunpack.c.l.b16 %v544
  %v598 = vunpack.c.h.b16 %v544
  %v599 = vunpack.c.l.b16 %v545
  %v600 = vunpack.c.h.b16 %v545
  %v601 = vunpack.c.l.b16 %v546
  %v602 = vunpack.c.h.b16 %v546
  %v603 = vunpack.c.l.b16 %v547
  %v604 = vunpack.c.h.b16 %v547
  %v605 = vpack.c.b16 %v569, %v567
  %v606 = vpack.c.b16 %v570, %v568
  %v607 = vpack.c.b16 %v573, %v571
  %v608 = vpack.c.b16 %v574, %v572
  %v609 = vpack.c.b16 %v577, %v575
  %v610 = vpack.c.b16 %v578, %v576
  %v611 = vpack.c.b16 %v581, %v579
  %v612 = vpack.c.b16 %v582, %v580
  %v613 = vpack.c.b16 %v585, %v583
  %v614 = vpack.c.b16 %v586, %v584
  %v615 = vpack.c.b16 %v589, %v587
  %v616 = vpack.c.b16 %v590, %v588
  %v617 = vpack.c.b16 %v593, %v591
  %v618 = vpack.c.b16 %v594, %v592
  %v619 = vpack.c.b16 %v597, %v595
  %v620 = vpack.c.b16 %v598, %v596
  %v621 = vpack.c.b16 %v601, %v599
  %v622 = vpack.c.b16 %v602, %v600
  %v623 = vpack.c.b16 %v603, %v603
  %v624 = vpack.c.b16 %v604, %v604
  %v644 = vsel %vm153, %v623, 0
  %v647 = vsel %vm153, %v624, 0
  %649 = vmatprep.subr.bf16.mxu0 %v606
  %650 = vmatpush1.bf16.msra.mxu0 %v605
  %651 = vmatprep.subr.bf16.mxu0 %v608
  %652 = vmatpush1.bf16.msra.mxu0 %v607
  %653 = vmatprep.subr.bf16.mxu0 %v610
  %654 = vmatpush1.bf16.msra.mxu0 %v609
  %655 = vmatprep.subr.bf16.mxu0 %v612
  %656 = vmatpush1.bf16.msra.mxu0 %v611
  %657 = vmatprep.subr.bf16.mxu0 %v614
  %658 = vmatpush1.bf16.msra.mxu0 %v613
  %659 = vmatprep.subr.bf16.mxu0 %v616
  %660 = vmatpush1.bf16.msra.mxu0 %v615
  %661 = vmatprep.subr.bf16.mxu0 %v618
  %662 = vmatpush1.bf16.msra.mxu0 %v617
  %663 = vmatprep.subr.bf16.mxu0 %v620
  %664 = vmatpush1.bf16.msra.mxu0 %v619
  %665 = vmatprep.subr.bf16.mxu0 %v622
  %666 = vmatpush1.bf16.msra.mxu0 %v621
  %667 = vmatprep.subr.bf16.mxu0 %v647
  %668 = vmatpush1.bf16.msra.mxu0 %v644
  %669 = vmatprep.subr.bf16.mxu0 0
  %670 = vmatpush1.bf16.msra.mxu0 0
  %671 = vmatprep.subr.bf16.mxu0 0
  %672 = vmatpush1.bf16.msra.mxu0 0
  %673 = vmatprep.subr.bf16.mxu0 0
  %674 = vmatpush1.bf16.msra.mxu0 0
  %675 = vmatprep.subr.bf16.mxu0 0
  %676 = vmatpush1.bf16.msra.mxu0 0
  %677 = vmatprep.subr.bf16.mxu0 0
  %678 = vmatpush1.bf16.msra.mxu0 0
  %679 = vmatprep.subr.bf16.mxu0 0
  %680 = vmatpush1.bf16.msra.mxu0 0
  %681 = vmatprep.mubr.bf16.mxu0 %v151
  %682 = vmatmul.mubr.bf16.gmra.mrb[0].mxu0 %v51
  %v683 = vpop.f32.mrb[0].mxu0
  %v684 = vadd.f32 0.0, %v683
  %v685 = vpop.f32.mrb[0].mxu0
  %v686 = vadd.f32 0.0, %v685
  %v687 = vpop.f32.mrb[0].mxu0
  %v688 = vadd.f32 0.0, %v687
  %v689 = vpop.f32.mrb[0].mxu0
  %v690 = vadd.f32 0.0, %v689
  %691 = vdwg.mxu0
  %v692 = vmax.f32 %v195, %v358
  %v693 = vmax.f32 %v197, %v360
  %v694 = vmax.f32 %v199, %v362
  %v695 = vmax.f32 %v201, %v364
  %v696 = vmax.f32 %v521, %v684
  %v697 = vmax.f32 %v523, %v686
  %v698 = vmax.f32 %v525, %v688
  %v699 = vmax.f32 %v527, %v690
  %v700 = vmax.f32 %v692, %v696
  %v701 = vmax.f32 %v693, %v697
  %v702 = vmax.f32 %v694, %v698
  %v703 = vmax.f32 %v695, %v699
  %v704 = vld [vmem:[%s1] sm:$0xff]
  %v705 = vld [vmem:[%s1 + $0x8] sm:$0xff]
  %707 = vset.pattern.permute.xlu0 0
  %708 = vperm.xlu0 %707, %v704
  %v709 = vpop.permute.xlu0 %708
  %712 = vset.pattern.permute.xlu0 0
  %713 = vperm.xlu0 %712, %v705
  %v714 = vpop.permute.xlu0 %713
  %v716 = vadd.f32 %v700, %v709
  %v717 = vadd.f32 %v701, %v709
  %v718 = vadd.f32 %v702, %v714
  %v719 = vadd.f32 %v703, %v714
  %v720 = vmax.f32 %v716, 0.0
  %v721 = vmax.f32 %v717, 0.0
  %v722 = vmax.f32 %v718, 0.0
  %v723 = vmax.f32 %v719, 0.0
  %v724 = vpack.c.bf16 %v722, %v720
  %v725 = vpack.c.bf16 %v723, %v721
  %v728 = vunpack.c.l.b16 %v724
  %v729 = vunpack.c.l.b16 %v725
  %v730 = vunpack.c.h.b16 %v724
  %v731 = vunpack.c.h.b16 %v725
  %v732 = vpack.c.b16 %v729, %v728
  %v733 = vpack.c.b16 %v731, %v730
  %736 = vst [vmem:[%s6] sm:$0xff] %v732
  %737 = vst [vmem:[%s6 + $0x8] sm:$0xff] %v733
  // Predicated region
  $region26: #{cnn_cifar10_forward.4} parent=0 // pred_check
    _
  $region27: #{cnn_cifar10_forward.4} parent=0 // pred_check_branch
    %739 = sbr.rel (0) target = $region29
  $region28: #{cnn_cifar10_forward.4} parent=0 // pred_region
    _
  $region29: #{cnn_cifar10_forward.4} parent=0 // pred_fallthru
    _
  // Predicated region
  $region30: #{cnn_cifar10_forward.4} parent=0 // pred_check
    _
  $region31: #{cnn_cifar10_forward.4} parent=0 // pred_check_branch
    %741 = sbr.rel (0) target = $region33
  $region32: #{cnn_cifar10_forward.4} parent=0 // pred_region
    _
  $region33: #{cnn_cifar10_forward.4} parent=0 // pred_fallthru
    _

// kernel: cnn_cifar10_forward.5
$region0: #{cnn_cifar10_forward.5}
  #allocation0 [shape = 'u32[]', space=smem, size = 0x4, offset = 0x4, fixed_abs, tag = 'smem constant byte address 0x4 - core index']
  #allocation1 [shape = 'u32[144,128]{1,0:T(1,128)}', space=vmem, size = 0x12000, scoped, tag = 'internal scratch']
  %s0 = inlined_call_operand.vmem [shape: bf16[8,400], index: 0, kind: input, shape index: {}]
  %s1 = inlined_call_operand.vmem [shape: bf16[400,120], index: 1, kind: input, shape index: {}]
  %s2 = inlined_call_operand.vmem [shape: f32[1,120], index: 2, kind: input, shape index: {}]
  %s3 = inlined_call_operand.vmem [shape: bf16[120,84], index: 3, kind: input, shape index: {}]
  %s4 = inlined_call_operand.vmem [shape: f32[1,84], index: 4, kind: input, shape index: {}]
  %s5 = inlined_call_operand.vmem [shape: bf16[84,10], index: 5, kind: input, shape index: {}]
  %s6 = inlined_call_operand.vmem [shape: f32[1,10], index: 6, kind: input, shape index: {}]
  %s7 = inlined_call_operand.hbm [shape: f32[8,10], index: 7, kind: output, shape index: {}]
  %s8 = sld [smem:[#allocation0]]
  $region38: #{cnn_cifar10_forward.5} parent=0
    _
  %s10 = ssub.s32 1, %s8
  %s11 = scalar_select 0, %s10, %s8
  $region1: #{cnn_cifar10_forward.5} parent=0
    #allocation2 [shape = 'u8[4096]{0}', space=vmem, size = 0x1000, scoped, tag = 'output window, operand 0, single buffered']
    #allocation3 [shape = 's32[1]{0}', space=sflag, size = 0x4, scoped, tag = 'scoped memory for cnn_cifar10_forward.5']
    %12 = vsyncpa [#allocation3], 0
    // Predicated region
    $region2: #{cnn_cifar10_forward.5} parent=1 // pred_check
      _
    $region3: #{cnn_cifar10_forward.5} parent=1 // pred_check_branch
      %14 = sbr.rel (0) target = $region5
    $region4: #{cnn_cifar10_forward.5} parent=1 // pred_region
      _
    $region5: #{cnn_cifar10_forward.5} parent=1 // pred_fallthru
      _
    // Predicated region
    $region6: #{cnn_cifar10_forward.5} parent=1 // pred_check
      _
    $region7: #{cnn_cifar10_forward.5} parent=1 // pred_check_branch
      %16 = sbr.rel (0) target = $region9
    $region8: #{cnn_cifar10_forward.5} parent=1 // pred_region
      _
    $region9: #{cnn_cifar10_forward.5} parent=1 // pred_fallthru
      _
    // Predicated region
    $region10: #{cnn_cifar10_forward.5} parent=1 // pred_check
      _
    $region11: #{cnn_cifar10_forward.5} parent=1 // pred_check_branch
      %18 = sbr.rel (0) target = $region13
    $region12: #{cnn_cifar10_forward.5} parent=1 // pred_region
      _
    $region13: #{cnn_cifar10_forward.5} parent=1 // pred_fallthru
      _
    // Predicated region
    $region14: #{cnn_cifar10_forward.5} parent=1 // pred_check
      _
    $region15: #{cnn_cifar10_forward.5} parent=1 // pred_check_branch
      %20 = sbr.rel (0) target = $region17
    $region16: #{cnn_cifar10_forward.5} parent=1 // pred_region
      _
    $region17: #{cnn_cifar10_forward.5} parent=1 // pred_fallthru
      _
    // Predicated region
    $region18: #{cnn_cifar10_forward.5} parent=1 // pred_check
      _
    $region19: #{cnn_cifar10_forward.5} parent=1 // pred_check_branch
      %22 = sbr.rel (0) target = $region21
    $region20: #{cnn_cifar10_forward.5} parent=1 // pred_region
      _
    $region21: #{cnn_cifar10_forward.5} parent=1 // pred_fallthru
      _
    // Predicated region
    $region22: #{cnn_cifar10_forward.5} parent=1 // pred_check
      _
    $region23: #{cnn_cifar10_forward.5} parent=1 // pred_check_branch
      %24 = sbr.rel (0) target = $region25
    $region24: #{cnn_cifar10_forward.5} parent=1 // pred_region
      _
    $region25: #{cnn_cifar10_forward.5} parent=1 // pred_fallthru
      _
    // Predicated region
    $region26: #{cnn_cifar10_forward.5} parent=1 // pred_check
      _
    $region27: #{cnn_cifar10_forward.5} parent=1 // pred_check_branch
      %26 = sbr.rel (0) target = $region29
    $region28: #{cnn_cifar10_forward.5} parent=1 // pred_region
      _
    $region29: #{cnn_cifar10_forward.5} parent=1 // pred_fallthru
      _
    %v28 = vld [vmem:[%s0] sm:$0xff]
    %v29 = vld [vmem:[%s0 + $0x8] sm:$0xff]
    %v30 = vld [vmem:[%s1] sm:$0xf]
    %v31 = vld [vmem:[%s1 + $0x4] sm:$0xf]
    %v32 = vld [vmem:[%s1 + $0x8] sm:$0xf]
    %v33 = vld [vmem:[%s1 + $0xc] sm:$0xf]
    %v34 = vld [vmem:[%s1 + $0x10] sm:$0xf]
    %v35 = vld [vmem:[%s1 + $0x14] sm:$0xf]
    %v36 = vld [vmem:[%s1 + $0x18] sm:$0xf]
    %v37 = vld [vmem:[%s1 + $0x1c] sm:$0xf]
    %v38 = vld [vmem:[%s1 + $0x20] sm:$0xf]
    %v39 = vld [vmem:[%s1 + $0x24] sm:$0xf]
    %v40 = vld [vmem:[%s1 + $0x28] sm:$0xf]
    %v41 = vld [vmem:[%s1 + $0x2c] sm:$0xf]
    %v42 = vld [vmem:[%s1 + $0x30] sm:$0xf]
    %v43 = vld [vmem:[%s1 + $0x34] sm:$0xf]
    %v44 = vld [vmem:[%s1 + $0x38] sm:$0xf]
    %v45 = vld [vmem:[%s1 + $0x3c] sm:$0xf]
    %v46 = vld [vmem:[%s1 + $0x40] sm:$0xf]
    %v47 = vld [vmem:[%s1 + $0x44] sm:$0xf]
    %v48 = vld [vmem:[%s1 + $0x48] sm:$0xf]
    %v49 = vld [vmem:[%s1 + $0x4c] sm:$0xf]
    %v50 = vld [vmem:[%s1 + $0x50] sm:$0xf]
    %v51 = vld [vmem:[%s1 + $0x54] sm:$0xf]
    %v52 = vld [vmem:[%s1 + $0x58] sm:$0xf]
    %v53 = vld [vmem:[%s1 + $0x5c] sm:$0xf]
    %v54 = vld [vmem:[%s1 + $0x60] sm:$0xf]
    %v55 = vld [vmem:[%s1 + $0x64] sm:$0xf]
    %v56 = vld [vmem:[%s1 + $0x68] sm:$0xf]
    %v57 = vld [vmem:[%s1 + $0x6c] sm:$0xf]
    %v58 = vld [vmem:[%s1 + $0x70] sm:$0xf]
    %v59 = vld [vmem:[%s1 + $0x74] sm:$0xf]
    %v60 = vld [vmem:[%s1 + $0x78] sm:$0xf]
    %v61 = vld [vmem:[%s1 + $0x7c] sm:$0xf]
    %v62 = vld [vmem:[%s1 + $0x80] sm:$0xf]
    %v63 = vld [vmem:[%s1 + $0x84] sm:$0xf]
    %v64 = vld [vmem:[%s1 + $0x88] sm:$0xf]
    %v65 = vld [vmem:[%s1 + $0x8c] sm:$0xf]
    %v66 = vld [vmem:[%s1 + $0x90] sm:$0xf]
    %v67 = vld [vmem:[%s1 + $0x94] sm:$0xf]
    %v68 = vld [vmem:[%s1 + $0x98] sm:$0xf]
    %v69 = vld [vmem:[%s1 + $0x9c] sm:$0xf]
    %v70 = vld [vmem:[%s1 + $0xa0] sm:$0xf]
    %v71 = vld [vmem:[%s1 + $0xa4] sm:$0xf]
    %v72 = vld [vmem:[%s1 + $0xa8] sm:$0xf]
    %v73 = vld [vmem:[%s1 + $0xac] sm:$0xf]
    %v74 = vld [vmem:[%s1 + $0xb0] sm:$0xf]
    %v75 = vld [vmem:[%s1 + $0xb4] sm:$0xf]
    %v76 = vld [vmem:[%s1 + $0xb8] sm:$0xf]
    %v77 = vld [vmem:[%s1 + $0xbc] sm:$0xf]
    %v78 = vld [vmem:[%s1 + $0xc0] sm:$0xf]
    %v79 = vld [vmem:[%s1 + $0xc4] sm:$0xf]
    %v80 = vld [vmem:[%s2] sm:$0x1]
    %v82 = vlaneseq
    %v83 = vshrl.u32 %v82, 7
    %v84 = vsub.s32 0, %v83
    %v85 = vrot.slane %v80, %v84
    %v89 = vunpack.c.l.b16 %v28
    %v90 = vunpack.c.h.b16 %v28
    %v91 = vunpack.c.l.b16 %v29
    %v92 = vunpack.c.h.b16 %v29
    %v93 = vpack.c.b16 %v89, %v89
    %v94 = vpack.c.b16 %v90, %v90
    %v95 = vpack.c.b16 %v91, %v91
    %v96 = vpack.c.b16 %v92, %v92
    %v150 = vunpack.c.l.b16 %v30
    %v151 = vunpack.c.l.b16 %v31
    %v152 = vunpack.c.l.b16 %v32
    %v153 = vunpack.c.l.b16 %v33
    %v154 = vunpack.c.l.b16 %v34
    %v155 = vunpack.c.l.b16 %v35
    %v156 = vunpack.c.l.b16 %v36
    %v157 = vunpack.c.l.b16 %v37
    %v158 = vunpack.c.l.b16 %v38
    %v159 = vunpack.c.l.b16 %v39
    %v160 = vunpack.c.l.b16 %v40
    %v161 = vunpack.c.l.b16 %v41
    %v162 = vunpack.c.l.b16 %v42
    %v163 = vunpack.c.l.b16 %v43
    %v164 = vunpack.c.l.b16 %v44
    %v165 = vunpack.c.l.b16 %v45
    %v166 = vunpack.c.l.b16 %v46
    %v167 = vunpack.c.l.b16 %v47
    %v168 = vunpack.c.l.b16 %v48
    %v169 = vunpack.c.l.b16 %v49
    %v170 = vunpack.c.l.b16 %v50
    %v171 = vunpack.c.l.b16 %v51
    %v172 = vunpack.c.l.b16 %v52
    %v173 = vunpack.c.l.b16 %v53
    %v174 = vunpack.c.l.b16 %v54
    %v175 = vunpack.c.l.b16 %v55
    %v176 = vunpack.c.l.b16 %v56
    %v177 = vunpack.c.l.b16 %v57
    %v178 = vunpack.c.l.b16 %v58
    %v179 = vunpack.c.l.b16 %v59
    %v180 = vunpack.c.l.b16 %v60
    %v181 = vunpack.c.l.b16 %v61
    %v182 = vunpack.c.l.b16 %v62
    %v183 = vunpack.c.l.b16 %v63
    %v184 = vunpack.c.l.b16 %v64
    %v185 = vunpack.c.l.b16 %v65
    %v186 = vunpack.c.l.b16 %v66
    %v187 = vunpack.c.l.b16 %v67
    %v188 = vunpack.c.l.b16 %v68
    %v189 = vunpack.c.l.b16 %v69
    %v190 = vunpack.c.l.b16 %v70
    %v191 = vunpack.c.l.b16 %v71
    %v192 = vunpack.c.l.b16 %v72
    %v193 = vunpack.c.l.b16 %v73
    %v194 = vunpack.c.l.b16 %v74
    %v195 = vunpack.c.l.b16 %v75
    %v196 = vunpack.c.l.b16 %v76
    %v197 = vunpack.c.l.b16 %v77
    %v198 = vunpack.c.l.b16 %v78
    %v199 = vunpack.c.l.b16 %v79
    %v200 = vpack.c.b16 %v151, %v150
    %v201 = vpack.c.b16 %v153, %v152
    %v202 = vpack.c.b16 %v155, %v154
    %v203 = vpack.c.b16 %v157, %v156
    %v204 = vpack.c.b16 %v159, %v158
    %v205 = vpack.c.b16 %v161, %v160
    %v206 = vpack.c.b16 %v163, %v162
    %v207 = vpack.c.b16 %v165, %v164
    %v208 = vpack.c.b16 %v167, %v166
    %v209 = vpack.c.b16 %v169, %v168
    %v210 = vpack.c.b16 %v171, %v170
    %v211 = vpack.c.b16 %v173, %v172
    %v212 = vpack.c.b16 %v175, %v174
    %v213 = vpack.c.b16 %v177, %v176
    %v214 = vpack.c.b16 %v179, %v178
    %v215 = vpack.c.b16 %v181, %v180
    %v216 = vpack.c.b16 %v183, %v182
    %v217 = vpack.c.b16 %v185, %v184
    %v218 = vpack.c.b16 %v187, %v186
    %v219 = vpack.c.b16 %v189, %v188
    %v220 = vpack.c.b16 %v191, %v190
    %v221 = vpack.c.b16 %v193, %v192
    %v222 = vpack.c.b16 %v195, %v194
    %v223 = vpack.c.b16 %v197, %v196
    %v224 = vpack.c.b16 %v199, %v198
    %vm250 = vcmask 130048
    %v252 = vsel %vm250, %v96, 0
    %254 = vmatprep.subr.bf16.mxu0 0
    %255 = vmatpush1.bf16.msra.mxu0 %v200
    %256 = vmatprep.subr.bf16.mxu0 0
    %257 = vmatpush1.bf16.msra.mxu0 %v201
    %258 = vmatprep.subr.bf16.mxu0 0
    %259 = vmatpush1.bf16.msra.mxu0 %v202
    %260 = vmatprep.subr.bf16.mxu0 0
    %261 = vmatpush1.bf16.msra.mxu0 %v203
    %262 = vmatprep.subr.bf16.mxu0 0
    %263 = vmatpush1.bf16.msra.mxu0 %v204
    %264 = vmatprep.subr.bf16.mxu0 0
    %265 = vmatpush1.bf16.msra.mxu0 %v205
    %266 = vmatprep.subr.bf16.mxu0 0
    %267 = vmatpush1.bf16.msra.mxu0 %v206
    %268 = vmatprep.subr.bf16.mxu0 0
    %269 = vmatpush1.bf16.msra.mxu0 %v207
    %270 = vmatprep.subr.bf16.mxu0 0
    %271 = vmatpush1.bf16.msra.mxu0 %v208
    %272 = vmatprep.subr.bf16.mxu0 0
    %273 = vmatpush1.bf16.msra.mxu0 %v209
    %274 = vmatprep.subr.bf16.mxu0 0
    %275 = vmatpush1.bf16.msra.mxu0 %v210
    %276 = vmatprep.subr.bf16.mxu0 0
    %277 = vmatpush1.bf16.msra.mxu0 %v211
    %278 = vmatprep.subr.bf16.mxu0 0
    %279 = vmatpush1.bf16.msra.mxu0 %v212
    %280 = vmatprep.subr.bf16.mxu0 0
    %281 = vmatpush1.bf16.msra.mxu0 %v213
    %282 = vmatprep.subr.bf16.mxu0 0
    %283 = vmatpush1.bf16.msra.mxu0 %v214
    %284 = vmatprep.subr.bf16.mxu0 0
    %285 = vmatpush1.bf16.msra.mxu0 %v215
    %286 = vmatprep.mubr.bf16.mxu0 %v94
    %287 = vmatmul.mubr.bf16.gmra.mrb[0].mxu0 %v93
    %v288 = vpop.f32.mrb[0].mxu0
    %v289 = vadd.f32 %v85, %v288
    %v290 = vpop.f32.mrb[0].mxu0
    %v291 = vpop.f32.mrb[0].mxu0
    %v292 = vpop.f32.mrb[0].mxu0
    %293 = vdwg.mxu0
    %294 = vmatprep.subr.bf16.mxu0 0
    %295 = vmatpush1.bf16.msra.mxu0 %v216
    %296 = vmatprep.subr.bf16.mxu0 0
    %297 = vmatpush1.bf16.msra.mxu0 %v217
    %298 = vmatprep.subr.bf16.mxu0 0
    %299 = vmatpush1.bf16.msra.mxu0 %v218
    %300 = vmatprep.subr.bf16.mxu0 0
    %301 = vmatpush1.bf16.msra.mxu0 %v219
    %302 = vmatprep.subr.bf16.mxu0 0
    %303 = vmatpush1.bf16.msra.mxu0 %v220
    %304 = vmatprep.subr.bf16.mxu0 0
    %305 = vmatpush1.bf16.msra.mxu0 %v221
    %306 = vmatprep.subr.bf16.mxu0 0
    %307 = vmatpush1.bf16.msra.mxu0 %v222
    %308 = vmatprep.subr.bf16.mxu0 0
    %309 = vmatpush1.bf16.msra.mxu0 %v223
    %310 = vmatprep.subr.bf16.mxu0 0
    %311 = vmatpush1.bf16.msra.mxu0 %v224
    %312 = vmatprep.subr.bf16.mxu0 0
    %313 = vmatpush1.bf16.msra.mxu0 0
    %314 = vmatprep.subr.bf16.mxu0 0
    %315 = vmatpush1.bf16.msra.mxu0 0
    %316 = vmatprep.subr.bf16.mxu0 0
    %317 = vmatpush1.bf16.msra.mxu0 0
    %318 = vmatprep.subr.bf16.mxu0 0
    %319 = vmatpush1.bf16.msra.mxu0 0
    %320 = vmatprep.subr.bf16.mxu0 0
    %321 = vmatpush1.bf16.msra.mxu0 0
    %322 = vmatprep.subr.bf16.mxu0 0
    %323 = vmatpush1.bf16.msra.mxu0 0
    %324 = vmatprep.subr.bf16.mxu0 0
    %325 = vmatpush1.bf16.msra.mxu0 0
    %326 = vmatprep.mubr.bf16.mxu0 %v252
    %327 = vmatmul.mubr.bf16.gmra.mrb[0].mxu0 %v95
    %v328 = vpop.f32.mrb[0].mxu0
    %v329 = vadd.f32 %v289, %v328
    %v330 = vpop.f32.mrb[0].mxu0
    %v331 = vpop.f32.mrb[0].mxu0
    %v332 = vpop.f32.mrb[0].mxu0
    %333 = vdwg.mxu0
    %v334 = vmax.f32 %v329, 0.0
    %v335 = vpack.c.bf16 %v334, %v334
    %v336 = vld [vmem:[%s3] sm:$0xf]
    %v337 = vld [vmem:[%s3 + $0x4] sm:$0xf]
    %v338 = vld [vmem:[%s3 + $0x8] sm:$0xf]
    %v339 = vld [vmem:[%s3 + $0xc] sm:$0xf]
    %v340 = vld [vmem:[%s3 + $0x10] sm:$0xf]
    %v341 = vld [vmem:[%s3 + $0x14] sm:$0xf]
    %v342 = vld [vmem:[%s3 + $0x18] sm:$0xf]
    %v343 = vld [vmem:[%s3 + $0x1c] sm:$0xf]
    %v344 = vld [vmem:[%s3 + $0x20] sm:$0xf]
    %v345 = vld [vmem:[%s3 + $0x24] sm:$0xf]
    %v346 = vld [vmem:[%s3 + $0x28] sm:$0xf]
    %v347 = vld [vmem:[%s3 + $0x2c] sm:$0xf]
    %v348 = vld [vmem:[%s3 + $0x30] sm:$0xf]
    %v349 = vld [vmem:[%s3 + $0x34] sm:$0xf]
    %v350 = vld [vmem:[%s3 + $0x38] sm:$0xf]
    %v351 = vld [vmem:[%s4] sm:$0x1]
    %v353 = vlaneseq
    %v354 = vshrl.u32 %v353, 7
    %v355 = vsub.s32 0, %v354
    %v356 = vrot.slane %v351, %v355
    %v373 = vunpack.c.l.b16 %v336
    %v374 = vunpack.c.l.b16 %v337
    %v375 = vunpack.c.l.b16 %v338
    %v376 = vunpack.c.l.b16 %v339
    %v377 = vunpack.c.l.b16 %v340
    %v378 = vunpack.c.l.b16 %v341
    %v379 = vunpack.c.l.b16 %v342
    %v380 = vunpack.c.l.b16 %v343
    %v381 = vunpack.c.l.b16 %v344
    %v382 = vunpack.c.l.b16 %v345
    %v383 = vunpack.c.l.b16 %v346
    %v384 = vunpack.c.l.b16 %v347
    %v385 = vunpack.c.l.b16 %v348
    %v386 = vunpack.c.l.b16 %v349
    %v387 = vunpack.c.l.b16 %v350
    %v388 = vpack.c.b16 %v374, %v373
    %v389 = vpack.c.b16 %v376, %v375
    %v390 = vpack.c.b16 %v378, %v377
    %v391 = vpack.c.b16 %v380, %v379
    %v392 = vpack.c.b16 %v382, %v381
    %v393 = vpack.c.b16 %v384, %v383
    %v394 = vpack.c.b16 %v386, %v385
    %v395 = vpack.c.b16 %v387, %v387
    %vm403 = vcmask 982016
    %v405 = vsel %vm403, %v335, 0
    %vm407 = vcmask 1043456
    %v409 = vsel %vm407, %v395, 0
    %411 = vmatprep.subr.bf16.mxu0 0
    %412 = vmatpush1.bf16.msra.mxu0 %v388
    %413 = vmatprep.subr.bf16.mxu0 0
    %414 = vmatpush1.bf16.msra.mxu0 %v389
    %415 = vmatprep.subr.bf16.mxu0 0
    %416 = vmatpush1.bf16.msra.mxu0 %v390
    %417 = vmatprep.subr.bf16.mxu0 0
    %418 = vmatpush1.bf16.msra.mxu0 %v391
    %419 = vmatprep.subr.bf16.mxu0 0
    %420 = vmatpush1.bf16.msra.mxu0 %v392
    %421 = vmatprep.subr.bf16.mxu0 0
    %422 = vmatpush1.bf16.msra.mxu0 %v393
    %423 = vmatprep.subr.bf16.mxu0 0
    %424 = vmatpush1.bf16.msra.mxu0 %v394
    %425 = vmatprep.subr.bf16.mxu0 0
    %426 = vmatpush1.bf16.msra.mxu0 %v409
    %427 = vmatprep.subr.bf16.mxu0 0
    %428 = vmatpush1.bf16.msra.mxu0 0
    %429 = vmatprep.subr.bf16.mxu0 0
    %430 = vmatpush1.bf16.msra.mxu0 0
    %431 = vmatprep.subr.bf16.mxu0 0
    %432 = vmatpush1.bf16.msra.mxu0 0
    %433 = vmatprep.subr.bf16.mxu0 0
    %434 = vmatpush1.bf16.msra.mxu0 0
    %435 = vmatprep.subr.bf16.mxu0 0
    %436 = vmatpush1.bf16.msra.mxu0 0
    %437 = vmatprep.subr.bf16.mxu0 0
    %438 = vmatpush1.bf16.msra.mxu0 0
    %439 = vmatprep.subr.bf16.mxu0 0
    %440 = vmatpush1.bf16.msra.mxu0 0
    %441 = vmatprep.subr.bf16.mxu0 0
    %442 = vmatpush1.bf16.msra.mxu0 0
    %443 = vmatprep.mubr.bf16.mxu0 0
    %444 = vmatmul.mubr.bf16.gmra.mrb[0].mxu0 %v405
    %v445 = vpop.f32.mrb[0].mxu0
    %v446 = vadd.f32 %v356, %v445
    %v447 = vpop.f32.mrb[0].mxu0
    %v448 = vpop.f32.mrb[0].mxu0
    %v449 = vpop.f32.mrb[0].mxu0
    %450 = vdwg.mxu0
    %v451 = vmax.f32 %v446, 0.0
    %v452 = vpack.c.bf16 %v451, %v451
    %v453 = vld [vmem:[%s5] sm:$0xf]
    %v454 = vld [vmem:[%s5 + $0x4] sm:$0xf]
    %v455 = vld [vmem:[%s5 + $0x8] sm:$0xf]
    %v456 = vld [vmem:[%s5 + $0xc] sm:$0xf]
    %v457 = vld [vmem:[%s5 + $0x10] sm:$0xf]
    %v458 = vld [vmem:[%s5 + $0x14] sm:$0xf]
    %v459 = vld [vmem:[%s5 + $0x18] sm:$0xf]
    %v460 = vld [vmem:[%s5 + $0x1c] sm:$0xf]
    %v461 = vld [vmem:[%s5 + $0x20] sm:$0xf]
    %v462 = vld [vmem:[%s5 + $0x24] sm:$0xf]
    %v463 = vld [vmem:[%s5 + $0x28] sm:$0x3]
    %v464 = vld [vmem:[%s6] sm:$0x1]
    %v466 = vlaneseq
    %v467 = vshrl.u32 %v466, 7
    %v468 = vsub.s32 0, %v467
    %v469 = vrot.slane %v464, %v468
    %v482 = vunpack.c.l.b16 %v453
    %v483 = vunpack.c.l.b16 %v454
    %v484 = vunpack.c.l.b16 %v455
    %v485 = vunpack.c.l.b16 %v456
    %v486 = vunpack.c.l.b16 %v457
    %v487 = vunpack.c.l.b16 %v458
    %v488 = vunpack.c.l.b16 %v459
    %v489 = vunpack.c.l.b16 %v460
    %v490 = vunpack.c.l.b16 %v461
    %v491 = vunpack.c.l.b16 %v462
    %v492 = vunpack.c.l.b16 %v463
    %v493 = vpack.c.b16 %v483, %v482
    %v494 = vpack.c.b16 %v485, %v484
    %v495 = vpack.c.b16 %v487, %v486
    %v496 = vpack.c.b16 %v489, %v488
    %v497 = vpack.c.b16 %v491, %v490
    %v498 = vpack.c.b16 %v492, %v492
    %vm504 = vcmask 687104
    %v506 = vsel %vm504, %v452, 0
    %vm508 = vcmask 1041408
    %v510 = vsel %vm508, %v498, 0
    %512 = vmatprep.subr.bf16.mxu0 0
    %513 = vmatpush1.bf16.msra.mxu0 %v493
    %514 = vmatprep.subr.bf16.mxu0 0
    %515 = vmatpush1.bf16.msra.mxu0 %v494
    %516 = vmatprep.subr.bf16.mxu0 0
    %517 = vmatpush1.bf16.msra.mxu0 %v495
    %518 = vmatprep.subr.bf16.mxu0 0
    %519 = vmatpush1.bf16.msra.mxu0 %v496
    %520 = vmatprep.subr.bf16.mxu0 0
    %521 = vmatpush1.bf16.msra.mxu0 %v497
    %522 = vmatprep.subr.bf16.mxu0 0
    %523 = vmatpush1.bf16.msra.mxu0 %v510
    %524 = vmatprep.subr.bf16.mxu0 0
    %525 = vmatpush1.bf16.msra.mxu0 0
    %526 = vmatprep.subr.bf16.mxu0 0
    %527 = vmatpush1.bf16.msra.mxu0 0
    %528 = vmatprep.subr.bf16.mxu0 0
    %529 = vmatpush1.bf16.msra.mxu0 0
    %530 = vmatprep.subr.bf16.mxu0 0
    %531 = vmatpush1.bf16.msra.mxu0 0
    %532 = vmatprep.subr.bf16.mxu0 0
    %533 = vmatpush1.bf16.msra.mxu0 0
    %534 = vmatprep.subr.bf16.mxu0 0
    %535 = vmatpush1.bf16.msra.mxu0 0
    %536 = vmatprep.subr.bf16.mxu0 0
    %537 = vmatpush1.bf16.msra.mxu0 0
    %538 = vmatprep.subr.bf16.mxu0 0
    %539 = vmatpush1.bf16.msra.mxu0 0
    %540 = vmatprep.subr.bf16.mxu0 0
    %541 = vmatpush1.bf16.msra.mxu0 0
    %542 = vmatprep.subr.bf16.mxu0 0
    %543 = vmatpush1.bf16.msra.mxu0 0
    %544 = vmatprep.mubr.bf16.mxu0 0
    %545 = vmatmul.mubr.bf16.gmra.mrb[0].mxu0 %v506
    %v546 = vpop.f32.mrb[0].mxu0
    %v547 = vadd.f32 %v469, %v546
    %v548 = vpop.f32.mrb[0].mxu0
    %v549 = vpop.f32.mrb[0].mxu0
    %v550 = vpop.f32.mrb[0].mxu0
    %551 = vdwg.mxu0
    %vm552 = vcmask 80896
    %v553 = vsel %vm552, %v547, -inf
    %554 = vmax.xlane.f32.xlu0 %v553
    %v555 = vpop.xlane.xlu0 %554
    %v556 = vsub.f32 %v547, %v555
    %v557 = vmul.f32 %v556, 1.442695
    %v558 = vpow.pop %v557
    %v559 = vsel %vm552, %v558, 0.0
    %560 = vadd.xlane.f32.xlu0 %v559
    %v561 = vpop.xlane.xlu0 %560
    %v562 = vlog2.pop %v561
    %v563 = vmul.f32 %v562, 0.6931472
    %v564 = vsub.f32 %v556, %v563
    %565 = vst.msk [vmem:[#allocation2] sm:$0xff] %vm552, %v564
    // Predicated region
    $region30: #{cnn_cifar10_forward.5} parent=1 // pred_check
      _
    $region31: #{cnn_cifar10_forward.5} parent=1 // pred_check_branch
      %567 = sbr.rel (0) target = $region33
    $region32: #{cnn_cifar10_forward.5} parent=1 // pred_region
      %s569 = ssub.s32 128, 128
      %570 = vsyncadd [#allocation3], %s569
      %s572 = sshll.u32 [#allocation2], 4
      %s573 = int_to_ptr.vmem [resolvable:$true] %s572
      %575 = dma.vmem_to_hbm [thread:$0]  %s573, 128, %s7, [#allocation3]
    $region33: #{cnn_cifar10_forward.5} parent=1 // pred_fallthru
      _
    // Predicated region
    $region34: #{cnn_cifar10_forward.5} parent=1 // pred_check
      _
    $region35: #{cnn_cifar10_forward.5} parent=1 // pred_check_branch
      %577 = sbr.rel (0) target = $region37
    $region36: #{cnn_cifar10_forward.5} parent=1 // pred_region
      %578 = dma.done [#allocation3], 128
    $region37: #{cnn_cifar10_forward.5} parent=1 // pred_fallthru
      _
    %579 = vsyncpa [#allocation3], 1

</llo_original>
